<compile_context>
chip_gen: v7x
topology: tpu7x:2x2x1
jax: 0.10.0
libtpu: 0.0.40
codegen_flags: <defaults>
</compile_context>

<pallas_src>
import functools
import math

import jax
import jax.numpy as jnp
from jax.experimental import pallas as pl
from jax.experimental.pallas import tpu as pltpu

_VMEM_LIMIT = 48 * 1024 * 1024  # sized for v7x's 64 MiB/TC; v5e/v6e (128 MiB) have headroom


def _round_up(x, m):
    return ((x + m - 1) // m) * m


# ---------------------------------------------------------------------------
# Kernel 1: tiled matmul on the MXU.  X (M, K) bf16  @  W (K, Nlane) bf16 -> f32
# ---------------------------------------------------------------------------
def _matmul_kernel(x_ref, w_ref, o_ref):
    o_ref[...] = jnp.dot(x_ref[...], w_ref[...], preferred_element_type=jnp.float32)


def tiled_matmul(x, w):
    """x: (M, K) bf16, w: (K, N) bf16 -> (M, N) f32. M tiled; N padded to lane width (128)."""
    M, K = x.shape
    K2, N = w.shape
    assert K == K2
    Np = _round_up(N, 128)                 # lane-dense stores / full MXU columns
    if Np != N:
        w = jnp.pad(w, ((0, 0), (0, Np - N)))
    # keep the double-buffered f32 output tile well under the v7x VMEM budget
    tm = (8 * 1024 * 1024) // (2 * Np * 4)
    tm = max(8, min(512, (tm // 8) * 8))
    tm = min(tm, _round_up(M, 8))
    Mp = _round_up(M, tm)
    if Mp != M:
        x = jnp.pad(x, ((0, Mp - M), (0, 0)))
    out = pl.pallas_call(
        _matmul_kernel,
        out_shape=jax.ShapeDtypeStruct((Mp, Np), jnp.float32),
        grid=(Mp // tm,),
        in_specs=[pl.BlockSpec((tm, K), lambda i: (i, 0)),
                  pl.BlockSpec((K, Np), lambda i: (0, 0))],
        out_specs=pl.BlockSpec((tm, Np), lambda i: (i, 0)),
        compiler_params=pltpu.CompilerParams(
            dimension_semantics=("parallel",),     # megacore-shard M on v7x; no-op on v5e/v6e
            vmem_limit_bytes=_VMEM_LIMIT),
    )(x, w)
    return out[:M, :N]


# ---------------------------------------------------------------------------
# Kernel 2: fused BatchNorm (training-mode batch stats, eps=1e-5) + ReLU.
# Two-pass grid: pass 0 accumulates per-channel sum / sum-of-squares into VMEM
# scratch (global stats across all M tiles), pass 1 applies scale/shift + ReLU.
# ---------------------------------------------------------------------------
def _bn_relu_kernel(y_ref, g_ref, b_ref, o_ref, sum_ref, ssq_ref, *, m_true):
    p = pl.program_id(0)   # 0: stats pass, 1: apply pass
    m = pl.program_id(1)

    @pl.when(jnp.logical_and(p == 0, m == 0))
    def _():
        sum_ref[...] = jnp.zeros_like(sum_ref)
        ssq_ref[...] = jnp.zeros_like(ssq_ref)

    @pl.when(p == 0)
    def _():
        y = y_ref[...]
        sum_ref[...] += jnp.sum(y, axis=0, keepdims=True)
        ssq_ref[...] += jnp.sum(y * y, axis=0, keepdims=True)

    @pl.when(p == 1)
    def _():
        inv_m = 1.0 / m_true
        mean = sum_ref[...] * inv_m
        var = ssq_ref[...] * inv_m - mean * mean          # biased variance (train mode)
        scale = g_ref[...] * jax.lax.rsqrt(var + 1e-5)
        shift = b_ref[...] - mean * scale
        o_ref[...] = jnp.maximum(y_ref[...] * scale + shift, 0.0).astype(o_ref.dtype)


def bn_relu(y, gamma, beta, out_dtype=jnp.bfloat16):
    M, C = y.shape
    tm = min(512, _round_up(M, 8))
    Mp = _round_up(M, tm)
    if Mp != M:
        y = jnp.pad(y, ((0, Mp - M), (0, 0)))   # zero rows contribute 0 to sum/sumsq
    mt = Mp // tm
    out = pl.pallas_call(
        functools.partial(_bn_relu_kernel, m_true=M),
        out_shape=jax.ShapeDtypeStruct((Mp, C), out_dtype),
        grid=(2, mt),   # pass axis outer, M tiles inner
        in_specs=[pl.BlockSpec((tm, C), lambda p, m: (m, 0)),
                  pl.BlockSpec((1, C), lambda p, m: (0, 0)),
                  pl.BlockSpec((1, C), lambda p, m: (0, 0))],
        # park the output block on 0 during the stats pass so nothing is flushed early
        out_specs=pl.BlockSpec((tm, C), lambda p, m: (m * p, 0)),
        scratch_shapes=[pltpu.VMEM((1, C), jnp.float32),
                        pltpu.VMEM((1, C), jnp.float32)],
        compiler_params=pltpu.CompilerParams(
            dimension_semantics=("arbitrary", "arbitrary"),   # cross-tile stat accumulation
            vmem_limit_bytes=_VMEM_LIMIT),
    )(y, gamma, beta)
    return out[:M]


# ---------------------------------------------------------------------------
# Kernel 3: elementwise Tanh on a lane-dense (rows, 128) slab (last layer).
# ---------------------------------------------------------------------------
def _tanh_kernel(y_ref, o_ref):
    o_ref[...] = jnp.tanh(y_ref[...])


def tanh_op(y, tr=256):
    shape = y.shape
    total = math.prod(shape)
    chunk = tr * 128
    total_pad = _round_up(total, chunk)
    yf = jnp.pad(y.reshape(-1), (0, total_pad - total)).reshape(total_pad // 128, 128)
    rows = total_pad // 128
    out = pl.pallas_call(
        _tanh_kernel,
        out_shape=jax.ShapeDtypeStruct((rows, 128), jnp.float32),
        grid=(rows // tr,),
        in_specs=[pl.BlockSpec((tr, 128), lambda i: (i, 0))],
        out_specs=pl.BlockSpec((tr, 128), lambda i: (i, 0)),
        compiler_params=pltpu.CompilerParams(
            dimension_semantics=("parallel",),
            vmem_limit_bytes=_VMEM_LIMIT),
    )(yf)
    return out.reshape(-1)[:total].reshape(shape)


# ---------------------------------------------------------------------------
# ConvTranspose2d layer = Pallas matmul + XLA col2im overlap-add + fused BN/act kernel
# ---------------------------------------------------------------------------
def conv_transpose_layer(x, w, gamma, beta, stride, pad, activation):
    """x: (N, H, W, Cin) NHWC; w: (Cin, Cout, k, k) (PyTorch ConvTranspose2d layout)."""
    N, H, W_, Cin = x.shape
    Cin_w, Cout, k, _ = w.shape
    assert Cin == Cin_w

    # 1) contributions[(n,h,w), (kh,kw,co)] = sum_ci x[n,h,w,ci] * w[ci,co,kh,kw]
    x2 = x.reshape(N * H * W_, Cin).astype(jnp.bfloat16)
    wmat = jnp.transpose(w, (0, 2, 3, 1)).reshape(Cin, k * k * Cout).astype(jnp.bfloat16)
    y = tiled_matmul(x2, wmat)                                   # (N*H*W, k*k*Cout) f32
    y6 = y.reshape(N, H, W_, k, k, Cout)

    # 2) col2im overlap-add: out[n, h*s - pad + kh, w*s - pad + kw, co] += y6[n,h,w,kh,kw,co]
    Hf, Wf = (H - 1) * stride + k, (W_ - 1) * stride + k
    out = jnp.zeros((N, Hf, Wf, Cout), jnp.float32)
    for kh in range(k):
        for kw in range(k):
            out = out.at[:, kh:kh + (H - 1) * stride + 1:stride,
                            kw:kw + (W_ - 1) * stride + 1:stride, :].add(y6[:, :, :, kh, kw, :])
    OH, OW = Hf - 2 * pad, Wf - 2 * pad
    out = out[:, pad:pad + OH, pad:pad + OW, :]

    # 3) fused BatchNorm(train batch stats) + activation
    if activation == "bn_relu":
        out = bn_relu(out.reshape(N * OH * OW, Cout), gamma, beta)   # bf16 for the next MXU
        return out.reshape(N, OH, OW, Cout)
    elif activation == "tanh":
        return tanh_op(out)                                          # f32 module output
    else:
        raise ValueError(activation)


# ---------------------------------------------------------------------------
# Generator: parameters + forward
# ---------------------------------------------------------------------------
def init_generator_params(key, nc=3, nz=16, ngf=8):
    """Deterministic synthetic params (DCGAN-style N(0, 0.02) conv weights, BN weight=1/bias=0)."""
    channels = [nz, ngf * 8, ngf * 4, ngf * 2, ngf, nc]
    params = []
    for li in range(5):
        key, wkey = jax.random.split(key)
        cin, cout = channels[li], channels[li + 1]
        w = 0.02 * jax.random.normal(wkey, (cin, cout, 4, 4), jnp.float32)
        gamma = jnp.ones((1, cout), jnp.float32)
        beta = jnp.zeros((1, cout), jnp.float32)
        params.append((w, gamma, beta))
    return params


def generator_forward(z, params):
    """z: (N, nz, 1, 1) NCHW -> (N, nc, 64, 64) NCHW. NHWC internally."""
    cfgs = [
        (1, 0, "bn_relu"),   # nz     -> ngf*8, 1x1  -> 4x4
        (2, 1, "bn_relu"),   # ngf*8  -> ngf*4, 4x4  -> 8x8
        (2, 1, "bn_relu"),   # ngf*4  -> ngf*2, 8x8  -> 16x16
        (2, 1, "bn_relu"),   # ngf*2  -> ngf  , 16   -> 32
        (2, 1, "tanh"),      # ngf    -> nc   , 32   -> 64   (no BN on last layer)
    ]
    x = jnp.transpose(z, (0, 2, 3, 1))       # NCHW -> NHWC, once at the boundary
    for (w, gamma, beta), (stride, pad, act) in zip(params, cfgs):
        x = conv_transpose_layer(x, w, gamma, beta, stride, pad, act)
    return jnp.transpose(x, (0, 3, 1, 2))    # NHWC -> NCHW, once at the boundary


if __name__ == "__main__":
    # small, deterministic config: nc=3, nz=16, ngf=8, batch=2
    nc, nz, ngf, batch = 3, 16, 8, 2
    key = jax.random.PRNGKey(0)
    pkey, zkey = jax.random.split(key)

    params = init_generator_params(pkey, nc=nc, nz=nz, ngf=ngf)
    z = jax.random.normal(zkey, (batch, nz, 1, 1), jnp.float32)

    out = jax.jit(generator_forward)(z, params)
    out = jax.block_until_ready(out)

    assert out.shape == (batch, nc, 64, 64), out.shape
    assert bool(jnp.all(jnp.isfinite(out)))
    assert bool(jnp.all(jnp.abs(out) <= 1.0 + 1e-6))  # tanh range
    print("KERNEL_OK")
</pallas_src>

<mosaic_0001>
module attributes {stable_mosaic.version = 11 : i64} {
  func.func @_matmul_kernel(%arg0: i32, %arg1: memref<8x16xbf16, #tpu.memory_space<vmem>>, %arg2: memref<16x1024xbf16, #tpu.memory_space<vmem>>, %arg3: memref<8x1024xf32, #tpu.memory_space<vmem>>) attributes {dimension_semantics = [#tpu.dimension_semantics<parallel>], iteration_bounds = array<i64: 1>, scalar_prefetch = 0 : i64, scratch_operands = 0 : i64, tpu.core_type = #tpu.core_type<tc>, window_params = [{transform_indices = @transform_0, window_bounds = array<i64: 8, 16>}, {pipeline_mode = #tpu.pipeline_mode<synchronous>, transform_indices = @transform_1, window_bounds = array<i64: 16, 1024>}, {transform_indices = @transform_2, window_bounds = array<i64: 8, 1024>}]} {
    %c0 = arith.constant 0 : index
    %c0_0 = arith.constant 0 : index
    %0 = vector.load %arg1[%c0, %c0_0] : memref<8x16xbf16, #tpu.memory_space<vmem>>, vector<8x16xbf16>
    %c0_1 = arith.constant 0 : index
    %c0_2 = arith.constant 0 : index
    %1 = vector.load %arg2[%c0_1, %c0_2] : memref<16x1024xbf16, #tpu.memory_space<vmem>>, vector<16x1024xbf16>
    %cst = arith.constant dense<0.000000e+00> : vector<8x1024xf32>
    %2 = tpu.matmul %0, %1, %cst {dimension_numbers = #tpu.dot_dimension_numbers<[1], [0], [0], [1], [0, 0, 1, 1], [], []>} : vector<8x16xbf16>, vector<16x1024xbf16>, vector<8x1024xf32> -> vector<8x1024xf32>
    %c0_3 = arith.constant 0 : index
    %c0_4 = arith.constant 0 : index
    %3 = vector.load %arg3[%c0_3, %c0_4] : memref<8x1024xf32, #tpu.memory_space<vmem>>, vector<8x1024xf32>
    tpu.vector_store %arg3[%c0_3, %c0_4], %2 {strides = array<i32>} : memref<8x1024xf32, #tpu.memory_space<vmem>>, vector<8x1024xf32>,
    return
  }
  func.func @transform_0(%arg0: i32) -> (i32, i32) {
    %c0_i32 = arith.constant 0 : i32
    %c0_i32_0 = arith.constant 0 : i32
    return %arg0, %c0_i32 : i32, i32
  }
  func.func @transform_1(%arg0: i32) -> (i32, i32) {
    %c0_i32 = arith.constant 0 : i32
    %c0_i32_0 = arith.constant 0 : i32
    %c0_i32_1 = arith.constant 0 : i32
    return %c0_i32, %c0_i32_0 : i32, i32
  }
  func.func @transform_2(%arg0: i32) -> (i32, i32) {
    %c0_i32 = arith.constant 0 : i32
    %c0_i32_0 = arith.constant 0 : i32
    return %arg0, %c0_i32 : i32, i32
  }
}

module attributes {stable_mosaic.version = 11 : i64} {
  func.func @_bn_relu_kernel(%arg0: i32, %arg1: i32, %arg2: memref<32x64xf32, #tpu.memory_space<vmem>>, %arg3: memref<1x64xf32, #tpu.memory_space<vmem>>, %arg4: memref<1x64xf32, #tpu.memory_space<vmem>>, %arg5: memref<32x64xbf16, #tpu.memory_space<vmem>>, %arg6: memref<1x64xf32, #tpu.memory_space<vmem>>, %arg7: memref<1x64xf32, #tpu.memory_space<vmem>>) attributes {dimension_semantics = [#tpu.dimension_semantics<arbitrary>, #tpu.dimension_semantics<arbitrary>], iteration_bounds = array<i64: 2, 1>, scalar_prefetch = 0 : i64, scratch_operands = 2 : i64, tpu.core_type = #tpu.core_type<tc>, window_params = [{transform_indices = @transform_0, window_bounds = array<i64: 32, 64>}, {pipeline_mode = #tpu.pipeline_mode<synchronous>, transform_indices = @transform_1, window_bounds = array<i64: 1, 64>}, {pipeline_mode = #tpu.pipeline_mode<synchronous>, transform_indices = @transform_2, window_bounds = array<i64: 1, 64>}, {transform_indices = @transform_3, window_bounds = array<i64: 32, 64>}]} {
    %c0_i32 = arith.constant 0 : i32
    %0 = arith.cmpi eq, %arg0, %c0_i32 : i32
    %c0_i32_0 = arith.constant 0 : i32
    %1 = arith.cmpi eq, %arg1, %c0_i32_0 : i32
    %2 = arith.andi %0, %1 : i1
    %3 = arith.extui %2 : i1 to i32
    %c0_i32_1 = arith.constant 0 : i32
    %4 = arith.cmpi ne, %3, %c0_i32_1 : i32
    scf.if %4 {
      %cst = arith.constant 0.000000e+00 : f32
      %11 = vector.broadcast %cst : f32 to vector<1x64xf32>
      %c0 = arith.constant 0 : index
      %c0_5 = arith.constant 0 : index
      %12 = vector.load %arg6[%c0, %c0_5] : memref<1x64xf32, #tpu.memory_space<vmem>>, vector<1x64xf32>
      tpu.vector_store %arg6[%c0, %c0_5], %11 {strides = array<i32>} : memref<1x64xf32, #tpu.memory_space<vmem>>, vector<1x64xf32>,
      %cst_6 = arith.constant 0.000000e+00 : f32
      %13 = vector.broadcast %cst_6 : f32 to vector<1x64xf32>
      %c0_7 = arith.constant 0 : index
      %c0_8 = arith.constant 0 : index
      %14 = vector.load %arg7[%c0_7, %c0_8] : memref<1x64xf32, #tpu.memory_space<vmem>>, vector<1x64xf32>
      tpu.vector_store %arg7[%c0_7, %c0_8], %13 {strides = array<i32>} : memref<1x64xf32, #tpu.memory_space<vmem>>, vector<1x64xf32>,
    } else {
    }
    %c0_i32_2 = arith.constant 0 : i32
    %5 = arith.cmpi eq, %arg0, %c0_i32_2 : i32
    %6 = arith.extui %5 : i1 to i32
    %c0_i32_3 = arith.constant 0 : i32
    %7 = arith.cmpi ne, %6, %c0_i32_3 : i32
    scf.if %7 {
      %c0 = arith.constant 0 : index
      %c0_5 = arith.constant 0 : index
      %11 = vector.load %arg2[%c0, %c0_5] : memref<32x64xf32, #tpu.memory_space<vmem>>, vector<32x64xf32>
      %c0_6 = arith.constant 0 : index
      %c0_7 = arith.constant 0 : index
      %12 = vector.load %arg6[%c0_6, %c0_7] : memref<1x64xf32, #tpu.memory_space<vmem>>, vector<1x64xf32>
      %cst = arith.constant dense<0.000000e+00> : vector<64xf32>
      %13 = vector.multi_reduction <add>, %11, %cst [0] : vector<32x64xf32> to vector<64xf32>
      %14 = vector.shape_cast %13 : vector<64xf32> to vector<1x64xf32>
      %15 = arith.addf %12, %14 : vector<1x64xf32>
      %c0_8 = arith.constant 0 : index
      %c0_9 = arith.constant 0 : index
      %16 = vector.load %arg6[%c0_8, %c0_9] : memref<1x64xf32, #tpu.memory_space<vmem>>, vector<1x64xf32>
      tpu.vector_store %arg6[%c0_8, %c0_9], %15 {strides = array<i32>} : memref<1x64xf32, #tpu.memory_space<vmem>>, vector<1x64xf32>,
      %c0_10 = arith.constant 0 : index
      %c0_11 = arith.constant 0 : index
      %17 = vector.load %arg7[%c0_10, %c0_11] : memref<1x64xf32, #tpu.memory_space<vmem>>, vector<1x64xf32>
      %18 = arith.mulf %11, %11 : vector<32x64xf32>
      %cst_12 = arith.constant dense<0.000000e+00> : vector<64xf32>
      %19 = vector.multi_reduction <add>, %18, %cst_12 [0] : vector<32x64xf32> to vector<64xf32>
      %20 = vector.shape_cast %19 : vector<64xf32> to vector<1x64xf32>
      %21 = arith.addf %17, %20 : vector<1x64xf32>
      %c0_13 = arith.constant 0 : index
      %c0_14 = arith.constant 0 : index
      %22 = vector.load %arg7[%c0_13, %c0_14] : memref<1x64xf32, #tpu.memory_space<vmem>>, vector<1x64xf32>
      tpu.vector_store %arg7[%c0_13, %c0_14], %21 {strides = array<i32>} : memref<1x64xf32, #tpu.memory_space<vmem>>, vector<1x64xf32>,
    } else {
    }
    %c1_i32 = arith.constant 1 : i32
    %8 = arith.cmpi eq, %arg0, %c1_i32 : i32
    %9 = arith.extui %8 : i1 to i32
    %c0_i32_4 = arith.constant 0 : i32
    %10 = arith.cmpi ne, %9, %c0_i32_4 : i32
    scf.if %10 {
      %c0 = arith.constant 0 : index
      %c0_5 = arith.constant 0 : index
      %11 = vector.load %arg6[%c0, %c0_5] : memref<1x64xf32, #tpu.memory_space<vmem>>, vector<1x64xf32>
      %cst = arith.constant 3.125000e-02 : f32
      %12 = vector.broadcast %cst : f32 to vector<1x64xf32>
      %13 = arith.mulf %11, %12 : vector<1x64xf32>
      %c0_6 = arith.constant 0 : index
      %c0_7 = arith.constant 0 : index
      %14 = vector.load %arg7[%c0_6, %c0_7] : memref<1x64xf32, #tpu.memory_space<vmem>>, vector<1x64xf32>
      %cst_8 = arith.constant 3.125000e-02 : f32
      %15 = vector.broadcast %cst_8 : f32 to vector<1x64xf32>
      %16 = arith.mulf %14, %15 : vector<1x64xf32>
      %17 = arith.mulf %13, %13 : vector<1x64xf32>
      %18 = arith.subf %16, %17 : vector<1x64xf32>
      %c0_9 = arith.constant 0 : index
      %c0_10 = arith.constant 0 : index
      %19 = vector.load %arg3[%c0_9, %c0_10] : memref<1x64xf32, #tpu.memory_space<vmem>>, vector<1x64xf32>
      %cst_11 = arith.constant 9.99999974E-6 : f32
      %20 = vector.broadcast %cst_11 : f32 to vector<1x64xf32>
      %21 = arith.addf %18, %20 : vector<1x64xf32>
      %22 = math.rsqrt %21 : vector<1x64xf32>
      %23 = arith.mulf %19, %22 : vector<1x64xf32>
      %c0_12 = arith.constant 0 : index
      %c0_13 = arith.constant 0 : index
      %24 = vector.load %arg4[%c0_12, %c0_13] : memref<1x64xf32, #tpu.memory_space<vmem>>, vector<1x64xf32>
      %25 = arith.mulf %13, %23 : vector<1x64xf32>
      %26 = arith.subf %24, %25 : vector<1x64xf32>
      %c0_14 = arith.constant 0 : index
      %c0_15 = arith.constant 0 : index
      %27 = vector.load %arg2[%c0_14, %c0_15] : memref<32x64xf32, #tpu.memory_space<vmem>>, vector<32x64xf32>
      %28 = vector.broadcast %23 : vector<1x64xf32> to vector<32x64xf32>
      %29 = arith.mulf %27, %28 : vector<32x64xf32>
      %30 = vector.broadcast %26 : vector<1x64xf32> to vector<32x64xf32>
      %31 = arith.addf %29, %30 : vector<32x64xf32>
      %cst_16 = arith.constant 0.000000e+00 : f32
      %32 = vector.broadcast %cst_16 : f32 to vector<32x64xf32>
      %33 = arith.maximumf %31, %32 : vector<32x64xf32>
      %34 = arith.truncf %33 : vector<32x64xf32> to vector<32x64xbf16>
      %c0_17 = arith.constant 0 : index
      %c0_18 = arith.constant 0 : index
      %35 = vector.load %arg5[%c0_17, %c0_18] : memref<32x64xbf16, #tpu.memory_space<vmem>>, vector<32x64xbf16>
      tpu.vector_store %arg5[%c0_17, %c0_18], %34 {strides = array<i32>} : memref<32x64xbf16, #tpu.memory_space<vmem>>, vector<32x64xbf16>,
    } else {
    }
    return
  }
  func.func @transform_0(%arg0: i32, %arg1: i32) -> (i32, i32) {
    %c0_i32 = arith.constant 0 : i32
    %c0_i32_0 = arith.constant 0 : i32
    return %arg1, %c0_i32 : i32, i32
  }
  func.func @transform_1(%arg0: i32, %arg1: i32) -> (i32, i32) {
    %c0_i32 = arith.constant 0 : i32
    %c0_i32_0 = arith.constant 0 : i32
    %c0_i32_1 = arith.constant 0 : i32
    return %c0_i32, %c0_i32_0 : i32, i32
  }
  func.func @transform_2(%arg0: i32, %arg1: i32) -> (i32, i32) {
    %c0_i32 = arith.constant 0 : i32
    %c0_i32_0 = arith.constant 0 : i32
    %c0_i32_1 = arith.constant 0 : i32
    return %c0_i32, %c0_i32_0 : i32, i32
  }
  func.func @transform_3(%arg0: i32, %arg1: i32) -> (i32, i32) {
    %0 = arith.muli %arg1, %arg0 : i32
    %c0_i32 = arith.constant 0 : i32
    %c0_i32_0 = arith.constant 0 : i32
    return %0, %c0_i32 : i32, i32
  }
}

module attributes {stable_mosaic.version = 11 : i64} {
  func.func @_matmul_kernel(%arg0: i32, %arg1: memref<32x64xbf16, #tpu.memory_space<vmem>>, %arg2: memref<64x512xbf16, #tpu.memory_space<vmem>>, %arg3: memref<32x512xf32, #tpu.memory_space<vmem>>) attributes {dimension_semantics = [#tpu.dimension_semantics<parallel>], iteration_bounds = array<i64: 1>, scalar_prefetch = 0 : i64, scratch_operands = 0 : i64, tpu.core_type = #tpu.core_type<tc>, window_params = [{transform_indices = @transform_0, window_bounds = array<i64: 32, 64>}, {pipeline_mode = #tpu.pipeline_mode<synchronous>, transform_indices = @transform_1, window_bounds = array<i64: 64, 512>}, {transform_indices = @transform_2, window_bounds = array<i64: 32, 512>}]} {
    %c0 = arith.constant 0 : index
    %c0_0 = arith.constant 0 : index
    %0 = vector.load %arg1[%c0, %c0_0] : memref<32x64xbf16, #tpu.memory_space<vmem>>, vector<32x64xbf16>
    %c0_1 = arith.constant 0 : index
    %c0_2 = arith.constant 0 : index
    %1 = vector.load %arg2[%c0_1, %c0_2] : memref<64x512xbf16, #tpu.memory_space<vmem>>, vector<64x512xbf16>
    %cst = arith.constant dense<0.000000e+00> : vector<32x512xf32>
    %2 = tpu.matmul %0, %1, %cst {dimension_numbers = #tpu.dot_dimension_numbers<[1], [0], [0], [1], [0, 0, 1, 1], [], []>} : vector<32x64xbf16>, vector<64x512xbf16>, vector<32x512xf32> -> vector<32x512xf32>
    %c0_3 = arith.constant 0 : index
    %c0_4 = arith.constant 0 : index
    %3 = vector.load %arg3[%c0_3, %c0_4] : memref<32x512xf32, #tpu.memory_space<vmem>>, vector<32x512xf32>
    tpu.vector_store %arg3[%c0_3, %c0_4], %2 {strides = array<i32>} : memref<32x512xf32, #tpu.memory_space<vmem>>, vector<32x512xf32>,
    return
  }
  func.func @transform_0(%arg0: i32) -> (i32, i32) {
    %c0_i32 = arith.constant 0 : i32
    %c0_i32_0 = arith.constant 0 : i32
    return %arg0, %c0_i32 : i32, i32
  }
  func.func @transform_1(%arg0: i32) -> (i32, i32) {
    %c0_i32 = arith.constant 0 : i32
    %c0_i32_0 = arith.constant 0 : i32
    %c0_i32_1 = arith.constant 0 : i32
    return %c0_i32, %c0_i32_0 : i32, i32
  }
  func.func @transform_2(%arg0: i32) -> (i32, i32) {
    %c0_i32 = arith.constant 0 : i32
    %c0_i32_0 = arith.constant 0 : i32
    return %arg0, %c0_i32 : i32, i32
  }
}

module attributes {stable_mosaic.version = 11 : i64} {
  func.func @_bn_relu_kernel(%arg0: i32, %arg1: i32, %arg2: memref<128x32xf32, #tpu.memory_space<vmem>>, %arg3: memref<1x32xf32, #tpu.memory_space<vmem>>, %arg4: memref<1x32xf32, #tpu.memory_space<vmem>>, %arg5: memref<128x32xbf16, #tpu.memory_space<vmem>>, %arg6: memref<1x32xf32, #tpu.memory_space<vmem>>, %arg7: memref<1x32xf32, #tpu.memory_space<vmem>>) attributes {dimension_semantics = [#tpu.dimension_semantics<arbitrary>, #tpu.dimension_semantics<arbitrary>], iteration_bounds = array<i64: 2, 1>, scalar_prefetch = 0 : i64, scratch_operands = 2 : i64, tpu.core_type = #tpu.core_type<tc>, window_params = [{transform_indices = @transform_0, window_bounds = array<i64: 128, 32>}, {pipeline_mode = #tpu.pipeline_mode<synchronous>, transform_indices = @transform_1, window_bounds = array<i64: 1, 32>}, {pipeline_mode = #tpu.pipeline_mode<synchronous>, transform_indices = @transform_2, window_bounds = array<i64: 1, 32>}, {transform_indices = @transform_3, window_bounds = array<i64: 128, 32>}]} {
    %c0_i32 = arith.constant 0 : i32
    %0 = arith.cmpi eq, %arg0, %c0_i32 : i32
    %c0_i32_0 = arith.constant 0 : i32
    %1 = arith.cmpi eq, %arg1, %c0_i32_0 : i32
    %2 = arith.andi %0, %1 : i1
    %3 = arith.extui %2 : i1 to i32
    %c0_i32_1 = arith.constant 0 : i32
    %4 = arith.cmpi ne, %3, %c0_i32_1 : i32
    scf.if %4 {
      %cst = arith.constant 0.000000e+00 : f32
      %11 = vector.broadcast %cst : f32 to vector<1x32xf32>
      %c0 = arith.constant 0 : index
      %c0_5 = arith.constant 0 : index
      %12 = vector.load %arg6[%c0, %c0_5] : memref<1x32xf32, #tpu.memory_space<vmem>>, vector<1x32xf32>
      tpu.vector_store %arg6[%c0, %c0_5], %11 {strides = array<i32>} : memref<1x32xf32, #tpu.memory_space<vmem>>, vector<1x32xf32>,
      %cst_6 = arith.constant 0.000000e+00 : f32
      %13 = vector.broadcast %cst_6 : f32 to vector<1x32xf32>
      %c0_7 = arith.constant 0 : index
      %c0_8 = arith.constant 0 : index
      %14 = vector.load %arg7[%c0_7, %c0_8] : memref<1x32xf32, #tpu.memory_space<vmem>>, vector<1x32xf32>
      tpu.vector_store %arg7[%c0_7, %c0_8], %13 {strides = array<i32>} : memref<1x32xf32, #tpu.memory_space<vmem>>, vector<1x32xf32>,
    } else {
    }
    %c0_i32_2 = arith.constant 0 : i32
    %5 = arith.cmpi eq, %arg0, %c0_i32_2 : i32
    %6 = arith.extui %5 : i1 to i32
    %c0_i32_3 = arith.constant 0 : i32
    %7 = arith.cmpi ne, %6, %c0_i32_3 : i32
    scf.if %7 {
      %c0 = arith.constant 0 : index
      %c0_5 = arith.constant 0 : index
      %11 = vector.load %arg2[%c0, %c0_5] : memref<128x32xf32, #tpu.memory_space<vmem>>, vector<128x32xf32>
      %c0_6 = arith.constant 0 : index
      %c0_7 = arith.constant 0 : index
      %12 = vector.load %arg6[%c0_6, %c0_7] : memref<1x32xf32, #tpu.memory_space<vmem>>, vector<1x32xf32>
      %cst = arith.constant dense<0.000000e+00> : vector<32xf32>
      %13 = vector.multi_reduction <add>, %11, %cst [0] : vector<128x32xf32> to vector<32xf32>
      %14 = vector.shape_cast %13 : vector<32xf32> to vector<1x32xf32>
      %15 = arith.addf %12, %14 : vector<1x32xf32>
      %c0_8 = arith.constant 0 : index
      %c0_9 = arith.constant 0 : index
      %16 = vector.load %arg6[%c0_8, %c0_9] : memref<1x32xf32, #tpu.memory_space<vmem>>, vector<1x32xf32>
      tpu.vector_store %arg6[%c0_8, %c0_9], %15 {strides = array<i32>} : memref<1x32xf32, #tpu.memory_space<vmem>>, vector<1x32xf32>,
      %c0_10 = arith.constant 0 : index
      %c0_11 = arith.constant 0 : index
      %17 = vector.load %arg7[%c0_10, %c0_11] : memref<1x32xf32, #tpu.memory_space<vmem>>, vector<1x32xf32>
      %18 = arith.mulf %11, %11 : vector<128x32xf32>
      %cst_12 = arith.constant dense<0.000000e+00> : vector<32xf32>
      %19 = vector.multi_reduction <add>, %18, %cst_12 [0] : vector<128x32xf32> to vector<32xf32>
      %20 = vector.shape_cast %19 : vector<32xf32> to vector<1x32xf32>
      %21 = arith.addf %17, %20 : vector<1x32xf32>
      %c0_13 = arith.constant 0 : index
      %c0_14 = arith.constant 0 : index
      %22 = vector.load %arg7[%c0_13, %c0_14] : memref<1x32xf32, #tpu.memory_space<vmem>>, vector<1x32xf32>
      tpu.vector_store %arg7[%c0_13, %c0_14], %21 {strides = array<i32>} : memref<1x32xf32, #tpu.memory_space<vmem>>, vector<1x32xf32>,
    } else {
    }
    %c1_i32 = arith.constant 1 : i32
    %8 = arith.cmpi eq, %arg0, %c1_i32 : i32
    %9 = arith.extui %8 : i1 to i32
    %c0_i32_4 = arith.constant 0 : i32
    %10 = arith.cmpi ne, %9, %c0_i32_4 : i32
    scf.if %10 {
      %c0 = arith.constant 0 : index
      %c0_5 = arith.constant 0 : index
      %11 = vector.load %arg6[%c0, %c0_5] : memref<1x32xf32, #tpu.memory_space<vmem>>, vector<1x32xf32>
      %cst = arith.constant 7.812500e-03 : f32
      %12 = vector.broadcast %cst : f32 to vector<1x32xf32>
      %13 = arith.mulf %11, %12 : vector<1x32xf32>
      %c0_6 = arith.constant 0 : index
      %c0_7 = arith.constant 0 : index
      %14 = vector.load %arg7[%c0_6, %c0_7] : memref<1x32xf32, #tpu.memory_space<vmem>>, vector<1x32xf32>
      %cst_8 = arith.constant 7.812500e-03 : f32
      %15 = vector.broadcast %cst_8 : f32 to vector<1x32xf32>
      %16 = arith.mulf %14, %15 : vector<1x32xf32>
      %17 = arith.mulf %13, %13 : vector<1x32xf32>
      %18 = arith.subf %16, %17 : vector<1x32xf32>
      %c0_9 = arith.constant 0 : index
      %c0_10 = arith.constant 0 : index
      %19 = vector.load %arg3[%c0_9, %c0_10] : memref<1x32xf32, #tpu.memory_space<vmem>>, vector<1x32xf32>
      %cst_11 = arith.constant 9.99999974E-6 : f32
      %20 = vector.broadcast %cst_11 : f32 to vector<1x32xf32>
      %21 = arith.addf %18, %20 : vector<1x32xf32>
      %22 = math.rsqrt %21 : vector<1x32xf32>
      %23 = arith.mulf %19, %22 : vector<1x32xf32>
      %c0_12 = arith.constant 0 : index
      %c0_13 = arith.constant 0 : index
      %24 = vector.load %arg4[%c0_12, %c0_13] : memref<1x32xf32, #tpu.memory_space<vmem>>, vector<1x32xf32>
      %25 = arith.mulf %13, %23 : vector<1x32xf32>
      %26 = arith.subf %24, %25 : vector<1x32xf32>
      %c0_14 = arith.constant 0 : index
      %c0_15 = arith.constant 0 : index
      %27 = vector.load %arg2[%c0_14, %c0_15] : memref<128x32xf32, #tpu.memory_space<vmem>>, vector<128x32xf32>
      %28 = vector.broadcast %23 : vector<1x32xf32> to vector<128x32xf32>
      %29 = arith.mulf %27, %28 : vector<128x32xf32>
      %30 = vector.broadcast %26 : vector<1x32xf32> to vector<128x32xf32>
      %31 = arith.addf %29, %30 : vector<128x32xf32>
      %cst_16 = arith.constant 0.000000e+00 : f32
      %32 = vector.broadcast %cst_16 : f32 to vector<128x32xf32>
      %33 = arith.maximumf %31, %32 : vector<128x32xf32>
      %34 = arith.truncf %33 : vector<128x32xf32> to vector<128x32xbf16>
      %c0_17 = arith.constant 0 : index
      %c0_18 = arith.constant 0 : index
      %35 = vector.load %arg5[%c0_17, %c0_18] : memref<128x32xbf16, #tpu.memory_space<vmem>>, vector<128x32xbf16>
      tpu.vector_store %arg5[%c0_17, %c0_18], %34 {strides = array<i32>} : memref<128x32xbf16, #tpu.memory_space<vmem>>, vector<128x32xbf16>,
    } else {
    }
    return
  }
  func.func @transform_0(%arg0: i32, %arg1: i32) -> (i32, i32) {
    %c0_i32 = arith.constant 0 : i32
    %c0_i32_0 = arith.constant 0 : i32
    return %arg1, %c0_i32 : i32, i32
  }
  func.func @transform_1(%arg0: i32, %arg1: i32) -> (i32, i32) {
    %c0_i32 = arith.constant 0 : i32
    %c0_i32_0 = arith.constant 0 : i32
    %c0_i32_1 = arith.constant 0 : i32
    return %c0_i32, %c0_i32_0 : i32, i32
  }
  func.func @transform_2(%arg0: i32, %arg1: i32) -> (i32, i32) {
    %c0_i32 = arith.constant 0 : i32
    %c0_i32_0 = arith.constant 0 : i32
    %c0_i32_1 = arith.constant 0 : i32
    return %c0_i32, %c0_i32_0 : i32, i32
  }
  func.func @transform_3(%arg0: i32, %arg1: i32) -> (i32, i32) {
    %0 = arith.muli %arg1, %arg0 : i32
    %c0_i32 = arith.constant 0 : i32
    %c0_i32_0 = arith.constant 0 : i32
    return %0, %c0_i32 : i32, i32
  }
}

module attributes {stable_mosaic.version = 11 : i64} {
  func.func @_matmul_kernel(%arg0: i32, %arg1: memref<128x32xbf16, #tpu.memory_space<vmem>>, %arg2: memref<32x256xbf16, #tpu.memory_space<vmem>>, %arg3: memref<128x256xf32, #tpu.memory_space<vmem>>) attributes {dimension_semantics = [#tpu.dimension_semantics<parallel>], iteration_bounds = array<i64: 1>, scalar_prefetch = 0 : i64, scratch_operands = 0 : i64, tpu.core_type = #tpu.core_type<tc>, window_params = [{transform_indices = @transform_0, window_bounds = array<i64: 128, 32>}, {pipeline_mode = #tpu.pipeline_mode<synchronous>, transform_indices = @transform_1, window_bounds = array<i64: 32, 256>}, {transform_indices = @transform_2, window_bounds = array<i64: 128, 256>}]} {
    %c0 = arith.constant 0 : index
    %c0_0 = arith.constant 0 : index
    %0 = vector.load %arg1[%c0, %c0_0] : memref<128x32xbf16, #tpu.memory_space<vmem>>, vector<128x32xbf16>
    %c0_1 = arith.constant 0 : index
    %c0_2 = arith.constant 0 : index
    %1 = vector.load %arg2[%c0_1, %c0_2] : memref<32x256xbf16, #tpu.memory_space<vmem>>, vector<32x256xbf16>
    %cst = arith.constant dense<0.000000e+00> : vector<128x256xf32>
    %2 = tpu.matmul %0, %1, %cst {dimension_numbers = #tpu.dot_dimension_numbers<[1], [0], [0], [1], [0, 0, 1, 1], [], []>} : vector<128x32xbf16>, vector<32x256xbf16>, vector<128x256xf32> -> vector<128x256xf32>
    %c0_3 = arith.constant 0 : index
    %c0_4 = arith.constant 0 : index
    %3 = vector.load %arg3[%c0_3, %c0_4] : memref<128x256xf32, #tpu.memory_space<vmem>>, vector<128x256xf32>
    tpu.vector_store %arg3[%c0_3, %c0_4], %2 {strides = array<i32>} : memref<128x256xf32, #tpu.memory_space<vmem>>, vector<128x256xf32>,
    return
  }
  func.func @transform_0(%arg0: i32) -> (i32, i32) {
    %c0_i32 = arith.constant 0 : i32
    %c0_i32_0 = arith.constant 0 : i32
    return %arg0, %c0_i32 : i32, i32
  }
  func.func @transform_1(%arg0: i32) -> (i32, i32) {
    %c0_i32 = arith.constant 0 : i32
    %c0_i32_0 = arith.constant 0 : i32
    %c0_i32_1 = arith.constant 0 : i32
    return %c0_i32, %c0_i32_0 : i32, i32
  }
  func.func @transform_2(%arg0: i32) -> (i32, i32) {
    %c0_i32 = arith.constant 0 : i32
    %c0_i32_0 = arith.constant 0 : i32
    return %arg0, %c0_i32 : i32, i32
  }
}

module attributes {stable_mosaic.version = 11 : i64} {
  func.func @_bn_relu_kernel(%arg0: i32, %arg1: i32, %arg2: memref<512x16xf32, #tpu.memory_space<vmem>>, %arg3: memref<1x16xf32, #tpu.memory_space<vmem>>, %arg4: memref<1x16xf32, #tpu.memory_space<vmem>>, %arg5: memref<512x16xbf16, #tpu.memory_space<vmem>>, %arg6: memref<1x16xf32, #tpu.memory_space<vmem>>, %arg7: memref<1x16xf32, #tpu.memory_space<vmem>>) attributes {dimension_semantics = [#tpu.dimension_semantics<arbitrary>, #tpu.dimension_semantics<arbitrary>], iteration_bounds = array<i64: 2, 1>, scalar_prefetch = 0 : i64, scratch_operands = 2 : i64, tpu.core_type = #tpu.core_type<tc>, window_params = [{transform_indices = @transform_0, window_bounds = array<i64: 512, 16>}, {pipeline_mode = #tpu.pipeline_mode<synchronous>, transform_indices = @transform_1, window_bounds = array<i64: 1, 16>}, {pipeline_mode = #tpu.pipeline_mode<synchronous>, transform_indices = @transform_2, window_bounds = array<i64: 1, 16>}, {transform_indices = @transform_3, window_bounds = array<i64: 512, 16>}]} {
    %c0_i32 = arith.constant 0 : i32
    %0 = arith.cmpi eq, %arg0, %c0_i32 : i32
    %c0_i32_0 = arith.constant 0 : i32
    %1 = arith.cmpi eq, %arg1, %c0_i32_0 : i32
    %2 = arith.andi %0, %1 : i1
    %3 = arith.extui %2 : i1 to i32
    %c0_i32_1 = arith.constant 0 : i32
    %4 = arith.cmpi ne, %3, %c0_i32_1 : i32
    scf.if %4 {
      %cst = arith.constant 0.000000e+00 : f32
      %11 = vector.broadcast %cst : f32 to vector<1x16xf32>
      %c0 = arith.constant 0 : index
      %c0_5 = arith.constant 0 : index
      %12 = vector.load %arg6[%c0, %c0_5] : memref<1x16xf32, #tpu.memory_space<vmem>>, vector<1x16xf32>
      tpu.vector_store %arg6[%c0, %c0_5], %11 {strides = array<i32>} : memref<1x16xf32, #tpu.memory_space<vmem>>, vector<1x16xf32>,
      %cst_6 = arith.constant 0.000000e+00 : f32
      %13 = vector.broadcast %cst_6 : f32 to vector<1x16xf32>
      %c0_7 = arith.constant 0 : index
      %c0_8 = arith.constant 0 : index
      %14 = vector.load %arg7[%c0_7, %c0_8] : memref<1x16xf32, #tpu.memory_space<vmem>>, vector<1x16xf32>
      tpu.vector_store %arg7[%c0_7, %c0_8], %13 {strides = array<i32>} : memref<1x16xf32, #tpu.memory_space<vmem>>, vector<1x16xf32>,
    } else {
    }
    %c0_i32_2 = arith.constant 0 : i32
    %5 = arith.cmpi eq, %arg0, %c0_i32_2 : i32
    %6 = arith.extui %5 : i1 to i32
    %c0_i32_3 = arith.constant 0 : i32
    %7 = arith.cmpi ne, %6, %c0_i32_3 : i32
    scf.if %7 {
      %c0 = arith.constant 0 : index
      %c0_5 = arith.constant 0 : index
      %11 = vector.load %arg2[%c0, %c0_5] : memref<512x16xf32, #tpu.memory_space<vmem>>, vector<512x16xf32>
      %c0_6 = arith.constant 0 : index
      %c0_7 = arith.constant 0 : index
      %12 = vector.load %arg6[%c0_6, %c0_7] : memref<1x16xf32, #tpu.memory_space<vmem>>, vector<1x16xf32>
      %cst = arith.constant dense<0.000000e+00> : vector<16xf32>
      %13 = vector.multi_reduction <add>, %11, %cst [0] : vector<512x16xf32> to vector<16xf32>
      %14 = vector.shape_cast %13 : vector<16xf32> to vector<1x16xf32>
      %15 = arith.addf %12, %14 : vector<1x16xf32>
      %c0_8 = arith.constant 0 : index
      %c0_9 = arith.constant 0 : index
      %16 = vector.load %arg6[%c0_8, %c0_9] : memref<1x16xf32, #tpu.memory_space<vmem>>, vector<1x16xf32>
      tpu.vector_store %arg6[%c0_8, %c0_9], %15 {strides = array<i32>} : memref<1x16xf32, #tpu.memory_space<vmem>>, vector<1x16xf32>,
      %c0_10 = arith.constant 0 : index
      %c0_11 = arith.constant 0 : index
      %17 = vector.load %arg7[%c0_10, %c0_11] : memref<1x16xf32, #tpu.memory_space<vmem>>, vector<1x16xf32>
      %18 = arith.mulf %11, %11 : vector<512x16xf32>
      %cst_12 = arith.constant dense<0.000000e+00> : vector<16xf32>
      %19 = vector.multi_reduction <add>, %18, %cst_12 [0] : vector<512x16xf32> to vector<16xf32>
      %20 = vector.shape_cast %19 : vector<16xf32> to vector<1x16xf32>
      %21 = arith.addf %17, %20 : vector<1x16xf32>
      %c0_13 = arith.constant 0 : index
      %c0_14 = arith.constant 0 : index
      %22 = vector.load %arg7[%c0_13, %c0_14] : memref<1x16xf32, #tpu.memory_space<vmem>>, vector<1x16xf32>
      tpu.vector_store %arg7[%c0_13, %c0_14], %21 {strides = array<i32>} : memref<1x16xf32, #tpu.memory_space<vmem>>, vector<1x16xf32>,
    } else {
    }
    %c1_i32 = arith.constant 1 : i32
    %8 = arith.cmpi eq, %arg0, %c1_i32 : i32
    %9 = arith.extui %8 : i1 to i32
    %c0_i32_4 = arith.constant 0 : i32
    %10 = arith.cmpi ne, %9, %c0_i32_4 : i32
    scf.if %10 {
      %c0 = arith.constant 0 : index
      %c0_5 = arith.constant 0 : index
      %11 = vector.load %arg6[%c0, %c0_5] : memref<1x16xf32, #tpu.memory_space<vmem>>, vector<1x16xf32>
      %cst = arith.constant 0.001953125 : f32
      %12 = vector.broadcast %cst : f32 to vector<1x16xf32>
      %13 = arith.mulf %11, %12 : vector<1x16xf32>
      %c0_6 = arith.constant 0 : index
      %c0_7 = arith.constant 0 : index
      %14 = vector.load %arg7[%c0_6, %c0_7] : memref<1x16xf32, #tpu.memory_space<vmem>>, vector<1x16xf32>
      %cst_8 = arith.constant 0.001953125 : f32
      %15 = vector.broadcast %cst_8 : f32 to vector<1x16xf32>
      %16 = arith.mulf %14, %15 : vector<1x16xf32>
      %17 = arith.mulf %13, %13 : vector<1x16xf32>
      %18 = arith.subf %16, %17 : vector<1x16xf32>
      %c0_9 = arith.constant 0 : index
      %c0_10 = arith.constant 0 : index
      %19 = vector.load %arg3[%c0_9, %c0_10] : memref<1x16xf32, #tpu.memory_space<vmem>>, vector<1x16xf32>
      %cst_11 = arith.constant 9.99999974E-6 : f32
      %20 = vector.broadcast %cst_11 : f32 to vector<1x16xf32>
      %21 = arith.addf %18, %20 : vector<1x16xf32>
      %22 = math.rsqrt %21 : vector<1x16xf32>
      %23 = arith.mulf %19, %22 : vector<1x16xf32>
      %c0_12 = arith.constant 0 : index
      %c0_13 = arith.constant 0 : index
      %24 = vector.load %arg4[%c0_12, %c0_13] : memref<1x16xf32, #tpu.memory_space<vmem>>, vector<1x16xf32>
      %25 = arith.mulf %13, %23 : vector<1x16xf32>
      %26 = arith.subf %24, %25 : vector<1x16xf32>
      %c0_14 = arith.constant 0 : index
      %c0_15 = arith.constant 0 : index
      %27 = vector.load %arg2[%c0_14, %c0_15] : memref<512x16xf32, #tpu.memory_space<vmem>>, vector<512x16xf32>
      %28 = vector.broadcast %23 : vector<1x16xf32> to vector<512x16xf32>
      %29 = arith.mulf %27, %28 : vector<512x16xf32>
      %30 = vector.broadcast %26 : vector<1x16xf32> to vector<512x16xf32>
      %31 = arith.addf %29, %30 : vector<512x16xf32>
      %cst_16 = arith.constant 0.000000e+00 : f32
      %32 = vector.broadcast %cst_16 : f32 to vector<512x16xf32>
      %33 = arith.maximumf %31, %32 : vector<512x16xf32>
      %34 = arith.truncf %33 : vector<512x16xf32> to vector<512x16xbf16>
      %c0_17 = arith.constant 0 : index
      %c0_18 = arith.constant 0 : index
      %35 = vector.load %arg5[%c0_17, %c0_18] : memref<512x16xbf16, #tpu.memory_space<vmem>>, vector<512x16xbf16>
      tpu.vector_store %arg5[%c0_17, %c0_18], %34 {strides = array<i32>} : memref<512x16xbf16, #tpu.memory_space<vmem>>, vector<512x16xbf16>,
    } else {
    }
    return
  }
  func.func @transform_0(%arg0: i32, %arg1: i32) -> (i32, i32) {
    %c0_i32 = arith.constant 0 : i32
    %c0_i32_0 = arith.constant 0 : i32
    return %arg1, %c0_i32 : i32, i32
  }
  func.func @transform_1(%arg0: i32, %arg1: i32) -> (i32, i32) {
    %c0_i32 = arith.constant 0 : i32
    %c0_i32_0 = arith.constant 0 : i32
    %c0_i32_1 = arith.constant 0 : i32
    return %c0_i32, %c0_i32_0 : i32, i32
  }
  func.func @transform_2(%arg0: i32, %arg1: i32) -> (i32, i32) {
    %c0_i32 = arith.constant 0 : i32
    %c0_i32_0 = arith.constant 0 : i32
    %c0_i32_1 = arith.constant 0 : i32
    return %c0_i32, %c0_i32_0 : i32, i32
  }
  func.func @transform_3(%arg0: i32, %arg1: i32) -> (i32, i32) {
    %0 = arith.muli %arg1, %arg0 : i32
    %c0_i32 = arith.constant 0 : i32
    %c0_i32_0 = arith.constant 0 : i32
    return %0, %c0_i32 : i32, i32
  }
}

module attributes {stable_mosaic.version = 11 : i64} {
  func.func @_matmul_kernel(%arg0: i32, %arg1: memref<512x16xbf16, #tpu.memory_space<vmem>>, %arg2: memref<16x128xbf16, #tpu.memory_space<vmem>>, %arg3: memref<512x128xf32, #tpu.memory_space<vmem>>) attributes {dimension_semantics = [#tpu.dimension_semantics<parallel>], iteration_bounds = array<i64: 1>, scalar_prefetch = 0 : i64, scratch_operands = 0 : i64, tpu.core_type = #tpu.core_type<tc>, window_params = [{transform_indices = @transform_0, window_bounds = array<i64: 512, 16>}, {pipeline_mode = #tpu.pipeline_mode<synchronous>, transform_indices = @transform_1, window_bounds = array<i64: 16, 128>}, {transform_indices = @transform_2, window_bounds = array<i64: 512, 128>}]} {
    %c0 = arith.constant 0 : index
    %c0_0 = arith.constant 0 : index
    %0 = vector.load %arg1[%c0, %c0_0] : memref<512x16xbf16, #tpu.memory_space<vmem>>, vector<512x16xbf16>
    %c0_1 = arith.constant 0 : index
    %c0_2 = arith.constant 0 : index
    %1 = vector.load %arg2[%c0_1, %c0_2] : memref<16x128xbf16, #tpu.memory_space<vmem>>, vector<16x128xbf16>
    %cst = arith.constant dense<0.000000e+00> : vector<512x128xf32>
    %2 = tpu.matmul %0, %1, %cst {dimension_numbers = #tpu.dot_dimension_numbers<[1], [0], [0], [1], [0, 0, 1, 1], [], []>} : vector<512x16xbf16>, vector<16x128xbf16>, vector<512x128xf32> -> vector<512x128xf32>
    %c0_3 = arith.constant 0 : index
    %c0_4 = arith.constant 0 : index
    %3 = vector.load %arg3[%c0_3, %c0_4] : memref<512x128xf32, #tpu.memory_space<vmem>>, vector<512x128xf32>
    tpu.vector_store %arg3[%c0_3, %c0_4], %2 {strides = array<i32>} : memref<512x128xf32, #tpu.memory_space<vmem>>, vector<512x128xf32>,
    return
  }
  func.func @transform_0(%arg0: i32) -> (i32, i32) {
    %c0_i32 = arith.constant 0 : i32
    %c0_i32_0 = arith.constant 0 : i32
    return %arg0, %c0_i32 : i32, i32
  }
  func.func @transform_1(%arg0: i32) -> (i32, i32) {
    %c0_i32 = arith.constant 0 : i32
    %c0_i32_0 = arith.constant 0 : i32
    %c0_i32_1 = arith.constant 0 : i32
    return %c0_i32, %c0_i32_0 : i32, i32
  }
  func.func @transform_2(%arg0: i32) -> (i32, i32) {
    %c0_i32 = arith.constant 0 : i32
    %c0_i32_0 = arith.constant 0 : i32
    return %arg0, %c0_i32 : i32, i32
  }
}

module attributes {stable_mosaic.version = 11 : i64} {
  func.func @_bn_relu_kernel(%arg0: i32, %arg1: i32, %arg2: memref<512x8xf32, #tpu.memory_space<vmem>>, %arg3: memref<1x8xf32, #tpu.memory_space<vmem>>, %arg4: memref<1x8xf32, #tpu.memory_space<vmem>>, %arg5: memref<512x8xbf16, #tpu.memory_space<vmem>>, %arg6: memref<1x8xf32, #tpu.memory_space<vmem>>, %arg7: memref<1x8xf32, #tpu.memory_space<vmem>>) attributes {dimension_semantics = [#tpu.dimension_semantics<arbitrary>, #tpu.dimension_semantics<arbitrary>], iteration_bounds = array<i64: 2, 4>, scalar_prefetch = 0 : i64, scratch_operands = 2 : i64, tpu.core_type = #tpu.core_type<tc>, window_params = [{transform_indices = @transform_0, window_bounds = array<i64: 512, 8>}, {pipeline_mode = #tpu.pipeline_mode<synchronous>, transform_indices = @transform_1, window_bounds = array<i64: 1, 8>}, {pipeline_mode = #tpu.pipeline_mode<synchronous>, transform_indices = @transform_2, window_bounds = array<i64: 1, 8>}, {transform_indices = @transform_3, window_bounds = array<i64: 512, 8>}]} {
    %c0_i32 = arith.constant 0 : i32
    %0 = arith.cmpi eq, %arg0, %c0_i32 : i32
    %c0_i32_0 = arith.constant 0 : i32
    %1 = arith.cmpi eq, %arg1, %c0_i32_0 : i32
    %2 = arith.andi %0, %1 : i1
    %3 = arith.extui %2 : i1 to i32
    %c0_i32_1 = arith.constant 0 : i32
    %4 = arith.cmpi ne, %3, %c0_i32_1 : i32
    scf.if %4 {
      %cst = arith.constant 0.000000e+00 : f32
      %11 = vector.broadcast %cst : f32 to vector<1x8xf32>
      %c0 = arith.constant 0 : index
      %c0_5 = arith.constant 0 : index
      %12 = vector.load %arg6[%c0, %c0_5] : memref<1x8xf32, #tpu.memory_space<vmem>>, vector<1x8xf32>
      tpu.vector_store %arg6[%c0, %c0_5], %11 {strides = array<i32>} : memref<1x8xf32, #tpu.memory_space<vmem>>, vector<1x8xf32>,
      %cst_6 = arith.constant 0.000000e+00 : f32
      %13 = vector.broadcast %cst_6 : f32 to vector<1x8xf32>
      %c0_7 = arith.constant 0 : index
      %c0_8 = arith.constant 0 : index
      %14 = vector.load %arg7[%c0_7, %c0_8] : memref<1x8xf32, #tpu.memory_space<vmem>>, vector<1x8xf32>
      tpu.vector_store %arg7[%c0_7, %c0_8], %13 {strides = array<i32>} : memref<1x8xf32, #tpu.memory_space<vmem>>, vector<1x8xf32>,
    } else {
    }
    %c0_i32_2 = arith.constant 0 : i32
    %5 = arith.cmpi eq, %arg0, %c0_i32_2 : i32
    %6 = arith.extui %5 : i1 to i32
    %c0_i32_3 = arith.constant 0 : i32
    %7 = arith.cmpi ne, %6, %c0_i32_3 : i32
    scf.if %7 {
      %c0 = arith.constant 0 : index
      %c0_5 = arith.constant 0 : index
      %11 = vector.load %arg2[%c0, %c0_5] : memref<512x8xf32, #tpu.memory_space<vmem>>, vector<512x8xf32>
      %c0_6 = arith.constant 0 : index
      %c0_7 = arith.constant 0 : index
      %12 = vector.load %arg6[%c0_6, %c0_7] : memref<1x8xf32, #tpu.memory_space<vmem>>, vector<1x8xf32>
      %cst = arith.constant dense<0.000000e+00> : vector<8xf32>
      %13 = vector.multi_reduction <add>, %11, %cst [0] : vector<512x8xf32> to vector<8xf32>
      %14 = vector.shape_cast %13 : vector<8xf32> to vector<1x8xf32>
      %15 = arith.addf %12, %14 : vector<1x8xf32>
      %c0_8 = arith.constant 0 : index
      %c0_9 = arith.constant 0 : index
      %16 = vector.load %arg6[%c0_8, %c0_9] : memref<1x8xf32, #tpu.memory_space<vmem>>, vector<1x8xf32>
      tpu.vector_store %arg6[%c0_8, %c0_9], %15 {strides = array<i32>} : memref<1x8xf32, #tpu.memory_space<vmem>>, vector<1x8xf32>,
      %c0_10 = arith.constant 0 : index
      %c0_11 = arith.constant 0 : index
      %17 = vector.load %arg7[%c0_10, %c0_11] : memref<1x8xf32, #tpu.memory_space<vmem>>, vector<1x8xf32>
      %18 = arith.mulf %11, %11 : vector<512x8xf32>
      %cst_12 = arith.constant dense<0.000000e+00> : vector<8xf32>
      %19 = vector.multi_reduction <add>, %18, %cst_12 [0] : vector<512x8xf32> to vector<8xf32>
      %20 = vector.shape_cast %19 : vector<8xf32> to vector<1x8xf32>
      %21 = arith.addf %17, %20 : vector<1x8xf32>
      %c0_13 = arith.constant 0 : index
      %c0_14 = arith.constant 0 : index
      %22 = vector.load %arg7[%c0_13, %c0_14] : memref<1x8xf32, #tpu.memory_space<vmem>>, vector<1x8xf32>
      tpu.vector_store %arg7[%c0_13, %c0_14], %21 {strides = array<i32>} : memref<1x8xf32, #tpu.memory_space<vmem>>, vector<1x8xf32>,
    } else {
    }
    %c1_i32 = arith.constant 1 : i32
    %8 = arith.cmpi eq, %arg0, %c1_i32 : i32
    %9 = arith.extui %8 : i1 to i32
    %c0_i32_4 = arith.constant 0 : i32
    %10 = arith.cmpi ne, %9, %c0_i32_4 : i32
    scf.if %10 {
      %c0 = arith.constant 0 : index
      %c0_5 = arith.constant 0 : index
      %11 = vector.load %arg6[%c0, %c0_5] : memref<1x8xf32, #tpu.memory_space<vmem>>, vector<1x8xf32>
      %cst = arith.constant 4.8828125E-4 : f32
      %12 = vector.broadcast %cst : f32 to vector<1x8xf32>
      %13 = arith.mulf %11, %12 : vector<1x8xf32>
      %c0_6 = arith.constant 0 : index
      %c0_7 = arith.constant 0 : index
      %14 = vector.load %arg7[%c0_6, %c0_7] : memref<1x8xf32, #tpu.memory_space<vmem>>, vector<1x8xf32>
      %cst_8 = arith.constant 4.8828125E-4 : f32
      %15 = vector.broadcast %cst_8 : f32 to vector<1x8xf32>
      %16 = arith.mulf %14, %15 : vector<1x8xf32>
      %17 = arith.mulf %13, %13 : vector<1x8xf32>
      %18 = arith.subf %16, %17 : vector<1x8xf32>
      %c0_9 = arith.constant 0 : index
      %c0_10 = arith.constant 0 : index
      %19 = vector.load %arg3[%c0_9, %c0_10] : memref<1x8xf32, #tpu.memory_space<vmem>>, vector<1x8xf32>
      %cst_11 = arith.constant 9.99999974E-6 : f32
      %20 = vector.broadcast %cst_11 : f32 to vector<1x8xf32>
      %21 = arith.addf %18, %20 : vector<1x8xf32>
      %22 = math.rsqrt %21 : vector<1x8xf32>
      %23 = arith.mulf %19, %22 : vector<1x8xf32>
      %c0_12 = arith.constant 0 : index
      %c0_13 = arith.constant 0 : index
      %24 = vector.load %arg4[%c0_12, %c0_13] : memref<1x8xf32, #tpu.memory_space<vmem>>, vector<1x8xf32>
      %25 = arith.mulf %13, %23 : vector<1x8xf32>
      %26 = arith.subf %24, %25 : vector<1x8xf32>
      %c0_14 = arith.constant 0 : index
      %c0_15 = arith.constant 0 : index
      %27 = vector.load %arg2[%c0_14, %c0_15] : memref<512x8xf32, #tpu.memory_space<vmem>>, vector<512x8xf32>
      %28 = vector.broadcast %23 : vector<1x8xf32> to vector<512x8xf32>
      %29 = arith.mulf %27, %28 : vector<512x8xf32>
      %30 = vector.broadcast %26 : vector<1x8xf32> to vector<512x8xf32>
      %31 = arith.addf %29, %30 : vector<512x8xf32>
      %cst_16 = arith.constant 0.000000e+00 : f32
      %32 = vector.broadcast %cst_16 : f32 to vector<512x8xf32>
      %33 = arith.maximumf %31, %32 : vector<512x8xf32>
      %34 = arith.truncf %33 : vector<512x8xf32> to vector<512x8xbf16>
      %c0_17 = arith.constant 0 : index
      %c0_18 = arith.constant 0 : index
      %35 = vector.load %arg5[%c0_17, %c0_18] : memref<512x8xbf16, #tpu.memory_space<vmem>>, vector<512x8xbf16>
      tpu.vector_store %arg5[%c0_17, %c0_18], %34 {strides = array<i32>} : memref<512x8xbf16, #tpu.memory_space<vmem>>, vector<512x8xbf16>,
    } else {
    }
    return
  }
  func.func @transform_0(%arg0: i32, %arg1: i32) -> (i32, i32) {
    %c0_i32 = arith.constant 0 : i32
    %c0_i32_0 = arith.constant 0 : i32
    return %arg1, %c0_i32 : i32, i32
  }
  func.func @transform_1(%arg0: i32, %arg1: i32) -> (i32, i32) {
    %c0_i32 = arith.constant 0 : i32
    %c0_i32_0 = arith.constant 0 : i32
    %c0_i32_1 = arith.constant 0 : i32
    return %c0_i32, %c0_i32_0 : i32, i32
  }
  func.func @transform_2(%arg0: i32, %arg1: i32) -> (i32, i32) {
    %c0_i32 = arith.constant 0 : i32
    %c0_i32_0 = arith.constant 0 : i32
    %c0_i32_1 = arith.constant 0 : i32
    return %c0_i32, %c0_i32_0 : i32, i32
  }
  func.func @transform_3(%arg0: i32, %arg1: i32) -> (i32, i32) {
    %0 = arith.muli %arg1, %arg0 : i32
    %c0_i32 = arith.constant 0 : i32
    %c0_i32_0 = arith.constant 0 : i32
    return %0, %c0_i32 : i32, i32
  }
}

module attributes {stable_mosaic.version = 11 : i64} {
  func.func @_matmul_kernel(%arg0: i32, %arg1: memref<512x8xbf16, #tpu.memory_space<vmem>>, %arg2: memref<8x128xbf16, #tpu.memory_space<vmem>>, %arg3: memref<512x128xf32, #tpu.memory_space<vmem>>) attributes {dimension_semantics = [#tpu.dimension_semantics<parallel>], iteration_bounds = array<i64: 4>, scalar_prefetch = 0 : i64, scratch_operands = 0 : i64, tpu.core_type = #tpu.core_type<tc>, window_params = [{transform_indices = @transform_0, window_bounds = array<i64: 512, 8>}, {pipeline_mode = #tpu.pipeline_mode<synchronous>, transform_indices = @transform_1, window_bounds = array<i64: 8, 128>}, {transform_indices = @transform_2, window_bounds = array<i64: 512, 128>}]} {
    %c0 = arith.constant 0 : index
    %c0_0 = arith.constant 0 : index
    %0 = vector.load %arg1[%c0, %c0_0] : memref<512x8xbf16, #tpu.memory_space<vmem>>, vector<512x8xbf16>
    %c0_1 = arith.constant 0 : index
    %c0_2 = arith.constant 0 : index
    %1 = vector.load %arg2[%c0_1, %c0_2] : memref<8x128xbf16, #tpu.memory_space<vmem>>, vector<8x128xbf16>
    %cst = arith.constant dense<0.000000e+00> : vector<512x128xf32>
    %2 = tpu.matmul %0, %1, %cst {dimension_numbers = #tpu.dot_dimension_numbers<[1], [0], [0], [1], [0, 0, 1, 1], [], []>} : vector<512x8xbf16>, vector<8x128xbf16>, vector<512x128xf32> -> vector<512x128xf32>
    %c0_3 = arith.constant 0 : index
    %c0_4 = arith.constant 0 : index
    %3 = vector.load %arg3[%c0_3, %c0_4] : memref<512x128xf32, #tpu.memory_space<vmem>>, vector<512x128xf32>
    tpu.vector_store %arg3[%c0_3, %c0_4], %2 {strides = array<i32>} : memref<512x128xf32, #tpu.memory_space<vmem>>, vector<512x128xf32>,
    return
  }
  func.func @transform_0(%arg0: i32) -> (i32, i32) {
    %c0_i32 = arith.constant 0 : i32
    %c0_i32_0 = arith.constant 0 : i32
    return %arg0, %c0_i32 : i32, i32
  }
  func.func @transform_1(%arg0: i32) -> (i32, i32) {
    %c0_i32 = arith.constant 0 : i32
    %c0_i32_0 = arith.constant 0 : i32
    %c0_i32_1 = arith.constant 0 : i32
    return %c0_i32, %c0_i32_0 : i32, i32
  }
  func.func @transform_2(%arg0: i32) -> (i32, i32) {
    %c0_i32 = arith.constant 0 : i32
    %c0_i32_0 = arith.constant 0 : i32
    return %arg0, %c0_i32 : i32, i32
  }
}

module attributes {stable_mosaic.version = 11 : i64} {
  func.func @_tanh_kernel(%arg0: i32, %arg1: memref<256x128xf32, #tpu.memory_space<vmem>>, %arg2: memref<256x128xf32, #tpu.memory_space<vmem>>) attributes {dimension_semantics = [#tpu.dimension_semantics<parallel>], iteration_bounds = array<i64: 1>, scalar_prefetch = 0 : i64, scratch_operands = 0 : i64, tpu.core_type = #tpu.core_type<tc>, window_params = [{transform_indices = @transform_0, window_bounds = array<i64: 256, 128>}, {transform_indices = @transform_1, window_bounds = array<i64: 256, 128>}]} {
    %c0 = arith.constant 0 : index
    %c0_0 = arith.constant 0 : index
    %0 = vector.load %arg1[%c0, %c0_0] : memref<256x128xf32, #tpu.memory_space<vmem>>, vector<256x128xf32>
    %1 = math.tanh %0 : vector<256x128xf32>
    %c0_1 = arith.constant 0 : index
    %c0_2 = arith.constant 0 : index
    %2 = vector.load %arg2[%c0_1, %c0_2] : memref<256x128xf32, #tpu.memory_space<vmem>>, vector<256x128xf32>
    tpu.vector_store %arg2[%c0_1, %c0_2], %1 {strides = array<i32>} : memref<256x128xf32, #tpu.memory_space<vmem>>, vector<256x128xf32>,
    return
  }
  func.func @transform_0(%arg0: i32) -> (i32, i32) {
    %c0_i32 = arith.constant 0 : i32
    %c0_i32_0 = arith.constant 0 : i32
    return %arg0, %c0_i32 : i32, i32
  }
  func.func @transform_1(%arg0: i32) -> (i32, i32) {
    %c0_i32 = arith.constant 0 : i32
    %c0_i32_0 = arith.constant 0 : i32
    return %arg0, %c0_i32 : i32, i32
  }
}

</mosaic_0001>

<llo_original>
// kernel: generator_forward.11
$region0: #{generator_forward.11}
  #allocation0 [shape = 'u32[]', space=smem, size = 0x4, offset = 0x4, fixed_abs, tag = 'smem constant byte address 0x4 - core index']
  #allocation1 [shape = 'u32[144,128]{1,0:T(1,128)}', space=vmem, size = 0x12000, scoped, tag = 'internal scratch']
  #allocation2 [shape = 'f32[1,64]{1,0:T(1,128)}', space=vmem, size = 0x200, scoped, tag = 'scratch operand']
  #allocation3 [shape = 'f32[1,64]{1,0:T(1,128)}', space=vmem, size = 0x200, scoped, tag = 'scratch operand']
  %s0 = inlined_call_operand.vmem [shape: f32[32,64], index: 0, kind: input, shape index: {}]
  %s1 = inlined_call_operand.hbm [shape: f32[1,64], index: 1, kind: input, shape index: {}]
  %s2 = inlined_call_operand.hbm [shape: f32[1,64], index: 2, kind: input, shape index: {}]
  %s3 = inlined_call_operand.vmem [shape: bf16[32,64], index: 3, kind: output, shape index: {}]
  %s4 = sld [smem:[#allocation0]]
  $region65: #{generator_forward.11} parent=0
    _
  %s6 = ssub.s32 1, %s4
  %s7 = scalar_select 0, %s6, %s4
  $region1: #{generator_forward.11} parent=0
    #allocation4 [shape = 'u8[512]{0}', space=vmem, size = 0x400, scoped, tag = 'input window, operand 1, single buffered']
    #allocation5 [shape = 's32[2]{0}', space=sflag, size = 0x8, scoped, tag = 'scoped memory for generator_forward.11']
    #allocation6 [shape = 'u8[512]{0}', space=vmem, size = 0x400, scoped, tag = 'input window, operand 2, single buffered']
    #allocation7 [shape = 's32[1]{0}', space=sflag, size = 0x4, scoped, tag = 'scoped memory for generator_forward.11']
    %8 = vsyncpa [#allocation5], 0
    %9 = vsyncpa [#allocation7], 0
    loop: start=0, step=1, limit=4
    $region2: #{generator_forward.11} parent=1 // loop_pre_header
      _
    $region3: #{generator_forward.11} parent=1 // loop_header
      %s11 = sphi 0, %s15
      %p12 = scmp.ge.s32.totalorder %s11, 4
      %s18 = sphi 0, %s30
      %s19 = sphi 0, %s26
      %s20 = sphi 0, %s18
      %s21 = sphi 0, %s19
      %s22 = sphi 0, %s20
      %s23 = sphi 0, %s21
      %s33 = sphi 0, %s35
      %s36 = sphi 0, %s33
      %s37 = sphi 0, %s36
      %s53 = sphi 0, %s37
      %s57 = sphi 0, %s57
      %s59 = sphi 0, %s57
      %s60 = sphi 0, %s59
      %s74 = sphi 0, %s60
      %s78 = sphi 0, %s78
      %s80 = sphi 0, %s78
      %s81 = sphi 0, %s80
      %s95 = sphi 0, %s81
      %s103 = sphi 0, %s105
      %s106 = sphi 0, %s103
      %s107 = sphi 0, %s106
      %s123 = sphi 0, %s107
    $region4: #{generator_forward.11} parent=1 // loop_header_branch
      %14 = sbr.rel (%p12) target = $region8
    $region5: #{generator_forward.11} parent=1 // loop_body
      %s16 = ssub.s32 %s11, 1
      %s17 = ssub.s32 %s11, 2
      %s24 = sadd.s32 1, %s19
      %p25 = scmp.ge.s32.totalorder %s24, 1
      %s26 = scalar_select %p25, 0, %s24
      %s27 = sadd.s32 1, %s18
      %s28 = scalar_select %p25, %s27, %s18
      %p29 = scmp.ge.s32.totalorder %s28, 2
      %s30 = scalar_select %p29, 0, %s28
      %s31 = ssub.s32 %s19, %s26
      %p32 = scmp.eq.s32.totalorder %s31, 0
      %s34 = sadd.s32 %s33, 1
      %s35 = scalar_select %p32, %s33, %s34
      %p38 = pneg %p32
      %p39 = scmp.eq.s32.totalorder %s11, 1
      %p40 = por %p38, %p39
      %p41 = scmp.ne.s32.totalorder %s33, %s36
      %p42 = scmp.eq.s32.totalorder %s11, 0
      %p43 = por %p41, %p42
      %p44 = scmp.ne.s32.totalorder %s33, %s36
      %p45 = scmp.eq.s32.totalorder %s16, 1
      %p46 = por %p44, %p45
      %p47 = scmp.ne.s32.totalorder %s36, %s37
      %p48 = scmp.eq.s32.totalorder %s16, 0
      %p49 = por %p47, %p48
      %p50 = scmp.ne.s32.totalorder %s36, %s37
      %p51 = scmp.eq.s32.totalorder %s17, 1
      %p52 = por %p50, %p51
      %p54 = scmp.ne.s32.totalorder %s37, %s53
      %p55 = scmp.eq.s32.totalorder %s17, 0
      %p56 = por %p54, %p55
      %s58 = sadd.s32 %s57, 1
      %p61 = scmp.eq.s32.totalorder %s11, 1
      %p62 = scmp.ne.s32.totalorder %s57, %s59
      %p63 = scmp.eq.s32.totalorder %s11, 0
      %p64 = por %p62, %p63
      %p65 = scmp.ne.s32.totalorder %s57, %s59
      %p66 = scmp.eq.s32.totalorder %s16, 1
      %p67 = por %p65, %p66
      %p68 = scmp.ne.s32.totalorder %s59, %s60
      %p69 = scmp.eq.s32.totalorder %s16, 0
      %p70 = por %p68, %p69
      %p71 = scmp.ne.s32.totalorder %s59, %s60
      %p72 = scmp.eq.s32.totalorder %s17, 1
      %p73 = por %p71, %p72
      %p75 = scmp.ne.s32.totalorder %s60, %s74
      %p76 = scmp.eq.s32.totalorder %s17, 0
      %p77 = por %p75, %p76
      %s79 = sadd.s32 %s78, 1
      %p82 = scmp.eq.s32.totalorder %s11, 1
      %p83 = scmp.ne.s32.totalorder %s78, %s80
      %p84 = scmp.eq.s32.totalorder %s11, 0
      %p85 = por %p83, %p84
      %p86 = scmp.ne.s32.totalorder %s78, %s80
      %p87 = scmp.eq.s32.totalorder %s16, 1
      %p88 = por %p86, %p87
      %p89 = scmp.ne.s32.totalorder %s80, %s81
      %p90 = scmp.eq.s32.totalorder %s16, 0
      %p91 = por %p89, %p90
      %p92 = scmp.ne.s32.totalorder %s80, %s81
      %p93 = scmp.eq.s32.totalorder %s17, 1
      %p94 = por %p92, %p93
      %p96 = scmp.ne.s32.totalorder %s81, %s95
      %p97 = scmp.eq.s32.totalorder %s17, 0
      %p98 = por %p96, %p97
      %s99 = smul.u32 %s19, %s18
      %s100 = smul.u32 %s26, %s30
      %s101 = ssub.s32 %s99, %s100
      %p102 = scmp.eq.s32.totalorder %s101, 0
      %s104 = sadd.s32 %s103, 1
      %s105 = scalar_select %p102, %s103, %s104
      %p108 = pneg %p102
      %p109 = scmp.eq.s32.totalorder %s11, 1
      %p110 = por %p108, %p109
      %p111 = scmp.ne.s32.totalorder %s103, %s106
      %p112 = scmp.eq.s32.totalorder %s11, 0
      %p113 = por %p111, %p112
      %p114 = scmp.ne.s32.totalorder %s103, %s106
      %p115 = scmp.eq.s32.totalorder %s16, 1
      %p116 = por %p114, %p115
      %p117 = scmp.ne.s32.totalorder %s106, %s107
      %p118 = scmp.eq.s32.totalorder %s16, 0
      %p119 = por %p117, %p118
      %p120 = scmp.ne.s32.totalorder %s106, %s107
      %p121 = scmp.eq.s32.totalorder %s17, 1
      %p122 = por %p120, %p121
      %p124 = scmp.ne.s32.totalorder %s107, %s123
      %p125 = scmp.eq.s32.totalorder %s17, 0
      %p126 = por %p124, %p125
      %p127 = scmp.le.s32.totalorder 1, %s11
      %p128 = scmp.lt.s32.totalorder %s11, 3
      %p129 = pnand %p127, %p128
      %p130 = pneg %p129
      // Predicated region
      $region9: #{generator_forward.11} parent=5 // pred_check
        _
      $region10: #{generator_forward.11} parent=5 // pred_check_branch
        %132 = sbr.rel (%p129) target = $region12
      $region11: #{generator_forward.11} parent=5 // pred_region
        %s133 = ssub.s32 %s11, 1
        // Predicated region
        $region13: #{generator_forward.11} parent=11 // pred_check
          %p134 = pneg %p49
        $region14: #{generator_forward.11} parent=11 // pred_check_branch
          %136 = sbr.rel (%p134) target = $region16
        $region15: #{generator_forward.11} parent=11 // pred_region
          %s137 = smul.u32 4, %s21
          %p138 = scmp.lt.s32.totalorder %s137, 3
          %s139 = scalar_select %p138, %s137, 3
          %s140 = smul.addr %s139, 8
          %s141 = scalar_lea.vmem %s0, %s140
          %s142 = smul.u32 4, %s21
        $region16: #{generator_forward.11} parent=11 // pred_fallthru
          _
        // Predicated region
        $region17: #{generator_forward.11} parent=11 // pred_check
          %p143 = pneg %p70
        $region18: #{generator_forward.11} parent=11 // pred_check_branch
          %145 = sbr.rel (%p143) target = $region20
        $region19: #{generator_forward.11} parent=11 // pred_region
          %s147 = ssub.s32 16, 16
          %148 = vsyncadd [#allocation5], %s147
          %s150 = sshll.u32 [#allocation4], 4
          %s151 = int_to_ptr.vmem [resolvable:$true] %s150
          %153 = dma.hbm_to_vmem [thread:$0]  %s1, 16, %s151, [#allocation5]
        $region20: #{generator_forward.11} parent=11 // pred_fallthru
          _
        // Predicated region
        $region21: #{generator_forward.11} parent=11 // pred_check
          %p154 = pneg %p91
        $region22: #{generator_forward.11} parent=11 // pred_check_branch
          %156 = sbr.rel (%p154) target = $region24
        $region23: #{generator_forward.11} parent=11 // pred_region
          %s158 = ssub.s32 16, 16
          %159 = vsyncadd [#allocation7], %s158
          %s161 = sshll.u32 [#allocation6], 4
          %s162 = int_to_ptr.vmem [resolvable:$true] %s161
          %164 = dma.hbm_to_vmem [thread:$0]  %s2, 16, %s162, [#allocation7]
        $region24: #{generator_forward.11} parent=11 // pred_fallthru
          _
      $region12: #{generator_forward.11} parent=5 // pred_fallthru
        _
      %p165 = scmp.lt.s32.totalorder %s11, 2
      // Predicated region
      $region25: #{generator_forward.11} parent=5 // pred_check
        %p166 = pneg %p165
      $region26: #{generator_forward.11} parent=5 // pred_check_branch
        %168 = sbr.rel (%p166) target = $region28
      $region27: #{generator_forward.11} parent=5 // pred_region
        _
      $region28: #{generator_forward.11} parent=5 // pred_fallthru
        _
      %p169 = scmp.le.s32.totalorder 1, %s11
      %p170 = scmp.lt.s32.totalorder %s11, 3
      %p171 = pnand %p169, %p170
      %p172 = pneg %p171
      // Predicated region
      $region29: #{generator_forward.11} parent=5 // pred_check
        _
      $region30: #{generator_forward.11} parent=5 // pred_check_branch
        %174 = sbr.rel (%p171) target = $region32
      $region31: #{generator_forward.11} parent=5 // pred_region
        %s175 = ssub.s32 %s11, 1
        // Predicated region
        $region33: #{generator_forward.11} parent=31 // pred_check
          %p176 = pneg %p70
        $region34: #{generator_forward.11} parent=31 // pred_check_branch
          %178 = sbr.rel (%p176) target = $region36
        $region35: #{generator_forward.11} parent=31 // pred_region
          %179 = dma.done [#allocation5], 16
        $region36: #{generator_forward.11} parent=31 // pred_fallthru
          _
        // Predicated region
        $region37: #{generator_forward.11} parent=31 // pred_check
          %p180 = pneg %p91
        $region38: #{generator_forward.11} parent=31 // pred_check_branch
          %182 = sbr.rel (%p180) target = $region40
        $region39: #{generator_forward.11} parent=31 // pred_region
          %183 = dma.done [#allocation7], 16
        $region40: #{generator_forward.11} parent=31 // pred_fallthru
          _
        %s184 = smul.u32 4, %s21
        %p185 = scmp.lt.s32.totalorder %s184, 3
        %s186 = scalar_select %p185, %s184, 3
        %s187 = smul.addr %s186, 8
        %s188 = scalar_lea.vmem %s0, %s187
        %p189 = pneg %p49
        %p190 = pneg %p46
        %p191 = pneg %p70
        %p192 = pneg %p67
        %p193 = pneg %p91
        %p194 = pneg %p88
        %p195 = pneg %p119
        %p196 = pneg %p116
        %s197 = smul.u32 %s21, %s20
        %s198 = smul.u32 4, %s197
        %p199 = scmp.lt.s32.totalorder %s198, 3
        %s200 = scalar_select %p199, %s198, 3
        %s201 = smul.addr %s200, 4
        %s202 = scalar_lea.vmem %s3, %s201
        %s203 = smul.u32 4, %s21
        %p204 = scmp.lt.s32.totalorder %s203, 3
        %s205 = scalar_select %p204, %s203, 3
        %s206 = smul.addr %s205, 8
        %s207 = scalar_lea.vmem %s0, %s206
        %s208 = smul.u32 4, %s21
        %s209 = smul.u32 %s21, %s20
        %s210 = smul.u32 4, %s209
        %p211 = scmp.lt.s32.totalorder %s210, 3
        %s212 = scalar_select %p211, %s210, 3
        %s213 = smul.addr %s212, 4
        %s214 = scalar_lea.vmem %s3, %s213
        %s215 = smul.u32 %s21, %s20
        %s216 = smul.u32 4, %s215
        %p217 = scmp.eq.s32.totalorder %s20, 0
        %p218 = scmp.eq.s32.totalorder %s21, 0
        %p219 = pnand %p217, %p218
        %p220 = pneg %p219
        // Predicated region
        $region41: #{generator_forward.11} parent=31 // pred_check
          _
        $region42: #{generator_forward.11} parent=31 // pred_check_branch
          %222 = sbr.rel (%p219) target = $region44
        $region43: #{generator_forward.11} parent=31 // pred_region
          %vm223 = vcmask 516096
          %224 = vst.msk [vmem:[#allocation2] sm:$0x1] %vm223, 0.0
          %225 = vst.msk [vmem:[#allocation3] sm:$0x1] %vm223, 0.0
        $region44: #{generator_forward.11} parent=31 // pred_fallthru
          _
        // Predicated region
        $region45: #{generator_forward.11} parent=31 // pred_check
          %p226 = pneg %p217
        $region46: #{generator_forward.11} parent=31 // pred_check_branch
          %228 = sbr.rel (%p226) target = $region48
        $region47: #{generator_forward.11} parent=31 // pred_region
          %v229 = vld [vmem:[%s207] sm:$0xff]
          %v230 = vld [vmem:[%s207 + $0x8] sm:$0xff]
          %v231 = vld [vmem:[%s207 + $0x10] sm:$0xff]
          %v232 = vld [vmem:[%s207 + $0x18] sm:$0xff]
          %v233 = vld [vmem:[#allocation2] sm:$0x1]
          %vm234 = vcmask 523264
          %v235 = vsel %vm234, %v229, 0.0
          %v236 = vsel %vm234, %v230, 0.0
          %v237 = vadd.f32 %v235, %v236
          %v238 = vsel %vm234, %v231, 0.0
          %v239 = vadd.f32 %v237, %v238
          %v240 = vsel %vm234, %v232, 0.0
          %v241 = vadd.f32 %v239, %v240
          %v242 = vrot.slane %v241, 4
          %v243 = vadd.f32 %v241, %v242
          %v244 = vrot.slane %v243, 2
          %v245 = vadd.f32 %v243, %v244
          %v246 = vrot.slane %v245, 1
          %v247 = vadd.f32 %v245, %v246
          %v248 = vadd.f32 %v233, %v247
          %vm249 = vcmask 516096
          %250 = vst.msk [vmem:[#allocation2] sm:$0x1] %vm249, %v248
          %v251 = vld [vmem:[#allocation3] sm:$0x1]
          %v252 = vmul.f32 %v229, %v229
          %v253 = vmul.f32 %v230, %v230
          %v254 = vmul.f32 %v231, %v231
          %v255 = vmul.f32 %v232, %v232
          %v256 = vsel %vm234, %v252, 0.0
          %v257 = vsel %vm234, %v253, 0.0
          %v258 = vadd.f32 %v256, %v257
          %v259 = vsel %vm234, %v254, 0.0
          %v260 = vadd.f32 %v258, %v259
          %v261 = vsel %vm234, %v255, 0.0
          %v262 = vadd.f32 %v260, %v261
          %v263 = vrot.slane %v262, 4
          %v264 = vadd.f32 %v262, %v263
          %v265 = vrot.slane %v264, 2
          %v266 = vadd.f32 %v264, %v265
          %v267 = vrot.slane %v266, 1
          %v268 = vadd.f32 %v266, %v267
          %v269 = vadd.f32 %v251, %v268
          %270 = vst.msk [vmem:[#allocation3] sm:$0x1] %vm249, %v269
        $region48: #{generator_forward.11} parent=31 // pred_fallthru
          _
        %p271 = scmp.eq.s32.totalorder %s20, 1
        // Predicated region
        $region49: #{generator_forward.11} parent=31 // pred_check
          %p272 = pneg %p271
        $region50: #{generator_forward.11} parent=31 // pred_check_branch
          %274 = sbr.rel (%p272) target = $region52
        $region51: #{generator_forward.11} parent=31 // pred_region
          %v275 = vld [vmem:[#allocation2] sm:$0x1]
          %v276 = vmul.f32 %v275, 0.03125
          %v277 = vld [vmem:[#allocation3] sm:$0x1]
          %v278 = vmul.f32 %v277, 0.03125
          %v279 = vmul.f32 %v276, %v276
          %v280 = vsub.f32 %v278, %v279
          %v281 = vld [vmem:[#allocation4] sm:$0x1]
          %v282 = vadd.f32 %v280, 1e-05
          %v283 = vrsqrt.pop %v282
          %v284 = vmul.f32 %v281, %v283
          %v285 = vld [vmem:[#allocation6] sm:$0x1]
          %v286 = vmul.f32 %v276, %v284
          %v287 = vsub.f32 %v285, %v286
          %v288 = vld [vmem:[%s207] sm:$0xff]
          %v289 = vld [vmem:[%s207 + $0x8] sm:$0xff]
          %v290 = vld [vmem:[%s207 + $0x10] sm:$0xff]
          %v291 = vld [vmem:[%s207 + $0x18] sm:$0xff]
          %v293 = vlaneseq
          %v294 = vshrl.u32 %v293, 7
          %v295 = vsub.s32 0, %v294
          %v296 = vrot.slane %v284, %v295
          %v298 = vmul.f32 %v288, %v296
          %v299 = vmul.f32 %v289, %v296
          %v300 = vmul.f32 %v290, %v296
          %v301 = vmul.f32 %v291, %v296
          %v303 = vlaneseq
          %v304 = vshrl.u32 %v303, 7
          %v305 = vsub.s32 0, %v304
          %v306 = vrot.slane %v287, %v305
          %v308 = vadd.f32 %v298, %v306
          %v309 = vadd.f32 %v299, %v306
          %v310 = vadd.f32 %v300, %v306
          %v311 = vadd.f32 %v301, %v306
          %v312 = vmax.f32 %v308, 0.0
          %v313 = vmax.f32 %v309, 0.0
          %v314 = vmax.f32 %v310, 0.0
          %v315 = vmax.f32 %v311, 0.0
          %v316 = vpack.c.bf16 %v313, %v312
          %v317 = vpack.c.bf16 %v315, %v314
          %v320 = vunpack.c.l.b16 %v316
          %v321 = vunpack.c.h.b16 %v316
          %v322 = vunpack.c.l.b16 %v317
          %v323 = vunpack.c.h.b16 %v317
          %v324 = vpack.c.b16 %v320, %v320
          %v325 = vpack.c.b16 %v321, %v321
          %v326 = vpack.c.b16 %v322, %v322
          %v327 = vpack.c.b16 %v323, %v323
          %vm332 = vcmask 519168
          %333 = vst.msk [vmem:[%s214] sm:$0xf] %vm332, %v324
          %334 = vst.msk [vmem:[%s214 + $0x4] sm:$0xf] %vm332, %v325
          %335 = vst.msk [vmem:[%s214 + $0x8] sm:$0xf] %vm332, %v326
          %336 = vst.msk [vmem:[%s214 + $0xc] sm:$0xf] %vm332, %v327
        $region52: #{generator_forward.11} parent=31 // pred_fallthru
          _
        %s337 = smul.u32 %s21, %s20
        %s338 = smul.u32 4, %s337
        %p339 = scmp.lt.s32.totalorder %s338, 3
        %s340 = scalar_select %p339, %s338, 3
        %s341 = smul.addr %s340, 4
        %s342 = scalar_lea.vmem %s3, %s341
        // Predicated region
        $region53: #{generator_forward.11} parent=31 // pred_check
          %p343 = pneg %p116
        $region54: #{generator_forward.11} parent=31 // pred_check_branch
          %345 = sbr.rel (%p343) target = $region56
        $region55: #{generator_forward.11} parent=31 // pred_region
          %s346 = smul.u32 %s21, %s20
          %s347 = smul.u32 4, %s346
        $region56: #{generator_forward.11} parent=31 // pred_fallthru
          _
      $region32: #{generator_forward.11} parent=5 // pred_fallthru
        _
      %p348 = scmp.le.s32.totalorder 2, %s11
      // Predicated region
      $region57: #{generator_forward.11} parent=5 // pred_check
        %p349 = pneg %p348
      $region58: #{generator_forward.11} parent=5 // pred_check_branch
        %351 = sbr.rel (%p349) target = $region60
      $region59: #{generator_forward.11} parent=5 // pred_region
        %s352 = ssub.s32 %s11, 2
        // Predicated region
        $region61: #{generator_forward.11} parent=59 // pred_check
          %p353 = pneg %p122
        $region62: #{generator_forward.11} parent=59 // pred_check_branch
          %355 = sbr.rel (%p353) target = $region64
        $region63: #{generator_forward.11} parent=59 // pred_region
          %s356 = smul.u32 %s23, %s22
          %s357 = smul.u32 4, %s356
          %p358 = scmp.lt.s32.totalorder %s357, 3
          %s359 = scalar_select %p358, %s357, 3
          %s360 = smul.addr %s359, 4
          %s361 = scalar_lea.vmem %s3, %s360
        $region64: #{generator_forward.11} parent=59 // pred_fallthru
          _
      $region60: #{generator_forward.11} parent=5 // pred_fallthru
        _
    $region6: #{generator_forward.11} parent=1 // loop_footer
      %s15 = sadd.s32 1, %s11
    $region7: #{generator_forward.11} parent=1 // loop_footer_branch
      %10 = sbr.rel target = $region3
    $region8: #{generator_forward.11} parent=1 // loop_exit
      _
    %362 = vsyncpa [#allocation5], 1
    %s363 = scalar_lea.sflag [#allocation5], 1
    %364 = vsyncpa %s363, 1
    %365 = vsyncpa [#allocation7], 1

// kernel: generator_forward.10
$region0: #{generator_forward.10}
  #allocation0 [shape = 'u32[]', space=smem, size = 0x4, offset = 0x4, fixed_abs, tag = 'smem constant byte address 0x4 - core index']
  #allocation1 [shape = 'u32[144,128]{1,0:T(1,128)}', space=vmem, size = 0x12000, scoped, tag = 'internal scratch']
  %s0 = inlined_call_operand.vmem [shape: bf16[8,16], index: 0, kind: input, shape index: {}]
  %s1 = inlined_call_operand.vmem [shape: bf16[16,1024], index: 1, kind: input, shape index: {}]
  %s2 = inlined_call_operand.vmem [shape: f32[8,1024], index: 2, kind: output, shape index: {}]
  %s3 = sld [smem:[#allocation0]]
  $region18: #{generator_forward.10} parent=0
    _
  %s5 = ssub.s32 1, %s3
  %s6 = scalar_select 0, %s5, %s3
  // Predicated region
  $region2: #{generator_forward.10} parent=0 // pred_check
    _
  $region3: #{generator_forward.10} parent=0 // pred_check_branch
    %8 = sbr.rel (0) target = $region5
  $region4: #{generator_forward.10} parent=0 // pred_region
    _
  $region5: #{generator_forward.10} parent=0 // pred_fallthru
    _
  // Predicated region
  $region6: #{generator_forward.10} parent=0 // pred_check
    _
  $region7: #{generator_forward.10} parent=0 // pred_check_branch
    %10 = sbr.rel (0) target = $region9
  $region8: #{generator_forward.10} parent=0 // pred_region
    _
  $region9: #{generator_forward.10} parent=0 // pred_fallthru
    _
  %v12 = vld [vmem:[%s0] sm:$0xf]
  %v13 = vld [vmem:[%s1] sm:$0xff]
  %v14 = vld [vmem:[%s1 + $0x8] sm:$0xff]
  %v15 = vld [vmem:[%s1 + $0x10] sm:$0xff]
  %v16 = vld [vmem:[%s1 + $0x18] sm:$0xff]
  %v17 = vld [vmem:[%s1 + $0x20] sm:$0xff]
  %v18 = vld [vmem:[%s1 + $0x28] sm:$0xff]
  %v19 = vld [vmem:[%s1 + $0x30] sm:$0xff]
  %v20 = vld [vmem:[%s1 + $0x38] sm:$0xff]
  %v29 = vunpack.c.l.b16 %v13
  %v30 = vunpack.c.h.b16 %v13
  %v31 = vunpack.c.l.b16 %v14
  %v32 = vunpack.c.h.b16 %v14
  %v33 = vunpack.c.l.b16 %v15
  %v34 = vunpack.c.h.b16 %v15
  %v35 = vunpack.c.l.b16 %v16
  %v36 = vunpack.c.h.b16 %v16
  %v37 = vunpack.c.l.b16 %v17
  %v38 = vunpack.c.h.b16 %v17
  %v39 = vunpack.c.l.b16 %v18
  %v40 = vunpack.c.h.b16 %v18
  %v41 = vunpack.c.l.b16 %v19
  %v42 = vunpack.c.h.b16 %v19
  %v43 = vunpack.c.l.b16 %v20
  %v44 = vunpack.c.h.b16 %v20
  %v45 = vpack.c.b16 %v37, %v29
  %v46 = vpack.c.b16 %v38, %v30
  %v47 = vpack.c.b16 %v39, %v31
  %v48 = vpack.c.b16 %v40, %v32
  %v49 = vpack.c.b16 %v41, %v33
  %v50 = vpack.c.b16 %v42, %v34
  %v51 = vpack.c.b16 %v43, %v35
  %v52 = vpack.c.b16 %v44, %v36
  %vm61 = vcmask 130048
  %v63 = vsel %vm61, %v12, 0
  %65 = vmatprep.subr.bf16.mxu0 %v46
  %66 = vmatpush1.bf16.msra.mxu0 %v45
  %67 = vmatprep.subr.bf16.mxu0 0
  %68 = vmatpush1.bf16.msra.mxu0 0
  %69 = vmatprep.subr.bf16.mxu0 0
  %70 = vmatpush1.bf16.msra.mxu0 0
  %71 = vmatprep.subr.bf16.mxu0 0
  %72 = vmatpush1.bf16.msra.mxu0 0
  %73 = vmatprep.subr.bf16.mxu0 0
  %74 = vmatpush1.bf16.msra.mxu0 0
  %75 = vmatprep.subr.bf16.mxu0 0
  %76 = vmatpush1.bf16.msra.mxu0 0
  %77 = vmatprep.subr.bf16.mxu0 0
  %78 = vmatpush1.bf16.msra.mxu0 0
  %79 = vmatprep.subr.bf16.mxu0 0
  %80 = vmatpush1.bf16.msra.mxu0 0
  %81 = vmatprep.subr.bf16.mxu0 0
  %82 = vmatpush1.bf16.msra.mxu0 0
  %83 = vmatprep.subr.bf16.mxu0 0
  %84 = vmatpush1.bf16.msra.mxu0 0
  %85 = vmatprep.subr.bf16.mxu0 0
  %86 = vmatpush1.bf16.msra.mxu0 0
  %87 = vmatprep.subr.bf16.mxu0 0
  %88 = vmatpush1.bf16.msra.mxu0 0
  %89 = vmatprep.subr.bf16.mxu0 0
  %90 = vmatpush1.bf16.msra.mxu0 0
  %91 = vmatprep.subr.bf16.mxu0 0
  %92 = vmatpush1.bf16.msra.mxu0 0
  %93 = vmatprep.subr.bf16.mxu0 0
  %94 = vmatpush1.bf16.msra.mxu0 0
  %95 = vmatprep.subr.bf16.mxu0 0
  %96 = vmatpush1.bf16.msra.mxu0 0
  %97 = vmatprep.mubr.bf16.mxu0 0
  %98 = vmatmul.mubr.bf16.gmra.mrb[0].mxu0 %v63
  %v99 = vpop.f32.mrb[0].mxu0
  %v100 = vadd.f32 0.0, %v99
  %v101 = vpop.f32.mrb[0].mxu0
  %v102 = vadd.f32 0.0, %v101
  %v103 = vpop.f32.mrb[0].mxu0
  %v104 = vpop.f32.mrb[0].mxu0
  %105 = vdwg.mxu0
  %106 = vmatprep.subr.bf16.mxu0 %v48
  %107 = vmatpush1.bf16.msra.mxu0 %v47
  %108 = vmatprep.subr.bf16.mxu0 0
  %109 = vmatpush1.bf16.msra.mxu0 0
  %110 = vmatprep.subr.bf16.mxu0 0
  %111 = vmatpush1.bf16.msra.mxu0 0
  %112 = vmatprep.subr.bf16.mxu0 0
  %113 = vmatpush1.bf16.msra.mxu0 0
  %114 = vmatprep.subr.bf16.mxu0 0
  %115 = vmatpush1.bf16.msra.mxu0 0
  %116 = vmatprep.subr.bf16.mxu0 0
  %117 = vmatpush1.bf16.msra.mxu0 0
  %118 = vmatprep.subr.bf16.mxu0 0
  %119 = vmatpush1.bf16.msra.mxu0 0
  %120 = vmatprep.subr.bf16.mxu0 0
  %121 = vmatpush1.bf16.msra.mxu0 0
  %122 = vmatprep.subr.bf16.mxu0 0
  %123 = vmatpush1.bf16.msra.mxu0 0
  %124 = vmatprep.subr.bf16.mxu0 0
  %125 = vmatpush1.bf16.msra.mxu0 0
  %126 = vmatprep.subr.bf16.mxu0 0
  %127 = vmatpush1.bf16.msra.mxu0 0
  %128 = vmatprep.subr.bf16.mxu0 0
  %129 = vmatpush1.bf16.msra.mxu0 0
  %130 = vmatprep.subr.bf16.mxu0 0
  %131 = vmatpush1.bf16.msra.mxu0 0
  %132 = vmatprep.subr.bf16.mxu0 0
  %133 = vmatpush1.bf16.msra.mxu0 0
  %134 = vmatprep.subr.bf16.mxu0 0
  %135 = vmatpush1.bf16.msra.mxu0 0
  %136 = vmatprep.subr.bf16.mxu0 0
  %137 = vmatpush1.bf16.msra.mxu0 0
  %138 = vmatprep.mubr.bf16.mxu0 0
  %139 = vmatmul.mubr.bf16.gmra.mrb[0].mxu0 %v63
  %v140 = vpop.f32.mrb[0].mxu0
  %v141 = vadd.f32 0.0, %v140
  %v142 = vpop.f32.mrb[0].mxu0
  %v143 = vadd.f32 0.0, %v142
  %v144 = vpop.f32.mrb[0].mxu0
  %v145 = vpop.f32.mrb[0].mxu0
  %146 = vdwg.mxu0
  %147 = vmatprep.subr.bf16.mxu0 %v50
  %148 = vmatpush1.bf16.msra.mxu0 %v49
  %149 = vmatprep.subr.bf16.mxu0 0
  %150 = vmatpush1.bf16.msra.mxu0 0
  %151 = vmatprep.subr.bf16.mxu0 0
  %152 = vmatpush1.bf16.msra.mxu0 0
  %153 = vmatprep.subr.bf16.mxu0 0
  %154 = vmatpush1.bf16.msra.mxu0 0
  %155 = vmatprep.subr.bf16.mxu0 0
  %156 = vmatpush1.bf16.msra.mxu0 0
  %157 = vmatprep.subr.bf16.mxu0 0
  %158 = vmatpush1.bf16.msra.mxu0 0
  %159 = vmatprep.subr.bf16.mxu0 0
  %160 = vmatpush1.bf16.msra.mxu0 0
  %161 = vmatprep.subr.bf16.mxu0 0
  %162 = vmatpush1.bf16.msra.mxu0 0
  %163 = vmatprep.subr.bf16.mxu0 0
  %164 = vmatpush1.bf16.msra.mxu0 0
  %165 = vmatprep.subr.bf16.mxu0 0
  %166 = vmatpush1.bf16.msra.mxu0 0
  %167 = vmatprep.subr.bf16.mxu0 0
  %168 = vmatpush1.bf16.msra.mxu0 0
  %169 = vmatprep.subr.bf16.mxu0 0
  %170 = vmatpush1.bf16.msra.mxu0 0
  %171 = vmatprep.subr.bf16.mxu0 0
  %172 = vmatpush1.bf16.msra.mxu0 0
  %173 = vmatprep.subr.bf16.mxu0 0
  %174 = vmatpush1.bf16.msra.mxu0 0
  %175 = vmatprep.subr.bf16.mxu0 0
  %176 = vmatpush1.bf16.msra.mxu0 0
  %177 = vmatprep.subr.bf16.mxu0 0
  %178 = vmatpush1.bf16.msra.mxu0 0
  %179 = vmatprep.mubr.bf16.mxu0 0
  %180 = vmatmul.mubr.bf16.gmra.mrb[0].mxu0 %v63
  %v181 = vpop.f32.mrb[0].mxu0
  %v182 = vadd.f32 0.0, %v181
  %v183 = vpop.f32.mrb[0].mxu0
  %v184 = vadd.f32 0.0, %v183
  %v185 = vpop.f32.mrb[0].mxu0
  %v186 = vpop.f32.mrb[0].mxu0
  %187 = vdwg.mxu0
  %188 = vmatprep.subr.bf16.mxu0 %v52
  %189 = vmatpush1.bf16.msra.mxu0 %v51
  %190 = vmatprep.subr.bf16.mxu0 0
  %191 = vmatpush1.bf16.msra.mxu0 0
  %192 = vmatprep.subr.bf16.mxu0 0
  %193 = vmatpush1.bf16.msra.mxu0 0
  %194 = vmatprep.subr.bf16.mxu0 0
  %195 = vmatpush1.bf16.msra.mxu0 0
  %196 = vmatprep.subr.bf16.mxu0 0
  %197 = vmatpush1.bf16.msra.mxu0 0
  %198 = vmatprep.subr.bf16.mxu0 0
  %199 = vmatpush1.bf16.msra.mxu0 0
  %200 = vmatprep.subr.bf16.mxu0 0
  %201 = vmatpush1.bf16.msra.mxu0 0
  %202 = vmatprep.subr.bf16.mxu0 0
  %203 = vmatpush1.bf16.msra.mxu0 0
  %204 = vmatprep.subr.bf16.mxu0 0
  %205 = vmatpush1.bf16.msra.mxu0 0
  %206 = vmatprep.subr.bf16.mxu0 0
  %207 = vmatpush1.bf16.msra.mxu0 0
  %208 = vmatprep.subr.bf16.mxu0 0
  %209 = vmatpush1.bf16.msra.mxu0 0
  %210 = vmatprep.subr.bf16.mxu0 0
  %211 = vmatpush1.bf16.msra.mxu0 0
  %212 = vmatprep.subr.bf16.mxu0 0
  %213 = vmatpush1.bf16.msra.mxu0 0
  %214 = vmatprep.subr.bf16.mxu0 0
  %215 = vmatpush1.bf16.msra.mxu0 0
  %216 = vmatprep.subr.bf16.mxu0 0
  %217 = vmatpush1.bf16.msra.mxu0 0
  %218 = vmatprep.subr.bf16.mxu0 0
  %219 = vmatpush1.bf16.msra.mxu0 0
  %220 = vmatprep.mubr.bf16.mxu0 0
  %221 = vmatmul.mubr.bf16.gmra.mrb[0].mxu0 %v63
  %v222 = vpop.f32.mrb[0].mxu0
  %v223 = vadd.f32 0.0, %v222
  %v224 = vpop.f32.mrb[0].mxu0
  %v225 = vadd.f32 0.0, %v224
  %v226 = vpop.f32.mrb[0].mxu0
  %v227 = vpop.f32.mrb[0].mxu0
  %228 = vdwg.mxu0
  %229 = vst [vmem:[%s2] sm:$0xff] %v100
  %230 = vst [vmem:[%s2 + $0x8] sm:$0xff] %v102
  %231 = vst [vmem:[%s2 + $0x10] sm:$0xff] %v141
  %232 = vst [vmem:[%s2 + $0x18] sm:$0xff] %v143
  %233 = vst [vmem:[%s2 + $0x20] sm:$0xff] %v182
  %234 = vst [vmem:[%s2 + $0x28] sm:$0xff] %v184
  %235 = vst [vmem:[%s2 + $0x30] sm:$0xff] %v223
  %236 = vst [vmem:[%s2 + $0x38] sm:$0xff] %v225
  // Predicated region
  $region10: #{generator_forward.10} parent=0 // pred_check
    _
  $region11: #{generator_forward.10} parent=0 // pred_check_branch
    %238 = sbr.rel (0) target = $region13
  $region12: #{generator_forward.10} parent=0 // pred_region
    _
  $region13: #{generator_forward.10} parent=0 // pred_fallthru
    _
  // Predicated region
  $region14: #{generator_forward.10} parent=0 // pred_check
    _
  $region15: #{generator_forward.10} parent=0 // pred_check_branch
    %240 = sbr.rel (0) target = $region17
  $region16: #{generator_forward.10} parent=0 // pred_region
    _
  $region17: #{generator_forward.10} parent=0 // pred_fallthru
    _

// kernel: generator_forward.12
$region0: #{generator_forward.12}
  #allocation0 [shape = 'u32[]', space=smem, size = 0x4, offset = 0x4, fixed_abs, tag = 'smem constant byte address 0x4 - core index']
  #allocation1 [shape = 'u32[144,128]{1,0:T(1,128)}', space=vmem, size = 0x12000, scoped, tag = 'internal scratch']
  %s0 = inlined_call_operand.vmem [shape: bf16[32,64], index: 0, kind: input, shape index: {}]
  %s1 = inlined_call_operand.vmem [shape: bf16[64,512], index: 1, kind: input, shape index: {}]
  %s2 = inlined_call_operand.vmem [shape: f32[32,512], index: 2, kind: output, shape index: {}]
  %s3 = sld [smem:[#allocation0]]
  $region18: #{generator_forward.12} parent=0
    _
  %s5 = ssub.s32 1, %s3
  %s6 = scalar_select 0, %s5, %s3
  // Predicated region
  $region2: #{generator_forward.12} parent=0 // pred_check
    _
  $region3: #{generator_forward.12} parent=0 // pred_check_branch
    %8 = sbr.rel (0) target = $region5
  $region4: #{generator_forward.12} parent=0 // pred_region
    _
  $region5: #{generator_forward.12} parent=0 // pred_fallthru
    _
  // Predicated region
  $region6: #{generator_forward.12} parent=0 // pred_check
    _
  $region7: #{generator_forward.12} parent=0 // pred_check_branch
    %10 = sbr.rel (0) target = $region9
  $region8: #{generator_forward.12} parent=0 // pred_region
    _
  $region9: #{generator_forward.12} parent=0 // pred_fallthru
    _
  %v12 = vld [vmem:[%s0] sm:$0xf]
  %v13 = vld [vmem:[%s0 + $0x4] sm:$0xf]
  %v14 = vld [vmem:[%s0 + $0x8] sm:$0xf]
  %v15 = vld [vmem:[%s0 + $0xc] sm:$0xf]
  %v16 = vld [vmem:[%s1] sm:$0xff]
  %v17 = vld [vmem:[%s1 + $0x8] sm:$0xff]
  %v18 = vld [vmem:[%s1 + $0x10] sm:$0xff]
  %v19 = vld [vmem:[%s1 + $0x18] sm:$0xff]
  %v20 = vld [vmem:[%s1 + $0x20] sm:$0xff]
  %v21 = vld [vmem:[%s1 + $0x28] sm:$0xff]
  %v22 = vld [vmem:[%s1 + $0x30] sm:$0xff]
  %v23 = vld [vmem:[%s1 + $0x38] sm:$0xff]
  %v24 = vld [vmem:[%s1 + $0x40] sm:$0xff]
  %v25 = vld [vmem:[%s1 + $0x48] sm:$0xff]
  %v26 = vld [vmem:[%s1 + $0x50] sm:$0xff]
  %v27 = vld [vmem:[%s1 + $0x58] sm:$0xff]
  %v28 = vld [vmem:[%s1 + $0x60] sm:$0xff]
  %v29 = vld [vmem:[%s1 + $0x68] sm:$0xff]
  %v30 = vld [vmem:[%s1 + $0x70] sm:$0xff]
  %v31 = vld [vmem:[%s1 + $0x78] sm:$0xff]
  %v36 = vunpack.c.l.b16 %v12
  %v37 = vunpack.c.l.b16 %v13
  %v38 = vunpack.c.l.b16 %v14
  %v39 = vunpack.c.l.b16 %v15
  %v40 = vpack.c.b16 %v37, %v36
  %v41 = vpack.c.b16 %v39, %v38
  %v58 = vunpack.c.l.b16 %v16
  %v59 = vunpack.c.h.b16 %v16
  %v60 = vunpack.c.l.b16 %v17
  %v61 = vunpack.c.h.b16 %v17
  %v62 = vunpack.c.l.b16 %v18
  %v63 = vunpack.c.h.b16 %v18
  %v64 = vunpack.c.l.b16 %v19
  %v65 = vunpack.c.h.b16 %v19
  %v66 = vunpack.c.l.b16 %v20
  %v67 = vunpack.c.h.b16 %v20
  %v68 = vunpack.c.l.b16 %v21
  %v69 = vunpack.c.h.b16 %v21
  %v70 = vunpack.c.l.b16 %v22
  %v71 = vunpack.c.h.b16 %v22
  %v72 = vunpack.c.l.b16 %v23
  %v73 = vunpack.c.h.b16 %v23
  %v74 = vunpack.c.l.b16 %v24
  %v75 = vunpack.c.h.b16 %v24
  %v76 = vunpack.c.l.b16 %v25
  %v77 = vunpack.c.h.b16 %v25
  %v78 = vunpack.c.l.b16 %v26
  %v79 = vunpack.c.h.b16 %v26
  %v80 = vunpack.c.l.b16 %v27
  %v81 = vunpack.c.h.b16 %v27
  %v82 = vunpack.c.l.b16 %v28
  %v83 = vunpack.c.h.b16 %v28
  %v84 = vunpack.c.l.b16 %v29
  %v85 = vunpack.c.h.b16 %v29
  %v86 = vunpack.c.l.b16 %v30
  %v87 = vunpack.c.h.b16 %v30
  %v88 = vunpack.c.l.b16 %v31
  %v89 = vunpack.c.h.b16 %v31
  %v90 = vpack.c.b16 %v62, %v58
  %v91 = vpack.c.b16 %v63, %v59
  %v92 = vpack.c.b16 %v64, %v60
  %v93 = vpack.c.b16 %v65, %v61
  %v94 = vpack.c.b16 %v70, %v66
  %v95 = vpack.c.b16 %v71, %v67
  %v96 = vpack.c.b16 %v72, %v68
  %v97 = vpack.c.b16 %v73, %v69
  %v98 = vpack.c.b16 %v78, %v74
  %v99 = vpack.c.b16 %v79, %v75
  %v100 = vpack.c.b16 %v80, %v76
  %v101 = vpack.c.b16 %v81, %v77
  %v102 = vpack.c.b16 %v86, %v82
  %v103 = vpack.c.b16 %v87, %v83
  %v104 = vpack.c.b16 %v88, %v84
  %v105 = vpack.c.b16 %v89, %v85
  %vm122 = vcmask 523264
  %v124 = vsel %vm122, %v40, 0
  %v127 = vsel %vm122, %v41, 0
  %129 = vmatprep.subr.bf16.mxu0 %v91
  %130 = vmatpush1.bf16.msra.mxu0 %v90
  %131 = vmatprep.subr.bf16.mxu0 %v95
  %132 = vmatpush1.bf16.msra.mxu0 %v94
  %133 = vmatprep.subr.bf16.mxu0 %v99
  %134 = vmatpush1.bf16.msra.mxu0 %v98
  %135 = vmatprep.subr.bf16.mxu0 %v103
  %136 = vmatpush1.bf16.msra.mxu0 %v102
  %137 = vmatprep.subr.bf16.mxu0 0
  %138 = vmatpush1.bf16.msra.mxu0 0
  %139 = vmatprep.subr.bf16.mxu0 0
  %140 = vmatpush1.bf16.msra.mxu0 0
  %141 = vmatprep.subr.bf16.mxu0 0
  %142 = vmatpush1.bf16.msra.mxu0 0
  %143 = vmatprep.subr.bf16.mxu0 0
  %144 = vmatpush1.bf16.msra.mxu0 0
  %145 = vmatprep.subr.bf16.mxu0 0
  %146 = vmatpush1.bf16.msra.mxu0 0
  %147 = vmatprep.subr.bf16.mxu0 0
  %148 = vmatpush1.bf16.msra.mxu0 0
  %149 = vmatprep.subr.bf16.mxu0 0
  %150 = vmatpush1.bf16.msra.mxu0 0
  %151 = vmatprep.subr.bf16.mxu0 0
  %152 = vmatpush1.bf16.msra.mxu0 0
  %153 = vmatprep.subr.bf16.mxu0 0
  %154 = vmatpush1.bf16.msra.mxu0 0
  %155 = vmatprep.subr.bf16.mxu0 0
  %156 = vmatpush1.bf16.msra.mxu0 0
  %157 = vmatprep.subr.bf16.mxu0 0
  %158 = vmatpush1.bf16.msra.mxu0 0
  %159 = vmatprep.subr.bf16.mxu0 0
  %160 = vmatpush1.bf16.msra.mxu0 0
  %161 = vmatprep.mubr.bf16.mxu0 0
  %162 = vmatmul.mubr.bf16.gmra.mrb[0].mxu0 %v124
  %v163 = vpop.f32.mrb[0].mxu0
  %v164 = vadd.f32 0.0, %v163
  %v165 = vpop.f32.mrb[0].mxu0
  %v166 = vadd.f32 0.0, %v165
  %v167 = vpop.f32.mrb[0].mxu0
  %v168 = vadd.f32 0.0, %v167
  %v169 = vpop.f32.mrb[0].mxu0
  %v170 = vadd.f32 0.0, %v169
  %171 = vmatprep.mubr.bf16.mxu0 0
  %172 = vmatmul.mubr.bf16.gmra.mrb[0].mxu0 %v127
  %v173 = vpop.f32.mrb[0].mxu0
  %v174 = vadd.f32 0.0, %v173
  %v175 = vpop.f32.mrb[0].mxu0
  %v176 = vadd.f32 0.0, %v175
  %v177 = vpop.f32.mrb[0].mxu0
  %v178 = vadd.f32 0.0, %v177
  %v179 = vpop.f32.mrb[0].mxu0
  %v180 = vadd.f32 0.0, %v179
  %181 = vdwg.mxu0
  %182 = vmatprep.subr.bf16.mxu0 %v93
  %183 = vmatpush1.bf16.msra.mxu0 %v92
  %184 = vmatprep.subr.bf16.mxu0 %v97
  %185 = vmatpush1.bf16.msra.mxu0 %v96
  %186 = vmatprep.subr.bf16.mxu0 %v101
  %187 = vmatpush1.bf16.msra.mxu0 %v100
  %188 = vmatprep.subr.bf16.mxu0 %v105
  %189 = vmatpush1.bf16.msra.mxu0 %v104
  %190 = vmatprep.subr.bf16.mxu0 0
  %191 = vmatpush1.bf16.msra.mxu0 0
  %192 = vmatprep.subr.bf16.mxu0 0
  %193 = vmatpush1.bf16.msra.mxu0 0
  %194 = vmatprep.subr.bf16.mxu0 0
  %195 = vmatpush1.bf16.msra.mxu0 0
  %196 = vmatprep.subr.bf16.mxu0 0
  %197 = vmatpush1.bf16.msra.mxu0 0
  %198 = vmatprep.subr.bf16.mxu0 0
  %199 = vmatpush1.bf16.msra.mxu0 0
  %200 = vmatprep.subr.bf16.mxu0 0
  %201 = vmatpush1.bf16.msra.mxu0 0
  %202 = vmatprep.subr.bf16.mxu0 0
  %203 = vmatpush1.bf16.msra.mxu0 0
  %204 = vmatprep.subr.bf16.mxu0 0
  %205 = vmatpush1.bf16.msra.mxu0 0
  %206 = vmatprep.subr.bf16.mxu0 0
  %207 = vmatpush1.bf16.msra.mxu0 0
  %208 = vmatprep.subr.bf16.mxu0 0
  %209 = vmatpush1.bf16.msra.mxu0 0
  %210 = vmatprep.subr.bf16.mxu0 0
  %211 = vmatpush1.bf16.msra.mxu0 0
  %212 = vmatprep.subr.bf16.mxu0 0
  %213 = vmatpush1.bf16.msra.mxu0 0
  %214 = vmatprep.mubr.bf16.mxu0 0
  %215 = vmatmul.mubr.bf16.gmra.mrb[0].mxu0 %v124
  %v216 = vpop.f32.mrb[0].mxu0
  %v217 = vadd.f32 0.0, %v216
  %v218 = vpop.f32.mrb[0].mxu0
  %v219 = vadd.f32 0.0, %v218
  %v220 = vpop.f32.mrb[0].mxu0
  %v221 = vadd.f32 0.0, %v220
  %v222 = vpop.f32.mrb[0].mxu0
  %v223 = vadd.f32 0.0, %v222
  %224 = vmatprep.mubr.bf16.mxu0 0
  %225 = vmatmul.mubr.bf16.gmra.mrb[0].mxu0 %v127
  %v226 = vpop.f32.mrb[0].mxu0
  %v227 = vadd.f32 0.0, %v226
  %v228 = vpop.f32.mrb[0].mxu0
  %v229 = vadd.f32 0.0, %v228
  %v230 = vpop.f32.mrb[0].mxu0
  %v231 = vadd.f32 0.0, %v230
  %v232 = vpop.f32.mrb[0].mxu0
  %v233 = vadd.f32 0.0, %v232
  %234 = vdwg.mxu0
  %235 = vst [vmem:[%s2] sm:$0xff] %v164
  %236 = vst [vmem:[%s2 + $0x8] sm:$0xff] %v166
  %237 = vst [vmem:[%s2 + $0x10] sm:$0xff] %v217
  %238 = vst [vmem:[%s2 + $0x18] sm:$0xff] %v219
  %239 = vst [vmem:[%s2 + $0x20] sm:$0xff] %v168
  %240 = vst [vmem:[%s2 + $0x28] sm:$0xff] %v170
  %241 = vst [vmem:[%s2 + $0x30] sm:$0xff] %v221
  %242 = vst [vmem:[%s2 + $0x38] sm:$0xff] %v223
  %243 = vst [vmem:[%s2 + $0x40] sm:$0xff] %v174
  %244 = vst [vmem:[%s2 + $0x48] sm:$0xff] %v176
  %245 = vst [vmem:[%s2 + $0x50] sm:$0xff] %v227
  %246 = vst [vmem:[%s2 + $0x58] sm:$0xff] %v229
  %247 = vst [vmem:[%s2 + $0x60] sm:$0xff] %v178
  %248 = vst [vmem:[%s2 + $0x68] sm:$0xff] %v180
  %249 = vst [vmem:[%s2 + $0x70] sm:$0xff] %v231
  %250 = vst [vmem:[%s2 + $0x78] sm:$0xff] %v233
  // Predicated region
  $region10: #{generator_forward.12} parent=0 // pred_check
    _
  $region11: #{generator_forward.12} parent=0 // pred_check_branch
    %252 = sbr.rel (0) target = $region13
  $region12: #{generator_forward.12} parent=0 // pred_region
    _
  $region13: #{generator_forward.12} parent=0 // pred_fallthru
    _
  // Predicated region
  $region14: #{generator_forward.12} parent=0 // pred_check
    _
  $region15: #{generator_forward.12} parent=0 // pred_check_branch
    %254 = sbr.rel (0) target = $region17
  $region16: #{generator_forward.12} parent=0 // pred_region
    _
  $region17: #{generator_forward.12} parent=0 // pred_fallthru
    _

// kernel: generator_forward.13
$region0: #{generator_forward.13}
  #allocation0 [shape = 'u32[]', space=smem, size = 0x4, offset = 0x4, fixed_abs, tag = 'smem constant byte address 0x4 - core index']
  #allocation1 [shape = 'u32[144,128]{1,0:T(1,128)}', space=vmem, size = 0x12000, scoped, tag = 'internal scratch']
  #allocation2 [shape = 'f32[1,32]{1,0:T(1,128)}', space=vmem, size = 0x200, scoped, tag = 'scratch operand']
  #allocation3 [shape = 'f32[1,32]{1,0:T(1,128)}', space=vmem, size = 0x200, scoped, tag = 'scratch operand']
  %s0 = inlined_call_operand.vmem [shape: f32[128,32], index: 0, kind: input, shape index: {}]
  %s1 = inlined_call_operand.vmem [shape: f32[1,32], index: 1, kind: input, shape index: {}]
  %s2 = inlined_call_operand.vmem [shape: f32[1,32], index: 2, kind: input, shape index: {}]
  %s3 = inlined_call_operand.vmem [shape: bf16[128,32], index: 3, kind: output, shape index: {}]
  %s4 = sld [smem:[#allocation0]]
  $region57: #{generator_forward.13} parent=0
    _
  %s6 = ssub.s32 1, %s4
  %s7 = scalar_select 0, %s6, %s4
  loop: start=0, step=1, limit=4
  $region2: #{generator_forward.13} parent=0 // loop_pre_header
    _
  $region3: #{generator_forward.13} parent=0 // loop_header
    %s9 = sphi 0, %s13
    %p10 = scmp.ge.s32.totalorder %s9, 4
    %s16 = sphi 0, %s28
    %s17 = sphi 0, %s24
    %s18 = sphi 0, %s16
    %s19 = sphi 0, %s17
    %s20 = sphi 0, %s18
    %s21 = sphi 0, %s19
    %s31 = sphi 0, %s33
    %s34 = sphi 0, %s31
    %s35 = sphi 0, %s34
    %s51 = sphi 0, %s35
    %s55 = sphi 0, %s55
    %s57 = sphi 0, %s55
    %s58 = sphi 0, %s57
    %s72 = sphi 0, %s58
    %s76 = sphi 0, %s76
    %s78 = sphi 0, %s76
    %s79 = sphi 0, %s78
    %s93 = sphi 0, %s79
    %s101 = sphi 0, %s103
    %s104 = sphi 0, %s101
    %s105 = sphi 0, %s104
    %s121 = sphi 0, %s105
  $region4: #{generator_forward.13} parent=0 // loop_header_branch
    %12 = sbr.rel (%p10) target = $region8
  $region5: #{generator_forward.13} parent=0 // loop_body
    %s14 = ssub.s32 %s9, 1
    %s15 = ssub.s32 %s9, 2
    %s22 = sadd.s32 1, %s17
    %p23 = scmp.ge.s32.totalorder %s22, 1
    %s24 = scalar_select %p23, 0, %s22
    %s25 = sadd.s32 1, %s16
    %s26 = scalar_select %p23, %s25, %s16
    %p27 = scmp.ge.s32.totalorder %s26, 2
    %s28 = scalar_select %p27, 0, %s26
    %s29 = ssub.s32 %s17, %s24
    %p30 = scmp.eq.s32.totalorder %s29, 0
    %s32 = sadd.s32 %s31, 1
    %s33 = scalar_select %p30, %s31, %s32
    %p36 = pneg %p30
    %p37 = scmp.eq.s32.totalorder %s9, 1
    %p38 = por %p36, %p37
    %p39 = scmp.ne.s32.totalorder %s31, %s34
    %p40 = scmp.eq.s32.totalorder %s9, 0
    %p41 = por %p39, %p40
    %p42 = scmp.ne.s32.totalorder %s31, %s34
    %p43 = scmp.eq.s32.totalorder %s14, 1
    %p44 = por %p42, %p43
    %p45 = scmp.ne.s32.totalorder %s34, %s35
    %p46 = scmp.eq.s32.totalorder %s14, 0
    %p47 = por %p45, %p46
    %p48 = scmp.ne.s32.totalorder %s34, %s35
    %p49 = scmp.eq.s32.totalorder %s15, 1
    %p50 = por %p48, %p49
    %p52 = scmp.ne.s32.totalorder %s35, %s51
    %p53 = scmp.eq.s32.totalorder %s15, 0
    %p54 = por %p52, %p53
    %s56 = sadd.s32 %s55, 1
    %p59 = scmp.eq.s32.totalorder %s9, 1
    %p60 = scmp.ne.s32.totalorder %s55, %s57
    %p61 = scmp.eq.s32.totalorder %s9, 0
    %p62 = por %p60, %p61
    %p63 = scmp.ne.s32.totalorder %s55, %s57
    %p64 = scmp.eq.s32.totalorder %s14, 1
    %p65 = por %p63, %p64
    %p66 = scmp.ne.s32.totalorder %s57, %s58
    %p67 = scmp.eq.s32.totalorder %s14, 0
    %p68 = por %p66, %p67
    %p69 = scmp.ne.s32.totalorder %s57, %s58
    %p70 = scmp.eq.s32.totalorder %s15, 1
    %p71 = por %p69, %p70
    %p73 = scmp.ne.s32.totalorder %s58, %s72
    %p74 = scmp.eq.s32.totalorder %s15, 0
    %p75 = por %p73, %p74
    %s77 = sadd.s32 %s76, 1
    %p80 = scmp.eq.s32.totalorder %s9, 1
    %p81 = scmp.ne.s32.totalorder %s76, %s78
    %p82 = scmp.eq.s32.totalorder %s9, 0
    %p83 = por %p81, %p82
    %p84 = scmp.ne.s32.totalorder %s76, %s78
    %p85 = scmp.eq.s32.totalorder %s14, 1
    %p86 = por %p84, %p85
    %p87 = scmp.ne.s32.totalorder %s78, %s79
    %p88 = scmp.eq.s32.totalorder %s14, 0
    %p89 = por %p87, %p88
    %p90 = scmp.ne.s32.totalorder %s78, %s79
    %p91 = scmp.eq.s32.totalorder %s15, 1
    %p92 = por %p90, %p91
    %p94 = scmp.ne.s32.totalorder %s79, %s93
    %p95 = scmp.eq.s32.totalorder %s15, 0
    %p96 = por %p94, %p95
    %s97 = smul.u32 %s17, %s16
    %s98 = smul.u32 %s24, %s28
    %s99 = ssub.s32 %s97, %s98
    %p100 = scmp.eq.s32.totalorder %s99, 0
    %s102 = sadd.s32 %s101, 1
    %s103 = scalar_select %p100, %s101, %s102
    %p106 = pneg %p100
    %p107 = scmp.eq.s32.totalorder %s9, 1
    %p108 = por %p106, %p107
    %p109 = scmp.ne.s32.totalorder %s101, %s104
    %p110 = scmp.eq.s32.totalorder %s9, 0
    %p111 = por %p109, %p110
    %p112 = scmp.ne.s32.totalorder %s101, %s104
    %p113 = scmp.eq.s32.totalorder %s14, 1
    %p114 = por %p112, %p113
    %p115 = scmp.ne.s32.totalorder %s104, %s105
    %p116 = scmp.eq.s32.totalorder %s14, 0
    %p117 = por %p115, %p116
    %p118 = scmp.ne.s32.totalorder %s104, %s105
    %p119 = scmp.eq.s32.totalorder %s15, 1
    %p120 = por %p118, %p119
    %p122 = scmp.ne.s32.totalorder %s105, %s121
    %p123 = scmp.eq.s32.totalorder %s15, 0
    %p124 = por %p122, %p123
    %p125 = scmp.le.s32.totalorder 1, %s9
    %p126 = scmp.lt.s32.totalorder %s9, 3
    %p127 = pnand %p125, %p126
    %p128 = pneg %p127
    // Predicated region
    $region9: #{generator_forward.13} parent=5 // pred_check
      _
    $region10: #{generator_forward.13} parent=5 // pred_check_branch
      %130 = sbr.rel (%p127) target = $region12
    $region11: #{generator_forward.13} parent=5 // pred_region
      %s131 = ssub.s32 %s9, 1
      // Predicated region
      $region13: #{generator_forward.13} parent=11 // pred_check
        %p132 = pneg %p47
      $region14: #{generator_forward.13} parent=11 // pred_check_branch
        %134 = sbr.rel (%p132) target = $region16
      $region15: #{generator_forward.13} parent=11 // pred_region
        %s135 = smul.u32 16, %s19
        %p136 = scmp.lt.s32.totalorder %s135, 15
        %s137 = scalar_select %p136, %s135, 15
        %s138 = smul.addr %s137, 8
        %s139 = scalar_lea.vmem %s0, %s138
        %s140 = smul.u32 16, %s19
      $region16: #{generator_forward.13} parent=11 // pred_fallthru
        _
      // Predicated region
      $region17: #{generator_forward.13} parent=11 // pred_check
        %p141 = pneg %p68
      $region18: #{generator_forward.13} parent=11 // pred_check_branch
        %143 = sbr.rel (%p141) target = $region20
      $region19: #{generator_forward.13} parent=11 // pred_region
        _
      $region20: #{generator_forward.13} parent=11 // pred_fallthru
        _
      // Predicated region
      $region21: #{generator_forward.13} parent=11 // pred_check
        %p144 = pneg %p89
      $region22: #{generator_forward.13} parent=11 // pred_check_branch
        %146 = sbr.rel (%p144) target = $region24
      $region23: #{generator_forward.13} parent=11 // pred_region
        _
      $region24: #{generator_forward.13} parent=11 // pred_fallthru
        _
    $region12: #{generator_forward.13} parent=5 // pred_fallthru
      _
    %p147 = scmp.lt.s32.totalorder %s9, 2
    // Predicated region
    $region25: #{generator_forward.13} parent=5 // pred_check
      %p148 = pneg %p147
    $region26: #{generator_forward.13} parent=5 // pred_check_branch
      %150 = sbr.rel (%p148) target = $region28
    $region27: #{generator_forward.13} parent=5 // pred_region
      _
    $region28: #{generator_forward.13} parent=5 // pred_fallthru
      _
    %p151 = scmp.le.s32.totalorder 1, %s9
    %p152 = scmp.lt.s32.totalorder %s9, 3
    %p153 = pnand %p151, %p152
    %p154 = pneg %p153
    // Predicated region
    $region29: #{generator_forward.13} parent=5 // pred_check
      _
    $region30: #{generator_forward.13} parent=5 // pred_check_branch
      %156 = sbr.rel (%p153) target = $region32
    $region31: #{generator_forward.13} parent=5 // pred_region
      %s157 = ssub.s32 %s9, 1
      %s158 = smul.u32 16, %s19
      %p159 = scmp.lt.s32.totalorder %s158, 15
      %s160 = scalar_select %p159, %s158, 15
      %s161 = smul.addr %s160, 8
      %s162 = scalar_lea.vmem %s0, %s161
      %p163 = pneg %p47
      %p164 = pneg %p44
      %p165 = pneg %p68
      %p166 = pneg %p65
      %p167 = pneg %p89
      %p168 = pneg %p86
      %p169 = pneg %p117
      %p170 = pneg %p114
      %s171 = smul.u32 %s19, %s18
      %s172 = smul.u32 16, %s171
      %p173 = scmp.lt.s32.totalorder %s172, 15
      %s174 = scalar_select %p173, %s172, 15
      %s175 = smul.addr %s174, 4
      %s176 = scalar_lea.vmem %s3, %s175
      %s177 = smul.u32 16, %s19
      %p178 = scmp.lt.s32.totalorder %s177, 15
      %s179 = scalar_select %p178, %s177, 15
      %s180 = smul.addr %s179, 8
      %s181 = scalar_lea.vmem %s0, %s180
      %s182 = smul.u32 16, %s19
      %s183 = smul.u32 %s19, %s18
      %s184 = smul.u32 16, %s183
      %p185 = scmp.lt.s32.totalorder %s184, 15
      %s186 = scalar_select %p185, %s184, 15
      %s187 = smul.addr %s186, 4
      %s188 = scalar_lea.vmem %s3, %s187
      %s189 = smul.u32 %s19, %s18
      %s190 = smul.u32 16, %s189
      %p191 = scmp.eq.s32.totalorder %s18, 0
      %p192 = scmp.eq.s32.totalorder %s19, 0
      %p193 = pnand %p191, %p192
      %p194 = pneg %p193
      // Predicated region
      $region33: #{generator_forward.13} parent=31 // pred_check
        _
      $region34: #{generator_forward.13} parent=31 // pred_check_branch
        %196 = sbr.rel (%p193) target = $region36
      $region35: #{generator_forward.13} parent=31 // pred_region
        %vm197 = vcmask 253952
        %198 = vst.msk [vmem:[#allocation2] sm:$0x1] %vm197, 0.0
        %199 = vst.msk [vmem:[#allocation3] sm:$0x1] %vm197, 0.0
      $region36: #{generator_forward.13} parent=31 // pred_fallthru
        _
      // Predicated region
      $region37: #{generator_forward.13} parent=31 // pred_check
        %p200 = pneg %p191
      $region38: #{generator_forward.13} parent=31 // pred_check_branch
        %202 = sbr.rel (%p200) target = $region40
      $region39: #{generator_forward.13} parent=31 // pred_region
        %v203 = vld [vmem:[%s181] sm:$0xff]
        %v204 = vld [vmem:[%s181 + $0x8] sm:$0xff]
        %v205 = vld [vmem:[%s181 + $0x10] sm:$0xff]
        %v206 = vld [vmem:[%s181 + $0x18] sm:$0xff]
        %v207 = vld [vmem:[%s181 + $0x20] sm:$0xff]
        %v208 = vld [vmem:[%s181 + $0x28] sm:$0xff]
        %v209 = vld [vmem:[%s181 + $0x30] sm:$0xff]
        %v210 = vld [vmem:[%s181 + $0x38] sm:$0xff]
        %v211 = vld [vmem:[%s181 + $0x40] sm:$0xff]
        %v212 = vld [vmem:[%s181 + $0x48] sm:$0xff]
        %v213 = vld [vmem:[%s181 + $0x50] sm:$0xff]
        %v214 = vld [vmem:[%s181 + $0x58] sm:$0xff]
        %v215 = vld [vmem:[%s181 + $0x60] sm:$0xff]
        %v216 = vld [vmem:[%s181 + $0x68] sm:$0xff]
        %v217 = vld [vmem:[%s181 + $0x70] sm:$0xff]
        %v218 = vld [vmem:[%s181 + $0x78] sm:$0xff]
        %v219 = vld [vmem:[#allocation2] sm:$0x1]
        %vm220 = vcmask 261120
        %v221 = vsel %vm220, %v203, 0.0
        %v222 = vsel %vm220, %v204, 0.0
        %v223 = vadd.f32 %v221, %v222
        %v224 = vsel %vm220, %v205, 0.0
        %v225 = vadd.f32 %v223, %v224
        %v226 = vsel %vm220, %v206, 0.0
        %v227 = vadd.f32 %v225, %v226
        %v228 = vsel %vm220, %v207, 0.0
        %v229 = vadd.f32 %v227, %v228
        %v230 = vsel %vm220, %v208, 0.0
        %v231 = vadd.f32 %v229, %v230
        %v232 = vsel %vm220, %v209, 0.0
        %v233 = vadd.f32 %v231, %v232
        %v234 = vsel %vm220, %v210, 0.0
        %v235 = vadd.f32 %v233, %v234
        %v236 = vsel %vm220, %v211, 0.0
        %v237 = vadd.f32 %v235, %v236
        %v238 = vsel %vm220, %v212, 0.0
        %v239 = vadd.f32 %v237, %v238
        %v240 = vsel %vm220, %v213, 0.0
        %v241 = vadd.f32 %v239, %v240
        %v242 = vsel %vm220, %v214, 0.0
        %v243 = vadd.f32 %v241, %v242
        %v244 = vsel %vm220, %v215, 0.0
        %v245 = vadd.f32 %v243, %v244
        %v246 = vsel %vm220, %v216, 0.0
        %v247 = vadd.f32 %v245, %v246
        %v248 = vsel %vm220, %v217, 0.0
        %v249 = vadd.f32 %v247, %v248
        %v250 = vsel %vm220, %v218, 0.0
        %v251 = vadd.f32 %v249, %v250
        %v252 = vrot.slane %v251, 4
        %v253 = vadd.f32 %v251, %v252
        %v254 = vrot.slane %v253, 2
        %v255 = vadd.f32 %v253, %v254
        %v256 = vrot.slane %v255, 1
        %v257 = vadd.f32 %v255, %v256
        %v258 = vadd.f32 %v219, %v257
        %vm259 = vcmask 253952
        %260 = vst.msk [vmem:[#allocation2] sm:$0x1] %vm259, %v258
        %v261 = vld [vmem:[#allocation3] sm:$0x1]
        %v262 = vmul.f32 %v203, %v203
        %v263 = vmul.f32 %v204, %v204
        %v264 = vmul.f32 %v205, %v205
        %v265 = vmul.f32 %v206, %v206
        %v266 = vmul.f32 %v207, %v207
        %v267 = vmul.f32 %v208, %v208
        %v268 = vmul.f32 %v209, %v209
        %v269 = vmul.f32 %v210, %v210
        %v270 = vmul.f32 %v211, %v211
        %v271 = vmul.f32 %v212, %v212
        %v272 = vmul.f32 %v213, %v213
        %v273 = vmul.f32 %v214, %v214
        %v274 = vmul.f32 %v215, %v215
        %v275 = vmul.f32 %v216, %v216
        %v276 = vmul.f32 %v217, %v217
        %v277 = vmul.f32 %v218, %v218
        %v278 = vsel %vm220, %v262, 0.0
        %v279 = vsel %vm220, %v263, 0.0
        %v280 = vadd.f32 %v278, %v279
        %v281 = vsel %vm220, %v264, 0.0
        %v282 = vadd.f32 %v280, %v281
        %v283 = vsel %vm220, %v265, 0.0
        %v284 = vadd.f32 %v282, %v283
        %v285 = vsel %vm220, %v266, 0.0
        %v286 = vadd.f32 %v284, %v285
        %v287 = vsel %vm220, %v267, 0.0
        %v288 = vadd.f32 %v286, %v287
        %v289 = vsel %vm220, %v268, 0.0
        %v290 = vadd.f32 %v288, %v289
        %v291 = vsel %vm220, %v269, 0.0
        %v292 = vadd.f32 %v290, %v291
        %v293 = vsel %vm220, %v270, 0.0
        %v294 = vadd.f32 %v292, %v293
        %v295 = vsel %vm220, %v271, 0.0
        %v296 = vadd.f32 %v294, %v295
        %v297 = vsel %vm220, %v272, 0.0
        %v298 = vadd.f32 %v296, %v297
        %v299 = vsel %vm220, %v273, 0.0
        %v300 = vadd.f32 %v298, %v299
        %v301 = vsel %vm220, %v274, 0.0
        %v302 = vadd.f32 %v300, %v301
        %v303 = vsel %vm220, %v275, 0.0
        %v304 = vadd.f32 %v302, %v303
        %v305 = vsel %vm220, %v276, 0.0
        %v306 = vadd.f32 %v304, %v305
        %v307 = vsel %vm220, %v277, 0.0
        %v308 = vadd.f32 %v306, %v307
        %v309 = vrot.slane %v308, 4
        %v310 = vadd.f32 %v308, %v309
        %v311 = vrot.slane %v310, 2
        %v312 = vadd.f32 %v310, %v311
        %v313 = vrot.slane %v312, 1
        %v314 = vadd.f32 %v312, %v313
        %v315 = vadd.f32 %v261, %v314
        %316 = vst.msk [vmem:[#allocation3] sm:$0x1] %vm259, %v315
      $region40: #{generator_forward.13} parent=31 // pred_fallthru
        _
      %p317 = scmp.eq.s32.totalorder %s18, 1
      // Predicated region
      $region41: #{generator_forward.13} parent=31 // pred_check
        %p318 = pneg %p317
      $region42: #{generator_forward.13} parent=31 // pred_check_branch
        %320 = sbr.rel (%p318) target = $region44
      $region43: #{generator_forward.13} parent=31 // pred_region
        %v321 = vld [vmem:[#allocation2] sm:$0x1]
        %v322 = vmul.f32 %v321, 0.0078125
        %v323 = vld [vmem:[#allocation3] sm:$0x1]
        %v324 = vmul.f32 %v323, 0.0078125
        %v325 = vmul.f32 %v322, %v322
        %v326 = vsub.f32 %v324, %v325
        %v327 = vld [vmem:[%s1] sm:$0x1]
        %v328 = vadd.f32 %v326, 1e-05
        %v329 = vrsqrt.pop %v328
        %v330 = vmul.f32 %v327, %v329
        %v331 = vld [vmem:[%s2] sm:$0x1]
        %v332 = vmul.f32 %v322, %v330
        %v333 = vsub.f32 %v331, %v332
        %v334 = vld [vmem:[%s181] sm:$0xff]
        %v335 = vld [vmem:[%s181 + $0x8] sm:$0xff]
        %v336 = vld [vmem:[%s181 + $0x10] sm:$0xff]
        %v337 = vld [vmem:[%s181 + $0x18] sm:$0xff]
        %v338 = vld [vmem:[%s181 + $0x20] sm:$0xff]
        %v339 = vld [vmem:[%s181 + $0x28] sm:$0xff]
        %v340 = vld [vmem:[%s181 + $0x30] sm:$0xff]
        %v341 = vld [vmem:[%s181 + $0x38] sm:$0xff]
        %v342 = vld [vmem:[%s181 + $0x40] sm:$0xff]
        %v343 = vld [vmem:[%s181 + $0x48] sm:$0xff]
        %v344 = vld [vmem:[%s181 + $0x50] sm:$0xff]
        %v345 = vld [vmem:[%s181 + $0x58] sm:$0xff]
        %v346 = vld [vmem:[%s181 + $0x60] sm:$0xff]
        %v347 = vld [vmem:[%s181 + $0x68] sm:$0xff]
        %v348 = vld [vmem:[%s181 + $0x70] sm:$0xff]
        %v349 = vld [vmem:[%s181 + $0x78] sm:$0xff]
        %v351 = vlaneseq
        %v352 = vshrl.u32 %v351, 7
        %v353 = vsub.s32 0, %v352
        %v354 = vrot.slane %v330, %v353
        %v356 = vmul.f32 %v334, %v354
        %v357 = vmul.f32 %v335, %v354
        %v358 = vmul.f32 %v336, %v354
        %v359 = vmul.f32 %v337, %v354
        %v360 = vmul.f32 %v338, %v354
        %v361 = vmul.f32 %v339, %v354
        %v362 = vmul.f32 %v340, %v354
        %v363 = vmul.f32 %v341, %v354
        %v364 = vmul.f32 %v342, %v354
        %v365 = vmul.f32 %v343, %v354
        %v366 = vmul.f32 %v344, %v354
        %v367 = vmul.f32 %v345, %v354
        %v368 = vmul.f32 %v346, %v354
        %v369 = vmul.f32 %v347, %v354
        %v370 = vmul.f32 %v348, %v354
        %v371 = vmul.f32 %v349, %v354
        %v373 = vlaneseq
        %v374 = vshrl.u32 %v373, 7
        %v375 = vsub.s32 0, %v374
        %v376 = vrot.slane %v333, %v375
        %v378 = vadd.f32 %v356, %v376
        %v379 = vadd.f32 %v357, %v376
        %v380 = vadd.f32 %v358, %v376
        %v381 = vadd.f32 %v359, %v376
        %v382 = vadd.f32 %v360, %v376
        %v383 = vadd.f32 %v361, %v376
        %v384 = vadd.f32 %v362, %v376
        %v385 = vadd.f32 %v363, %v376
        %v386 = vadd.f32 %v364, %v376
        %v387 = vadd.f32 %v365, %v376
        %v388 = vadd.f32 %v366, %v376
        %v389 = vadd.f32 %v367, %v376
        %v390 = vadd.f32 %v368, %v376
        %v391 = vadd.f32 %v369, %v376
        %v392 = vadd.f32 %v370, %v376
        %v393 = vadd.f32 %v371, %v376
        %v394 = vmax.f32 %v378, 0.0
        %v395 = vmax.f32 %v379, 0.0
        %v396 = vmax.f32 %v380, 0.0
        %v397 = vmax.f32 %v381, 0.0
        %v398 = vmax.f32 %v382, 0.0
        %v399 = vmax.f32 %v383, 0.0
        %v400 = vmax.f32 %v384, 0.0
        %v401 = vmax.f32 %v385, 0.0
        %v402 = vmax.f32 %v386, 0.0
        %v403 = vmax.f32 %v387, 0.0
        %v404 = vmax.f32 %v388, 0.0
        %v405 = vmax.f32 %v389, 0.0
        %v406 = vmax.f32 %v390, 0.0
        %v407 = vmax.f32 %v391, 0.0
        %v408 = vmax.f32 %v392, 0.0
        %v409 = vmax.f32 %v393, 0.0
        %v410 = vpack.c.bf16 %v395, %v394
        %v411 = vpack.c.bf16 %v397, %v396
        %v412 = vpack.c.bf16 %v399, %v398
        %v413 = vpack.c.bf16 %v401, %v400
        %v414 = vpack.c.bf16 %v403, %v402
        %v415 = vpack.c.bf16 %v405, %v404
        %v416 = vpack.c.bf16 %v407, %v406
        %v417 = vpack.c.bf16 %v409, %v408
        %v426 = vunpack.c.l.b16 %v410
        %v427 = vunpack.c.h.b16 %v410
        %v428 = vunpack.c.l.b16 %v411
        %v429 = vunpack.c.h.b16 %v411
        %v430 = vunpack.c.l.b16 %v412
        %v431 = vunpack.c.h.b16 %v412
        %v432 = vunpack.c.l.b16 %v413
        %v433 = vunpack.c.h.b16 %v413
        %v434 = vunpack.c.l.b16 %v414
        %v435 = vunpack.c.h.b16 %v414
        %v436 = vunpack.c.l.b16 %v415
        %v437 = vunpack.c.h.b16 %v415
        %v438 = vunpack.c.l.b16 %v416
        %v439 = vunpack.c.h.b16 %v416
        %v440 = vunpack.c.l.b16 %v417
        %v441 = vunpack.c.h.b16 %v417
        %v442 = vpack.c.b16 %v426, %v426
        %v443 = vpack.c.b16 %v427, %v427
        %v444 = vpack.c.b16 %v428, %v428
        %v445 = vpack.c.b16 %v429, %v429
        %v446 = vpack.c.b16 %v430, %v430
        %v447 = vpack.c.b16 %v431, %v431
        %v448 = vpack.c.b16 %v432, %v432
        %v449 = vpack.c.b16 %v433, %v433
        %v450 = vpack.c.b16 %v434, %v434
        %v451 = vpack.c.b16 %v435, %v435
        %v452 = vpack.c.b16 %v436, %v436
        %v453 = vpack.c.b16 %v437, %v437
        %v454 = vpack.c.b16 %v438, %v438
        %v455 = vpack.c.b16 %v439, %v439
        %v456 = vpack.c.b16 %v440, %v440
        %v457 = vpack.c.b16 %v441, %v441
        %vm474 = vcmask 257024
        %475 = vst.msk [vmem:[%s188] sm:$0xf] %vm474, %v442
        %476 = vst.msk [vmem:[%s188 + $0x4] sm:$0xf] %vm474, %v443
        %477 = vst.msk [vmem:[%s188 + $0x8] sm:$0xf] %vm474, %v444
        %478 = vst.msk [vmem:[%s188 + $0xc] sm:$0xf] %vm474, %v445
        %479 = vst.msk [vmem:[%s188 + $0x10] sm:$0xf] %vm474, %v446
        %480 = vst.msk [vmem:[%s188 + $0x14] sm:$0xf] %vm474, %v447
        %481 = vst.msk [vmem:[%s188 + $0x18] sm:$0xf] %vm474, %v448
        %482 = vst.msk [vmem:[%s188 + $0x1c] sm:$0xf] %vm474, %v449
        %483 = vst.msk [vmem:[%s188 + $0x20] sm:$0xf] %vm474, %v450
        %484 = vst.msk [vmem:[%s188 + $0x24] sm:$0xf] %vm474, %v451
        %485 = vst.msk [vmem:[%s188 + $0x28] sm:$0xf] %vm474, %v452
        %486 = vst.msk [vmem:[%s188 + $0x2c] sm:$0xf] %vm474, %v453
        %487 = vst.msk [vmem:[%s188 + $0x30] sm:$0xf] %vm474, %v454
        %488 = vst.msk [vmem:[%s188 + $0x34] sm:$0xf] %vm474, %v455
        %489 = vst.msk [vmem:[%s188 + $0x38] sm:$0xf] %vm474, %v456
        %490 = vst.msk [vmem:[%s188 + $0x3c] sm:$0xf] %vm474, %v457
      $region44: #{generator_forward.13} parent=31 // pred_fallthru
        _
      %s491 = smul.u32 %s19, %s18
      %s492 = smul.u32 16, %s491
      %p493 = scmp.lt.s32.totalorder %s492, 15
      %s494 = scalar_select %p493, %s492, 15
      %s495 = smul.addr %s494, 4
      %s496 = scalar_lea.vmem %s3, %s495
      // Predicated region
      $region45: #{generator_forward.13} parent=31 // pred_check
        %p497 = pneg %p114
      $region46: #{generator_forward.13} parent=31 // pred_check_branch
        %499 = sbr.rel (%p497) target = $region48
      $region47: #{generator_forward.13} parent=31 // pred_region
        %s500 = smul.u32 %s19, %s18
        %s501 = smul.u32 16, %s500
      $region48: #{generator_forward.13} parent=31 // pred_fallthru
        _
    $region32: #{generator_forward.13} parent=5 // pred_fallthru
      _
    %p502 = scmp.le.s32.totalorder 2, %s9
    // Predicated region
    $region49: #{generator_forward.13} parent=5 // pred_check
      %p503 = pneg %p502
    $region50: #{generator_forward.13} parent=5 // pred_check_branch
      %505 = sbr.rel (%p503) target = $region52
    $region51: #{generator_forward.13} parent=5 // pred_region
      %s506 = ssub.s32 %s9, 2
      // Predicated region
      $region53: #{generator_forward.13} parent=51 // pred_check
        %p507 = pneg %p120
      $region54: #{generator_forward.13} parent=51 // pred_check_branch
        %509 = sbr.rel (%p507) target = $region56
      $region55: #{generator_forward.13} parent=51 // pred_region
        %s510 = smul.u32 %s21, %s20
        %s511 = smul.u32 16, %s510
        %p512 = scmp.lt.s32.totalorder %s511, 15
        %s513 = scalar_select %p512, %s511, 15
        %s514 = smul.addr %s513, 4
        %s515 = scalar_lea.vmem %s3, %s514
      $region56: #{generator_forward.13} parent=51 // pred_fallthru
        _
    $region52: #{generator_forward.13} parent=5 // pred_fallthru
      _
  $region6: #{generator_forward.13} parent=0 // loop_footer
    %s13 = sadd.s32 1, %s9
  $region7: #{generator_forward.13} parent=0 // loop_footer_branch
    %8 = sbr.rel target = $region3
  $region8: #{generator_forward.13} parent=0 // loop_exit
    _

// kernel: generator_forward.14
$region0: #{generator_forward.14}
  #allocation0 [shape = 'u32[]', space=smem, size = 0x4, offset = 0x4, fixed_abs, tag = 'smem constant byte address 0x4 - core index']
  #allocation1 [shape = 'u32[144,128]{1,0:T(1,128)}', space=vmem, size = 0x12000, scoped, tag = 'internal scratch']
  %s0 = inlined_call_operand.vmem [shape: bf16[128,32], index: 0, kind: input, shape index: {}]
  %s1 = inlined_call_operand.vmem [shape: bf16[32,256], index: 1, kind: input, shape index: {}]
  %s2 = inlined_call_operand.vmem [shape: f32[128,256], index: 2, kind: output, shape index: {}]
  %s3 = sld [smem:[#allocation0]]
  $region18: #{generator_forward.14} parent=0
    _
  %s5 = ssub.s32 1, %s3
  %s6 = scalar_select 0, %s5, %s3
  // Predicated region
  $region2: #{generator_forward.14} parent=0 // pred_check
    _
  $region3: #{generator_forward.14} parent=0 // pred_check_branch
    %8 = sbr.rel (0) target = $region5
  $region4: #{generator_forward.14} parent=0 // pred_region
    _
  $region5: #{generator_forward.14} parent=0 // pred_fallthru
    _
  // Predicated region
  $region6: #{generator_forward.14} parent=0 // pred_check
    _
  $region7: #{generator_forward.14} parent=0 // pred_check_branch
    %10 = sbr.rel (0) target = $region9
  $region8: #{generator_forward.14} parent=0 // pred_region
    _
  $region9: #{generator_forward.14} parent=0 // pred_fallthru
    _
  %v12 = vld [vmem:[%s0] sm:$0xf]
  %v13 = vld [vmem:[%s0 + $0x4] sm:$0xf]
  %v14 = vld [vmem:[%s0 + $0x8] sm:$0xf]
  %v15 = vld [vmem:[%s0 + $0xc] sm:$0xf]
  %v16 = vld [vmem:[%s0 + $0x10] sm:$0xf]
  %v17 = vld [vmem:[%s0 + $0x14] sm:$0xf]
  %v18 = vld [vmem:[%s0 + $0x18] sm:$0xf]
  %v19 = vld [vmem:[%s0 + $0x1c] sm:$0xf]
  %v20 = vld [vmem:[%s0 + $0x20] sm:$0xf]
  %v21 = vld [vmem:[%s0 + $0x24] sm:$0xf]
  %v22 = vld [vmem:[%s0 + $0x28] sm:$0xf]
  %v23 = vld [vmem:[%s0 + $0x2c] sm:$0xf]
  %v24 = vld [vmem:[%s0 + $0x30] sm:$0xf]
  %v25 = vld [vmem:[%s0 + $0x34] sm:$0xf]
  %v26 = vld [vmem:[%s0 + $0x38] sm:$0xf]
  %v27 = vld [vmem:[%s0 + $0x3c] sm:$0xf]
  %v28 = vld [vmem:[%s1] sm:$0xff]
  %v29 = vld [vmem:[%s1 + $0x8] sm:$0xff]
  %v30 = vld [vmem:[%s1 + $0x10] sm:$0xff]
  %v31 = vld [vmem:[%s1 + $0x18] sm:$0xff]
  %v48 = vunpack.c.l.b16 %v12
  %v49 = vunpack.c.l.b16 %v13
  %v50 = vunpack.c.l.b16 %v14
  %v51 = vunpack.c.l.b16 %v15
  %v52 = vunpack.c.l.b16 %v16
  %v53 = vunpack.c.l.b16 %v17
  %v54 = vunpack.c.l.b16 %v18
  %v55 = vunpack.c.l.b16 %v19
  %v56 = vunpack.c.l.b16 %v20
  %v57 = vunpack.c.l.b16 %v21
  %v58 = vunpack.c.l.b16 %v22
  %v59 = vunpack.c.l.b16 %v23
  %v60 = vunpack.c.l.b16 %v24
  %v61 = vunpack.c.l.b16 %v25
  %v62 = vunpack.c.l.b16 %v26
  %v63 = vunpack.c.l.b16 %v27
  %v64 = vpack.c.b16 %v49, %v48
  %v65 = vpack.c.b16 %v51, %v50
  %v66 = vpack.c.b16 %v53, %v52
  %v67 = vpack.c.b16 %v55, %v54
  %v68 = vpack.c.b16 %v57, %v56
  %v69 = vpack.c.b16 %v59, %v58
  %v70 = vpack.c.b16 %v61, %v60
  %v71 = vpack.c.b16 %v63, %v62
  %v76 = vunpack.c.l.b16 %v28
  %v77 = vunpack.c.h.b16 %v28
  %v78 = vunpack.c.l.b16 %v29
  %v79 = vunpack.c.h.b16 %v29
  %v80 = vunpack.c.l.b16 %v30
  %v81 = vunpack.c.h.b16 %v30
  %v82 = vunpack.c.l.b16 %v31
  %v83 = vunpack.c.h.b16 %v31
  %v84 = vpack.c.b16 %v78, %v76
  %v85 = vpack.c.b16 %v79, %v77
  %v86 = vpack.c.b16 %v82, %v80
  %v87 = vpack.c.b16 %v83, %v81
  %vm92 = vcmask 261120
  %v94 = vsel %vm92, %v64, 0
  %v97 = vsel %vm92, %v65, 0
  %v100 = vsel %vm92, %v66, 0
  %v103 = vsel %vm92, %v67, 0
  %v106 = vsel %vm92, %v68, 0
  %v109 = vsel %vm92, %v69, 0
  %v112 = vsel %vm92, %v70, 0
  %v115 = vsel %vm92, %v71, 0
  %117 = vmatprep.subr.bf16.mxu0 %v85
  %118 = vmatpush1.bf16.msra.mxu0 %v84
  %119 = vmatprep.subr.bf16.mxu0 %v87
  %120 = vmatpush1.bf16.msra.mxu0 %v86
  %121 = vmatprep.subr.bf16.mxu0 0
  %122 = vmatpush1.bf16.msra.mxu0 0
  %123 = vmatprep.subr.bf16.mxu0 0
  %124 = vmatpush1.bf16.msra.mxu0 0
  %125 = vmatprep.subr.bf16.mxu0 0
  %126 = vmatpush1.bf16.msra.mxu0 0
  %127 = vmatprep.subr.bf16.mxu0 0
  %128 = vmatpush1.bf16.msra.mxu0 0
  %129 = vmatprep.subr.bf16.mxu0 0
  %130 = vmatpush1.bf16.msra.mxu0 0
  %131 = vmatprep.subr.bf16.mxu0 0
  %132 = vmatpush1.bf16.msra.mxu0 0
  %133 = vmatprep.subr.bf16.mxu0 0
  %134 = vmatpush1.bf16.msra.mxu0 0
  %135 = vmatprep.subr.bf16.mxu0 0
  %136 = vmatpush1.bf16.msra.mxu0 0
  %137 = vmatprep.subr.bf16.mxu0 0
  %138 = vmatpush1.bf16.msra.mxu0 0
  %139 = vmatprep.subr.bf16.mxu0 0
  %140 = vmatpush1.bf16.msra.mxu0 0
  %141 = vmatprep.subr.bf16.mxu0 0
  %142 = vmatpush1.bf16.msra.mxu0 0
  %143 = vmatprep.subr.bf16.mxu0 0
  %144 = vmatpush1.bf16.msra.mxu0 0
  %145 = vmatprep.subr.bf16.mxu0 0
  %146 = vmatpush1.bf16.msra.mxu0 0
  %147 = vmatprep.subr.bf16.mxu0 0
  %148 = vmatpush1.bf16.msra.mxu0 0
  %149 = vmatprep.mubr.bf16.mxu0 0
  %150 = vmatmul.mubr.bf16.gmra.mrb[0].mxu0 %v94
  %v151 = vpop.f32.mrb[0].mxu0
  %v152 = vadd.f32 0.0, %v151
  %v153 = vpop.f32.mrb[0].mxu0
  %v154 = vadd.f32 0.0, %v153
  %v155 = vpop.f32.mrb[0].mxu0
  %v156 = vadd.f32 0.0, %v155
  %v157 = vpop.f32.mrb[0].mxu0
  %v158 = vadd.f32 0.0, %v157
  %159 = vmatprep.mubr.bf16.mxu0 0
  %160 = vmatmul.mubr.bf16.gmra.mrb[0].mxu0 %v97
  %v161 = vpop.f32.mrb[0].mxu0
  %v162 = vadd.f32 0.0, %v161
  %v163 = vpop.f32.mrb[0].mxu0
  %v164 = vadd.f32 0.0, %v163
  %v165 = vpop.f32.mrb[0].mxu0
  %v166 = vadd.f32 0.0, %v165
  %v167 = vpop.f32.mrb[0].mxu0
  %v168 = vadd.f32 0.0, %v167
  %169 = vmatprep.mubr.bf16.mxu0 0
  %170 = vmatmul.mubr.bf16.gmra.mrb[0].mxu0 %v100
  %v171 = vpop.f32.mrb[0].mxu0
  %v172 = vadd.f32 0.0, %v171
  %v173 = vpop.f32.mrb[0].mxu0
  %v174 = vadd.f32 0.0, %v173
  %v175 = vpop.f32.mrb[0].mxu0
  %v176 = vadd.f32 0.0, %v175
  %v177 = vpop.f32.mrb[0].mxu0
  %v178 = vadd.f32 0.0, %v177
  %179 = vmatprep.mubr.bf16.mxu0 0
  %180 = vmatmul.mubr.bf16.gmra.mrb[0].mxu0 %v103
  %v181 = vpop.f32.mrb[0].mxu0
  %v182 = vadd.f32 0.0, %v181
  %v183 = vpop.f32.mrb[0].mxu0
  %v184 = vadd.f32 0.0, %v183
  %v185 = vpop.f32.mrb[0].mxu0
  %v186 = vadd.f32 0.0, %v185
  %v187 = vpop.f32.mrb[0].mxu0
  %v188 = vadd.f32 0.0, %v187
  %189 = vmatprep.mubr.bf16.mxu0 0
  %190 = vmatmul.mubr.bf16.gmra.mrb[0].mxu0 %v106
  %v191 = vpop.f32.mrb[0].mxu0
  %v192 = vadd.f32 0.0, %v191
  %v193 = vpop.f32.mrb[0].mxu0
  %v194 = vadd.f32 0.0, %v193
  %v195 = vpop.f32.mrb[0].mxu0
  %v196 = vadd.f32 0.0, %v195
  %v197 = vpop.f32.mrb[0].mxu0
  %v198 = vadd.f32 0.0, %v197
  %199 = vmatprep.mubr.bf16.mxu0 0
  %200 = vmatmul.mubr.bf16.gmra.mrb[0].mxu0 %v109
  %v201 = vpop.f32.mrb[0].mxu0
  %v202 = vadd.f32 0.0, %v201
  %v203 = vpop.f32.mrb[0].mxu0
  %v204 = vadd.f32 0.0, %v203
  %v205 = vpop.f32.mrb[0].mxu0
  %v206 = vadd.f32 0.0, %v205
  %v207 = vpop.f32.mrb[0].mxu0
  %v208 = vadd.f32 0.0, %v207
  %209 = vmatprep.mubr.bf16.mxu0 0
  %210 = vmatmul.mubr.bf16.gmra.mrb[0].mxu0 %v112
  %v211 = vpop.f32.mrb[0].mxu0
  %v212 = vadd.f32 0.0, %v211
  %v213 = vpop.f32.mrb[0].mxu0
  %v214 = vadd.f32 0.0, %v213
  %v215 = vpop.f32.mrb[0].mxu0
  %v216 = vadd.f32 0.0, %v215
  %v217 = vpop.f32.mrb[0].mxu0
  %v218 = vadd.f32 0.0, %v217
  %219 = vmatprep.mubr.bf16.mxu0 0
  %220 = vmatmul.mubr.bf16.gmra.mrb[0].mxu0 %v115
  %v221 = vpop.f32.mrb[0].mxu0
  %v222 = vadd.f32 0.0, %v221
  %v223 = vpop.f32.mrb[0].mxu0
  %v224 = vadd.f32 0.0, %v223
  %v225 = vpop.f32.mrb[0].mxu0
  %v226 = vadd.f32 0.0, %v225
  %v227 = vpop.f32.mrb[0].mxu0
  %v228 = vadd.f32 0.0, %v227
  %229 = vdwg.mxu0
  %230 = vst [vmem:[%s2] sm:$0xff] %v152
  %231 = vst [vmem:[%s2 + $0x8] sm:$0xff] %v154
  %232 = vst [vmem:[%s2 + $0x10] sm:$0xff] %v156
  %233 = vst [vmem:[%s2 + $0x18] sm:$0xff] %v158
  %234 = vst [vmem:[%s2 + $0x20] sm:$0xff] %v162
  %235 = vst [vmem:[%s2 + $0x28] sm:$0xff] %v164
  %236 = vst [vmem:[%s2 + $0x30] sm:$0xff] %v166
  %237 = vst [vmem:[%s2 + $0x38] sm:$0xff] %v168
  %238 = vst [vmem:[%s2 + $0x40] sm:$0xff] %v172
  %239 = vst [vmem:[%s2 + $0x48] sm:$0xff] %v174
  %240 = vst [vmem:[%s2 + $0x50] sm:$0xff] %v176
  %241 = vst [vmem:[%s2 + $0x58] sm:$0xff] %v178
  %242 = vst [vmem:[%s2 + $0x60] sm:$0xff] %v182
  %243 = vst [vmem:[%s2 + $0x68] sm:$0xff] %v184
  %244 = vst [vmem:[%s2 + $0x70] sm:$0xff] %v186
  %245 = vst [vmem:[%s2 + $0x78] sm:$0xff] %v188
  %246 = vst [vmem:[%s2 + $0x80] sm:$0xff] %v192
  %247 = vst [vmem:[%s2 + $0x88] sm:$0xff] %v194
  %248 = vst [vmem:[%s2 + $0x90] sm:$0xff] %v196
  %249 = vst [vmem:[%s2 + $0x98] sm:$0xff] %v198
  %250 = vst [vmem:[%s2 + $0xa0] sm:$0xff] %v202
  %251 = vst [vmem:[%s2 + $0xa8] sm:$0xff] %v204
  %252 = vst [vmem:[%s2 + $0xb0] sm:$0xff] %v206
  %253 = vst [vmem:[%s2 + $0xb8] sm:$0xff] %v208
  %254 = vst [vmem:[%s2 + $0xc0] sm:$0xff] %v212
  %255 = vst [vmem:[%s2 + $0xc8] sm:$0xff] %v214
  %256 = vst [vmem:[%s2 + $0xd0] sm:$0xff] %v216
  %257 = vst [vmem:[%s2 + $0xd8] sm:$0xff] %v218
  %258 = vst [vmem:[%s2 + $0xe0] sm:$0xff] %v222
  %259 = vst [vmem:[%s2 + $0xe8] sm:$0xff] %v224
  %260 = vst [vmem:[%s2 + $0xf0] sm:$0xff] %v226
  %261 = vst [vmem:[%s2 + $0xf8] sm:$0xff] %v228
  // Predicated region
  $region10: #{generator_forward.14} parent=0 // pred_check
    _
  $region11: #{generator_forward.14} parent=0 // pred_check_branch
    %263 = sbr.rel (0) target = $region13
  $region12: #{generator_forward.14} parent=0 // pred_region
    _
  $region13: #{generator_forward.14} parent=0 // pred_fallthru
    _
  // Predicated region
  $region14: #{generator_forward.14} parent=0 // pred_check
    _
  $region15: #{generator_forward.14} parent=0 // pred_check_branch
    %265 = sbr.rel (0) target = $region17
  $region16: #{generator_forward.14} parent=0 // pred_region
    _
  $region17: #{generator_forward.14} parent=0 // pred_fallthru
    _

// kernel: generator_forward.15
$region0: #{generator_forward.15}
  #allocation0 [shape = 'u32[]', space=smem, size = 0x4, offset = 0x4, fixed_abs, tag = 'smem constant byte address 0x4 - core index']
  #allocation1 [shape = 'u32[144,128]{1,0:T(1,128)}', space=vmem, size = 0x12000, scoped, tag = 'internal scratch']
  #allocation2 [shape = 'f32[1,16]{1,0:T(1,128)}', space=vmem, size = 0x200, scoped, tag = 'scratch operand']
  #allocation3 [shape = 'f32[1,16]{1,0:T(1,128)}', space=vmem, size = 0x200, scoped, tag = 'scratch operand']
  %s0 = inlined_call_operand.vmem [shape: f32[512,16], index: 0, kind: input, shape index: {}]
  %s1 = inlined_call_operand.vmem [shape: f32[1,16], index: 1, kind: input, shape index: {}]
  %s2 = inlined_call_operand.vmem [shape: f32[1,16], index: 2, kind: input, shape index: {}]
  %s3 = inlined_call_operand.vmem [shape: bf16[512,16], index: 3, kind: output, shape index: {}]
  %s4 = sld [smem:[#allocation0]]
  $region57: #{generator_forward.15} parent=0
    _
  %s6 = ssub.s32 1, %s4
  %s7 = scalar_select 0, %s6, %s4
  loop: start=0, step=1, limit=4
  $region2: #{generator_forward.15} parent=0 // loop_pre_header
    _
  $region3: #{generator_forward.15} parent=0 // loop_header
    %s9 = sphi 0, %s13
    %p10 = scmp.ge.s32.totalorder %s9, 4
    %s16 = sphi 0, %s28
    %s17 = sphi 0, %s24
    %s18 = sphi 0, %s16
    %s19 = sphi 0, %s17
    %s20 = sphi 0, %s18
    %s21 = sphi 0, %s19
    %s31 = sphi 0, %s33
    %s34 = sphi 0, %s31
    %s35 = sphi 0, %s34
    %s51 = sphi 0, %s35
    %s55 = sphi 0, %s55
    %s57 = sphi 0, %s55
    %s58 = sphi 0, %s57
    %s72 = sphi 0, %s58
    %s76 = sphi 0, %s76
    %s78 = sphi 0, %s76
    %s79 = sphi 0, %s78
    %s93 = sphi 0, %s79
    %s101 = sphi 0, %s103
    %s104 = sphi 0, %s101
    %s105 = sphi 0, %s104
    %s121 = sphi 0, %s105
  $region4: #{generator_forward.15} parent=0 // loop_header_branch
    %12 = sbr.rel (%p10) target = $region8
  $region5: #{generator_forward.15} parent=0 // loop_body
    %s14 = ssub.s32 %s9, 1
    %s15 = ssub.s32 %s9, 2
    %s22 = sadd.s32 1, %s17
    %p23 = scmp.ge.s32.totalorder %s22, 1
    %s24 = scalar_select %p23, 0, %s22
    %s25 = sadd.s32 1, %s16
    %s26 = scalar_select %p23, %s25, %s16
    %p27 = scmp.ge.s32.totalorder %s26, 2
    %s28 = scalar_select %p27, 0, %s26
    %s29 = ssub.s32 %s17, %s24
    %p30 = scmp.eq.s32.totalorder %s29, 0
    %s32 = sadd.s32 %s31, 1
    %s33 = scalar_select %p30, %s31, %s32
    %p36 = pneg %p30
    %p37 = scmp.eq.s32.totalorder %s9, 1
    %p38 = por %p36, %p37
    %p39 = scmp.ne.s32.totalorder %s31, %s34
    %p40 = scmp.eq.s32.totalorder %s9, 0
    %p41 = por %p39, %p40
    %p42 = scmp.ne.s32.totalorder %s31, %s34
    %p43 = scmp.eq.s32.totalorder %s14, 1
    %p44 = por %p42, %p43
    %p45 = scmp.ne.s32.totalorder %s34, %s35
    %p46 = scmp.eq.s32.totalorder %s14, 0
    %p47 = por %p45, %p46
    %p48 = scmp.ne.s32.totalorder %s34, %s35
    %p49 = scmp.eq.s32.totalorder %s15, 1
    %p50 = por %p48, %p49
    %p52 = scmp.ne.s32.totalorder %s35, %s51
    %p53 = scmp.eq.s32.totalorder %s15, 0
    %p54 = por %p52, %p53
    %s56 = sadd.s32 %s55, 1
    %p59 = scmp.eq.s32.totalorder %s9, 1
    %p60 = scmp.ne.s32.totalorder %s55, %s57
    %p61 = scmp.eq.s32.totalorder %s9, 0
    %p62 = por %p60, %p61
    %p63 = scmp.ne.s32.totalorder %s55, %s57
    %p64 = scmp.eq.s32.totalorder %s14, 1
    %p65 = por %p63, %p64
    %p66 = scmp.ne.s32.totalorder %s57, %s58
    %p67 = scmp.eq.s32.totalorder %s14, 0
    %p68 = por %p66, %p67
    %p69 = scmp.ne.s32.totalorder %s57, %s58
    %p70 = scmp.eq.s32.totalorder %s15, 1
    %p71 = por %p69, %p70
    %p73 = scmp.ne.s32.totalorder %s58, %s72
    %p74 = scmp.eq.s32.totalorder %s15, 0
    %p75 = por %p73, %p74
    %s77 = sadd.s32 %s76, 1
    %p80 = scmp.eq.s32.totalorder %s9, 1
    %p81 = scmp.ne.s32.totalorder %s76, %s78
    %p82 = scmp.eq.s32.totalorder %s9, 0
    %p83 = por %p81, %p82
    %p84 = scmp.ne.s32.totalorder %s76, %s78
    %p85 = scmp.eq.s32.totalorder %s14, 1
    %p86 = por %p84, %p85
    %p87 = scmp.ne.s32.totalorder %s78, %s79
    %p88 = scmp.eq.s32.totalorder %s14, 0
    %p89 = por %p87, %p88
    %p90 = scmp.ne.s32.totalorder %s78, %s79
    %p91 = scmp.eq.s32.totalorder %s15, 1
    %p92 = por %p90, %p91
    %p94 = scmp.ne.s32.totalorder %s79, %s93
    %p95 = scmp.eq.s32.totalorder %s15, 0
    %p96 = por %p94, %p95
    %s97 = smul.u32 %s17, %s16
    %s98 = smul.u32 %s24, %s28
    %s99 = ssub.s32 %s97, %s98
    %p100 = scmp.eq.s32.totalorder %s99, 0
    %s102 = sadd.s32 %s101, 1
    %s103 = scalar_select %p100, %s101, %s102
    %p106 = pneg %p100
    %p107 = scmp.eq.s32.totalorder %s9, 1
    %p108 = por %p106, %p107
    %p109 = scmp.ne.s32.totalorder %s101, %s104
    %p110 = scmp.eq.s32.totalorder %s9, 0
    %p111 = por %p109, %p110
    %p112 = scmp.ne.s32.totalorder %s101, %s104
    %p113 = scmp.eq.s32.totalorder %s14, 1
    %p114 = por %p112, %p113
    %p115 = scmp.ne.s32.totalorder %s104, %s105
    %p116 = scmp.eq.s32.totalorder %s14, 0
    %p117 = por %p115, %p116
    %p118 = scmp.ne.s32.totalorder %s104, %s105
    %p119 = scmp.eq.s32.totalorder %s15, 1
    %p120 = por %p118, %p119
    %p122 = scmp.ne.s32.totalorder %s105, %s121
    %p123 = scmp.eq.s32.totalorder %s15, 0
    %p124 = por %p122, %p123
    %p125 = scmp.le.s32.totalorder 1, %s9
    %p126 = scmp.lt.s32.totalorder %s9, 3
    %p127 = pnand %p125, %p126
    %p128 = pneg %p127
    // Predicated region
    $region9: #{generator_forward.15} parent=5 // pred_check
      _
    $region10: #{generator_forward.15} parent=5 // pred_check_branch
      %130 = sbr.rel (%p127) target = $region12
    $region11: #{generator_forward.15} parent=5 // pred_region
      %s131 = ssub.s32 %s9, 1
      // Predicated region
      $region13: #{generator_forward.15} parent=11 // pred_check
        %p132 = pneg %p47
      $region14: #{generator_forward.15} parent=11 // pred_check_branch
        %134 = sbr.rel (%p132) target = $region16
      $region15: #{generator_forward.15} parent=11 // pred_region
        %s135 = smul.u32 64, %s19
        %p136 = scmp.lt.s32.totalorder %s135, 63
        %s137 = scalar_select %p136, %s135, 63
        %s138 = smul.addr %s137, 8
        %s139 = scalar_lea.vmem %s0, %s138
        %s140 = smul.u32 64, %s19
      $region16: #{generator_forward.15} parent=11 // pred_fallthru
        _
      // Predicated region
      $region17: #{generator_forward.15} parent=11 // pred_check
        %p141 = pneg %p68
      $region18: #{generator_forward.15} parent=11 // pred_check_branch
        %143 = sbr.rel (%p141) target = $region20
      $region19: #{generator_forward.15} parent=11 // pred_region
        _
      $region20: #{generator_forward.15} parent=11 // pred_fallthru
        _
      // Predicated region
      $region21: #{generator_forward.15} parent=11 // pred_check
        %p144 = pneg %p89
      $region22: #{generator_forward.15} parent=11 // pred_check_branch
        %146 = sbr.rel (%p144) target = $region24
      $region23: #{generator_forward.15} parent=11 // pred_region
        _
      $region24: #{generator_forward.15} parent=11 // pred_fallthru
        _
    $region12: #{generator_forward.15} parent=5 // pred_fallthru
      _
    %p147 = scmp.lt.s32.totalorder %s9, 2
    // Predicated region
    $region25: #{generator_forward.15} parent=5 // pred_check
      %p148 = pneg %p147
    $region26: #{generator_forward.15} parent=5 // pred_check_branch
      %150 = sbr.rel (%p148) target = $region28
    $region27: #{generator_forward.15} parent=5 // pred_region
      _
    $region28: #{generator_forward.15} parent=5 // pred_fallthru
      _
    %p151 = scmp.le.s32.totalorder 1, %s9
    %p152 = scmp.lt.s32.totalorder %s9, 3
    %p153 = pnand %p151, %p152
    %p154 = pneg %p153
    // Predicated region
    $region29: #{generator_forward.15} parent=5 // pred_check
      _
    $region30: #{generator_forward.15} parent=5 // pred_check_branch
      %156 = sbr.rel (%p153) target = $region32
    $region31: #{generator_forward.15} parent=5 // pred_region
      %s157 = ssub.s32 %s9, 1
      %s158 = smul.u32 64, %s19
      %p159 = scmp.lt.s32.totalorder %s158, 63
      %s160 = scalar_select %p159, %s158, 63
      %s161 = smul.addr %s160, 8
      %s162 = scalar_lea.vmem %s0, %s161
      %p163 = pneg %p47
      %p164 = pneg %p44
      %p165 = pneg %p68
      %p166 = pneg %p65
      %p167 = pneg %p89
      %p168 = pneg %p86
      %p169 = pneg %p117
      %p170 = pneg %p114
      %s171 = smul.u32 %s19, %s18
      %s172 = smul.u32 64, %s171
      %p173 = scmp.lt.s32.totalorder %s172, 63
      %s174 = scalar_select %p173, %s172, 63
      %s175 = smul.addr %s174, 4
      %s176 = scalar_lea.vmem %s3, %s175
      %s177 = smul.u32 64, %s19
      %p178 = scmp.lt.s32.totalorder %s177, 63
      %s179 = scalar_select %p178, %s177, 63
      %s180 = smul.addr %s179, 8
      %s181 = scalar_lea.vmem %s0, %s180
      %s182 = smul.u32 64, %s19
      %s183 = smul.u32 %s19, %s18
      %s184 = smul.u32 64, %s183
      %p185 = scmp.lt.s32.totalorder %s184, 63
      %s186 = scalar_select %p185, %s184, 63
      %s187 = smul.addr %s186, 4
      %s188 = scalar_lea.vmem %s3, %s187
      %s189 = smul.u32 %s19, %s18
      %s190 = smul.u32 64, %s189
      %p191 = scmp.eq.s32.totalorder %s18, 0
      %p192 = scmp.eq.s32.totalorder %s19, 0
      %p193 = pnand %p191, %p192
      %p194 = pneg %p193
      // Predicated region
      $region33: #{generator_forward.15} parent=31 // pred_check
        _
      $region34: #{generator_forward.15} parent=31 // pred_check_branch
        %196 = sbr.rel (%p193) target = $region36
      $region35: #{generator_forward.15} parent=31 // pred_region
        %vm197 = vcmask 122880
        %198 = vst.msk [vmem:[#allocation2] sm:$0x1] %vm197, 0.0
        %199 = vst.msk [vmem:[#allocation3] sm:$0x1] %vm197, 0.0
      $region36: #{generator_forward.15} parent=31 // pred_fallthru
        _
      // Predicated region
      $region37: #{generator_forward.15} parent=31 // pred_check
        %p200 = pneg %p191
      $region38: #{generator_forward.15} parent=31 // pred_check_branch
        %202 = sbr.rel (%p200) target = $region40
      $region39: #{generator_forward.15} parent=31 // pred_region
        %v203 = vld [vmem:[%s181] sm:$0xff]
        %v204 = vld [vmem:[%s181 + $0x8] sm:$0xff]
        %v205 = vld [vmem:[%s181 + $0x10] sm:$0xff]
        %v206 = vld [vmem:[%s181 + $0x18] sm:$0xff]
        %v207 = vld [vmem:[%s181 + $0x20] sm:$0xff]
        %v208 = vld [vmem:[%s181 + $0x28] sm:$0xff]
        %v209 = vld [vmem:[%s181 + $0x30] sm:$0xff]
        %v210 = vld [vmem:[%s181 + $0x38] sm:$0xff]
        %v211 = vld [vmem:[%s181 + $0x40] sm:$0xff]
        %v212 = vld [vmem:[%s181 + $0x48] sm:$0xff]
        %v213 = vld [vmem:[%s181 + $0x50] sm:$0xff]
        %v214 = vld [vmem:[%s181 + $0x58] sm:$0xff]
        %v215 = vld [vmem:[%s181 + $0x60] sm:$0xff]
        %v216 = vld [vmem:[%s181 + $0x68] sm:$0xff]
        %v217 = vld [vmem:[%s181 + $0x70] sm:$0xff]
        %v218 = vld [vmem:[%s181 + $0x78] sm:$0xff]
        %v219 = vld [vmem:[%s181 + $0x80] sm:$0xff]
        %v220 = vld [vmem:[%s181 + $0x88] sm:$0xff]
        %v221 = vld [vmem:[%s181 + $0x90] sm:$0xff]
        %v222 = vld [vmem:[%s181 + $0x98] sm:$0xff]
        %v223 = vld [vmem:[%s181 + $0xa0] sm:$0xff]
        %v224 = vld [vmem:[%s181 + $0xa8] sm:$0xff]
        %v225 = vld [vmem:[%s181 + $0xb0] sm:$0xff]
        %v226 = vld [vmem:[%s181 + $0xb8] sm:$0xff]
        %v227 = vld [vmem:[%s181 + $0xc0] sm:$0xff]
        %v228 = vld [vmem:[%s181 + $0xc8] sm:$0xff]
        %v229 = vld [vmem:[%s181 + $0xd0] sm:$0xff]
        %v230 = vld [vmem:[%s181 + $0xd8] sm:$0xff]
        %v231 = vld [vmem:[%s181 + $0xe0] sm:$0xff]
        %v232 = vld [vmem:[%s181 + $0xe8] sm:$0xff]
        %v233 = vld [vmem:[%s181 + $0xf0] sm:$0xff]
        %v234 = vld [vmem:[%s181 + $0xf8] sm:$0xff]
        %v235 = vld [vmem:[%s181 + $0x100] sm:$0xff]
        %v236 = vld [vmem:[%s181 + $0x108] sm:$0xff]
        %v237 = vld [vmem:[%s181 + $0x110] sm:$0xff]
        %v238 = vld [vmem:[%s181 + $0x118] sm:$0xff]
        %v239 = vld [vmem:[%s181 + $0x120] sm:$0xff]
        %v240 = vld [vmem:[%s181 + $0x128] sm:$0xff]
        %v241 = vld [vmem:[%s181 + $0x130] sm:$0xff]
        %v242 = vld [vmem:[%s181 + $0x138] sm:$0xff]
        %v243 = vld [vmem:[%s181 + $0x140] sm:$0xff]
        %v244 = vld [vmem:[%s181 + $0x148] sm:$0xff]
        %v245 = vld [vmem:[%s181 + $0x150] sm:$0xff]
        %v246 = vld [vmem:[%s181 + $0x158] sm:$0xff]
        %v247 = vld [vmem:[%s181 + $0x160] sm:$0xff]
        %v248 = vld [vmem:[%s181 + $0x168] sm:$0xff]
        %v249 = vld [vmem:[%s181 + $0x170] sm:$0xff]
        %v250 = vld [vmem:[%s181 + $0x178] sm:$0xff]
        %v251 = vld [vmem:[%s181 + $0x180] sm:$0xff]
        %v252 = vld [vmem:[%s181 + $0x188] sm:$0xff]
        %v253 = vld [vmem:[%s181 + $0x190] sm:$0xff]
        %v254 = vld [vmem:[%s181 + $0x198] sm:$0xff]
        %v255 = vld [vmem:[%s181 + $0x1a0] sm:$0xff]
        %v256 = vld [vmem:[%s181 + $0x1a8] sm:$0xff]
        %v257 = vld [vmem:[%s181 + $0x1b0] sm:$0xff]
        %v258 = vld [vmem:[%s181 + $0x1b8] sm:$0xff]
        %v259 = vld [vmem:[%s181 + $0x1c0] sm:$0xff]
        %v260 = vld [vmem:[%s181 + $0x1c8] sm:$0xff]
        %v261 = vld [vmem:[%s181 + $0x1d0] sm:$0xff]
        %v262 = vld [vmem:[%s181 + $0x1d8] sm:$0xff]
        %v263 = vld [vmem:[%s181 + $0x1e0] sm:$0xff]
        %v264 = vld [vmem:[%s181 + $0x1e8] sm:$0xff]
        %v265 = vld [vmem:[%s181 + $0x1f0] sm:$0xff]
        %v266 = vld [vmem:[%s181 + $0x1f8] sm:$0xff]
        %v267 = vld [vmem:[#allocation2] sm:$0x1]
        %vm268 = vcmask 130048
        %v269 = vsel %vm268, %v203, 0.0
        %v270 = vsel %vm268, %v204, 0.0
        %v271 = vadd.f32 %v269, %v270
        %v272 = vsel %vm268, %v205, 0.0
        %v273 = vadd.f32 %v271, %v272
        %v274 = vsel %vm268, %v206, 0.0
        %v275 = vadd.f32 %v273, %v274
        %v276 = vsel %vm268, %v207, 0.0
        %v277 = vadd.f32 %v275, %v276
        %v278 = vsel %vm268, %v208, 0.0
        %v279 = vadd.f32 %v277, %v278
        %v280 = vsel %vm268, %v209, 0.0
        %v281 = vadd.f32 %v279, %v280
        %v282 = vsel %vm268, %v210, 0.0
        %v283 = vadd.f32 %v281, %v282
        %v284 = vsel %vm268, %v211, 0.0
        %v285 = vadd.f32 %v283, %v284
        %v286 = vsel %vm268, %v212, 0.0
        %v287 = vadd.f32 %v285, %v286
        %v288 = vsel %vm268, %v213, 0.0
        %v289 = vadd.f32 %v287, %v288
        %v290 = vsel %vm268, %v214, 0.0
        %v291 = vadd.f32 %v289, %v290
        %v292 = vsel %vm268, %v215, 0.0
        %v293 = vadd.f32 %v291, %v292
        %v294 = vsel %vm268, %v216, 0.0
        %v295 = vadd.f32 %v293, %v294
        %v296 = vsel %vm268, %v217, 0.0
        %v297 = vadd.f32 %v295, %v296
        %v298 = vsel %vm268, %v218, 0.0
        %v299 = vadd.f32 %v297, %v298
        %v300 = vsel %vm268, %v219, 0.0
        %v301 = vadd.f32 %v299, %v300
        %v302 = vsel %vm268, %v220, 0.0
        %v303 = vadd.f32 %v301, %v302
        %v304 = vsel %vm268, %v221, 0.0
        %v305 = vadd.f32 %v303, %v304
        %v306 = vsel %vm268, %v222, 0.0
        %v307 = vadd.f32 %v305, %v306
        %v308 = vsel %vm268, %v223, 0.0
        %v309 = vadd.f32 %v307, %v308
        %v310 = vsel %vm268, %v224, 0.0
        %v311 = vadd.f32 %v309, %v310
        %v312 = vsel %vm268, %v225, 0.0
        %v313 = vadd.f32 %v311, %v312
        %v314 = vsel %vm268, %v226, 0.0
        %v315 = vadd.f32 %v313, %v314
        %v316 = vsel %vm268, %v227, 0.0
        %v317 = vadd.f32 %v315, %v316
        %v318 = vsel %vm268, %v228, 0.0
        %v319 = vadd.f32 %v317, %v318
        %v320 = vsel %vm268, %v229, 0.0
        %v321 = vadd.f32 %v319, %v320
        %v322 = vsel %vm268, %v230, 0.0
        %v323 = vadd.f32 %v321, %v322
        %v324 = vsel %vm268, %v231, 0.0
        %v325 = vadd.f32 %v323, %v324
        %v326 = vsel %vm268, %v232, 0.0
        %v327 = vadd.f32 %v325, %v326
        %v328 = vsel %vm268, %v233, 0.0
        %v329 = vadd.f32 %v327, %v328
        %v330 = vsel %vm268, %v234, 0.0
        %v331 = vadd.f32 %v329, %v330
        %v332 = vsel %vm268, %v235, 0.0
        %v333 = vadd.f32 %v331, %v332
        %v334 = vsel %vm268, %v236, 0.0
        %v335 = vadd.f32 %v333, %v334
        %v336 = vsel %vm268, %v237, 0.0
        %v337 = vadd.f32 %v335, %v336
        %v338 = vsel %vm268, %v238, 0.0
        %v339 = vadd.f32 %v337, %v338
        %v340 = vsel %vm268, %v239, 0.0
        %v341 = vadd.f32 %v339, %v340
        %v342 = vsel %vm268, %v240, 0.0
        %v343 = vadd.f32 %v341, %v342
        %v344 = vsel %vm268, %v241, 0.0
        %v345 = vadd.f32 %v343, %v344
        %v346 = vsel %vm268, %v242, 0.0
        %v347 = vadd.f32 %v345, %v346
        %v348 = vsel %vm268, %v243, 0.0
        %v349 = vadd.f32 %v347, %v348
        %v350 = vsel %vm268, %v244, 0.0
        %v351 = vadd.f32 %v349, %v350
        %v352 = vsel %vm268, %v245, 0.0
        %v353 = vadd.f32 %v351, %v352
        %v354 = vsel %vm268, %v246, 0.0
        %v355 = vadd.f32 %v353, %v354
        %v356 = vsel %vm268, %v247, 0.0
        %v357 = vadd.f32 %v355, %v356
        %v358 = vsel %vm268, %v248, 0.0
        %v359 = vadd.f32 %v357, %v358
        %v360 = vsel %vm268, %v249, 0.0
        %v361 = vadd.f32 %v359, %v360
        %v362 = vsel %vm268, %v250, 0.0
        %v363 = vadd.f32 %v361, %v362
        %v364 = vsel %vm268, %v251, 0.0
        %v365 = vadd.f32 %v363, %v364
        %v366 = vsel %vm268, %v252, 0.0
        %v367 = vadd.f32 %v365, %v366
        %v368 = vsel %vm268, %v253, 0.0
        %v369 = vadd.f32 %v367, %v368
        %v370 = vsel %vm268, %v254, 0.0
        %v371 = vadd.f32 %v369, %v370
        %v372 = vsel %vm268, %v255, 0.0
        %v373 = vadd.f32 %v371, %v372
        %v374 = vsel %vm268, %v256, 0.0
        %v375 = vadd.f32 %v373, %v374
        %v376 = vsel %vm268, %v257, 0.0
        %v377 = vadd.f32 %v375, %v376
        %v378 = vsel %vm268, %v258, 0.0
        %v379 = vadd.f32 %v377, %v378
        %v380 = vsel %vm268, %v259, 0.0
        %v381 = vadd.f32 %v379, %v380
        %v382 = vsel %vm268, %v260, 0.0
        %v383 = vadd.f32 %v381, %v382
        %v384 = vsel %vm268, %v261, 0.0
        %v385 = vadd.f32 %v383, %v384
        %v386 = vsel %vm268, %v262, 0.0
        %v387 = vadd.f32 %v385, %v386
        %v388 = vsel %vm268, %v263, 0.0
        %v389 = vadd.f32 %v387, %v388
        %v390 = vsel %vm268, %v264, 0.0
        %v391 = vadd.f32 %v389, %v390
        %v392 = vsel %vm268, %v265, 0.0
        %v393 = vadd.f32 %v391, %v392
        %v394 = vsel %vm268, %v266, 0.0
        %v395 = vadd.f32 %v393, %v394
        %v396 = vrot.slane %v395, 4
        %v397 = vadd.f32 %v395, %v396
        %v398 = vrot.slane %v397, 2
        %v399 = vadd.f32 %v397, %v398
        %v400 = vrot.slane %v399, 1
        %v401 = vadd.f32 %v399, %v400
        %v402 = vadd.f32 %v267, %v401
        %vm403 = vcmask 122880
        %404 = vst.msk [vmem:[#allocation2] sm:$0x1] %vm403, %v402
        %v405 = vld [vmem:[#allocation3] sm:$0x1]
        %v406 = vmul.f32 %v203, %v203
        %v407 = vmul.f32 %v204, %v204
        %v408 = vmul.f32 %v205, %v205
        %v409 = vmul.f32 %v206, %v206
        %v410 = vmul.f32 %v207, %v207
        %v411 = vmul.f32 %v208, %v208
        %v412 = vmul.f32 %v209, %v209
        %v413 = vmul.f32 %v210, %v210
        %v414 = vmul.f32 %v211, %v211
        %v415 = vmul.f32 %v212, %v212
        %v416 = vmul.f32 %v213, %v213
        %v417 = vmul.f32 %v214, %v214
        %v418 = vmul.f32 %v215, %v215
        %v419 = vmul.f32 %v216, %v216
        %v420 = vmul.f32 %v217, %v217
        %v421 = vmul.f32 %v218, %v218
        %v422 = vmul.f32 %v219, %v219
        %v423 = vmul.f32 %v220, %v220
        %v424 = vmul.f32 %v221, %v221
        %v425 = vmul.f32 %v222, %v222
        %v426 = vmul.f32 %v223, %v223
        %v427 = vmul.f32 %v224, %v224
        %v428 = vmul.f32 %v225, %v225
        %v429 = vmul.f32 %v226, %v226
        %v430 = vmul.f32 %v227, %v227
        %v431 = vmul.f32 %v228, %v228
        %v432 = vmul.f32 %v229, %v229
        %v433 = vmul.f32 %v230, %v230
        %v434 = vmul.f32 %v231, %v231
        %v435 = vmul.f32 %v232, %v232
        %v436 = vmul.f32 %v233, %v233
        %v437 = vmul.f32 %v234, %v234
        %v438 = vmul.f32 %v235, %v235
        %v439 = vmul.f32 %v236, %v236
        %v440 = vmul.f32 %v237, %v237
        %v441 = vmul.f32 %v238, %v238
        %v442 = vmul.f32 %v239, %v239
        %v443 = vmul.f32 %v240, %v240
        %v444 = vmul.f32 %v241, %v241
        %v445 = vmul.f32 %v242, %v242
        %v446 = vmul.f32 %v243, %v243
        %v447 = vmul.f32 %v244, %v244
        %v448 = vmul.f32 %v245, %v245
        %v449 = vmul.f32 %v246, %v246
        %v450 = vmul.f32 %v247, %v247
        %v451 = vmul.f32 %v248, %v248
        %v452 = vmul.f32 %v249, %v249
        %v453 = vmul.f32 %v250, %v250
        %v454 = vmul.f32 %v251, %v251
        %v455 = vmul.f32 %v252, %v252
        %v456 = vmul.f32 %v253, %v253
        %v457 = vmul.f32 %v254, %v254
        %v458 = vmul.f32 %v255, %v255
        %v459 = vmul.f32 %v256, %v256
        %v460 = vmul.f32 %v257, %v257
        %v461 = vmul.f32 %v258, %v258
        %v462 = vmul.f32 %v259, %v259
        %v463 = vmul.f32 %v260, %v260
        %v464 = vmul.f32 %v261, %v261
        %v465 = vmul.f32 %v262, %v262
        %v466 = vmul.f32 %v263, %v263
        %v467 = vmul.f32 %v264, %v264
        %v468 = vmul.f32 %v265, %v265
        %v469 = vmul.f32 %v266, %v266
        %v470 = vsel %vm268, %v406, 0.0
        %v471 = vsel %vm268, %v407, 0.0
        %v472 = vadd.f32 %v470, %v471
        %v473 = vsel %vm268, %v408, 0.0
        %v474 = vadd.f32 %v472, %v473
        %v475 = vsel %vm268, %v409, 0.0
        %v476 = vadd.f32 %v474, %v475
        %v477 = vsel %vm268, %v410, 0.0
        %v478 = vadd.f32 %v476, %v477
        %v479 = vsel %vm268, %v411, 0.0
        %v480 = vadd.f32 %v478, %v479
        %v481 = vsel %vm268, %v412, 0.0
        %v482 = vadd.f32 %v480, %v481
        %v483 = vsel %vm268, %v413, 0.0
        %v484 = vadd.f32 %v482, %v483
        %v485 = vsel %vm268, %v414, 0.0
        %v486 = vadd.f32 %v484, %v485
        %v487 = vsel %vm268, %v415, 0.0
        %v488 = vadd.f32 %v486, %v487
        %v489 = vsel %vm268, %v416, 0.0
        %v490 = vadd.f32 %v488, %v489
        %v491 = vsel %vm268, %v417, 0.0
        %v492 = vadd.f32 %v490, %v491
        %v493 = vsel %vm268, %v418, 0.0
        %v494 = vadd.f32 %v492, %v493
        %v495 = vsel %vm268, %v419, 0.0
        %v496 = vadd.f32 %v494, %v495
        %v497 = vsel %vm268, %v420, 0.0
        %v498 = vadd.f32 %v496, %v497
        %v499 = vsel %vm268, %v421, 0.0
        %v500 = vadd.f32 %v498, %v499
        %v501 = vsel %vm268, %v422, 0.0
        %v502 = vadd.f32 %v500, %v501
        %v503 = vsel %vm268, %v423, 0.0
        %v504 = vadd.f32 %v502, %v503
        %v505 = vsel %vm268, %v424, 0.0
        %v506 = vadd.f32 %v504, %v505
        %v507 = vsel %vm268, %v425, 0.0
        %v508 = vadd.f32 %v506, %v507
        %v509 = vsel %vm268, %v426, 0.0
        %v510 = vadd.f32 %v508, %v509
        %v511 = vsel %vm268, %v427, 0.0
        %v512 = vadd.f32 %v510, %v511
        %v513 = vsel %vm268, %v428, 0.0
        %v514 = vadd.f32 %v512, %v513
        %v515 = vsel %vm268, %v429, 0.0
        %v516 = vadd.f32 %v514, %v515
        %v517 = vsel %vm268, %v430, 0.0
        %v518 = vadd.f32 %v516, %v517
        %v519 = vsel %vm268, %v431, 0.0
        %v520 = vadd.f32 %v518, %v519
        %v521 = vsel %vm268, %v432, 0.0
        %v522 = vadd.f32 %v520, %v521
        %v523 = vsel %vm268, %v433, 0.0
        %v524 = vadd.f32 %v522, %v523
        %v525 = vsel %vm268, %v434, 0.0
        %v526 = vadd.f32 %v524, %v525
        %v527 = vsel %vm268, %v435, 0.0
        %v528 = vadd.f32 %v526, %v527
        %v529 = vsel %vm268, %v436, 0.0
        %v530 = vadd.f32 %v528, %v529
        %v531 = vsel %vm268, %v437, 0.0
        %v532 = vadd.f32 %v530, %v531
        %v533 = vsel %vm268, %v438, 0.0
        %v534 = vadd.f32 %v532, %v533
        %v535 = vsel %vm268, %v439, 0.0
        %v536 = vadd.f32 %v534, %v535
        %v537 = vsel %vm268, %v440, 0.0
        %v538 = vadd.f32 %v536, %v537
        %v539 = vsel %vm268, %v441, 0.0
        %v540 = vadd.f32 %v538, %v539
        %v541 = vsel %vm268, %v442, 0.0
        %v542 = vadd.f32 %v540, %v541
        %v543 = vsel %vm268, %v443, 0.0
        %v544 = vadd.f32 %v542, %v543
        %v545 = vsel %vm268, %v444, 0.0
        %v546 = vadd.f32 %v544, %v545
        %v547 = vsel %vm268, %v445, 0.0
        %v548 = vadd.f32 %v546, %v547
        %v549 = vsel %vm268, %v446, 0.0
        %v550 = vadd.f32 %v548, %v549
        %v551 = vsel %vm268, %v447, 0.0
        %v552 = vadd.f32 %v550, %v551
        %v553 = vsel %vm268, %v448, 0.0
        %v554 = vadd.f32 %v552, %v553
        %v555 = vsel %vm268, %v449, 0.0
        %v556 = vadd.f32 %v554, %v555
        %v557 = vsel %vm268, %v450, 0.0
        %v558 = vadd.f32 %v556, %v557
        %v559 = vsel %vm268, %v451, 0.0
        %v560 = vadd.f32 %v558, %v559
        %v561 = vsel %vm268, %v452, 0.0
        %v562 = vadd.f32 %v560, %v561
        %v563 = vsel %vm268, %v453, 0.0
        %v564 = vadd.f32 %v562, %v563
        %v565 = vsel %vm268, %v454, 0.0
        %v566 = vadd.f32 %v564, %v565
        %v567 = vsel %vm268, %v455, 0.0
        %v568 = vadd.f32 %v566, %v567
        %v569 = vsel %vm268, %v456, 0.0
        %v570 = vadd.f32 %v568, %v569
        %v571 = vsel %vm268, %v457, 0.0
        %v572 = vadd.f32 %v570, %v571
        %v573 = vsel %vm268, %v458, 0.0
        %v574 = vadd.f32 %v572, %v573
        %v575 = vsel %vm268, %v459, 0.0
        %v576 = vadd.f32 %v574, %v575
        %v577 = vsel %vm268, %v460, 0.0
        %v578 = vadd.f32 %v576, %v577
        %v579 = vsel %vm268, %v461, 0.0
        %v580 = vadd.f32 %v578, %v579
        %v581 = vsel %vm268, %v462, 0.0
        %v582 = vadd.f32 %v580, %v581
        %v583 = vsel %vm268, %v463, 0.0
        %v584 = vadd.f32 %v582, %v583
        %v585 = vsel %vm268, %v464, 0.0
        %v586 = vadd.f32 %v584, %v585
        %v587 = vsel %vm268, %v465, 0.0
        %v588 = vadd.f32 %v586, %v587
        %v589 = vsel %vm268, %v466, 0.0
        %v590 = vadd.f32 %v588, %v589
        %v591 = vsel %vm268, %v467, 0.0
        %v592 = vadd.f32 %v590, %v591
        %v593 = vsel %vm268, %v468, 0.0
        %v594 = vadd.f32 %v592, %v593
        %v595 = vsel %vm268, %v469, 0.0
        %v596 = vadd.f32 %v594, %v595
        %v597 = vrot.slane %v596, 4
        %v598 = vadd.f32 %v596, %v597
        %v599 = vrot.slane %v598, 2
        %v600 = vadd.f32 %v598, %v599
        %v601 = vrot.slane %v600, 1
        %v602 = vadd.f32 %v600, %v601
        %v603 = vadd.f32 %v405, %v602
        %604 = vst.msk [vmem:[#allocation3] sm:$0x1] %vm403, %v603
      $region40: #{generator_forward.15} parent=31 // pred_fallthru
        _
      %p605 = scmp.eq.s32.totalorder %s18, 1
      // Predicated region
      $region41: #{generator_forward.15} parent=31 // pred_check
        %p606 = pneg %p605
      $region42: #{generator_forward.15} parent=31 // pred_check_branch
        %608 = sbr.rel (%p606) target = $region44
      $region43: #{generator_forward.15} parent=31 // pred_region
        %v609 = vld [vmem:[#allocation2] sm:$0x1]
        %v610 = vmul.f32 %v609, 0.001953125
        %v611 = vld [vmem:[#allocation3] sm:$0x1]
        %v612 = vmul.f32 %v611, 0.001953125
        %v613 = vmul.f32 %v610, %v610
        %v614 = vsub.f32 %v612, %v613
        %v615 = vld [vmem:[%s1] sm:$0x1]
        %v616 = vadd.f32 %v614, 1e-05
        %v617 = vrsqrt.pop %v616
        %v618 = vmul.f32 %v615, %v617
        %v619 = vld [vmem:[%s2] sm:$0x1]
        %v620 = vmul.f32 %v610, %v618
        %v621 = vsub.f32 %v619, %v620
        %v622 = vld [vmem:[%s181] sm:$0xff]
        %v623 = vld [vmem:[%s181 + $0x8] sm:$0xff]
        %v624 = vld [vmem:[%s181 + $0x10] sm:$0xff]
        %v625 = vld [vmem:[%s181 + $0x18] sm:$0xff]
        %v626 = vld [vmem:[%s181 + $0x20] sm:$0xff]
        %v627 = vld [vmem:[%s181 + $0x28] sm:$0xff]
        %v628 = vld [vmem:[%s181 + $0x30] sm:$0xff]
        %v629 = vld [vmem:[%s181 + $0x38] sm:$0xff]
        %v630 = vld [vmem:[%s181 + $0x40] sm:$0xff]
        %v631 = vld [vmem:[%s181 + $0x48] sm:$0xff]
        %v632 = vld [vmem:[%s181 + $0x50] sm:$0xff]
        %v633 = vld [vmem:[%s181 + $0x58] sm:$0xff]
        %v634 = vld [vmem:[%s181 + $0x60] sm:$0xff]
        %v635 = vld [vmem:[%s181 + $0x68] sm:$0xff]
        %v636 = vld [vmem:[%s181 + $0x70] sm:$0xff]
        %v637 = vld [vmem:[%s181 + $0x78] sm:$0xff]
        %v638 = vld [vmem:[%s181 + $0x80] sm:$0xff]
        %v639 = vld [vmem:[%s181 + $0x88] sm:$0xff]
        %v640 = vld [vmem:[%s181 + $0x90] sm:$0xff]
        %v641 = vld [vmem:[%s181 + $0x98] sm:$0xff]
        %v642 = vld [vmem:[%s181 + $0xa0] sm:$0xff]
        %v643 = vld [vmem:[%s181 + $0xa8] sm:$0xff]
        %v644 = vld [vmem:[%s181 + $0xb0] sm:$0xff]
        %v645 = vld [vmem:[%s181 + $0xb8] sm:$0xff]
        %v646 = vld [vmem:[%s181 + $0xc0] sm:$0xff]
        %v647 = vld [vmem:[%s181 + $0xc8] sm:$0xff]
        %v648 = vld [vmem:[%s181 + $0xd0] sm:$0xff]
        %v649 = vld [vmem:[%s181 + $0xd8] sm:$0xff]
        %v650 = vld [vmem:[%s181 + $0xe0] sm:$0xff]
        %v651 = vld [vmem:[%s181 + $0xe8] sm:$0xff]
        %v652 = vld [vmem:[%s181 + $0xf0] sm:$0xff]
        %v653 = vld [vmem:[%s181 + $0xf8] sm:$0xff]
        %v654 = vld [vmem:[%s181 + $0x100] sm:$0xff]
        %v655 = vld [vmem:[%s181 + $0x108] sm:$0xff]
        %v656 = vld [vmem:[%s181 + $0x110] sm:$0xff]
        %v657 = vld [vmem:[%s181 + $0x118] sm:$0xff]
        %v658 = vld [vmem:[%s181 + $0x120] sm:$0xff]
        %v659 = vld [vmem:[%s181 + $0x128] sm:$0xff]
        %v660 = vld [vmem:[%s181 + $0x130] sm:$0xff]
        %v661 = vld [vmem:[%s181 + $0x138] sm:$0xff]
        %v662 = vld [vmem:[%s181 + $0x140] sm:$0xff]
        %v663 = vld [vmem:[%s181 + $0x148] sm:$0xff]
        %v664 = vld [vmem:[%s181 + $0x150] sm:$0xff]
        %v665 = vld [vmem:[%s181 + $0x158] sm:$0xff]
        %v666 = vld [vmem:[%s181 + $0x160] sm:$0xff]
        %v667 = vld [vmem:[%s181 + $0x168] sm:$0xff]
        %v668 = vld [vmem:[%s181 + $0x170] sm:$0xff]
        %v669 = vld [vmem:[%s181 + $0x178] sm:$0xff]
        %v670 = vld [vmem:[%s181 + $0x180] sm:$0xff]
        %v671 = vld [vmem:[%s181 + $0x188] sm:$0xff]
        %v672 = vld [vmem:[%s181 + $0x190] sm:$0xff]
        %v673 = vld [vmem:[%s181 + $0x198] sm:$0xff]
        %v674 = vld [vmem:[%s181 + $0x1a0] sm:$0xff]
        %v675 = vld [vmem:[%s181 + $0x1a8] sm:$0xff]
        %v676 = vld [vmem:[%s181 + $0x1b0] sm:$0xff]
        %v677 = vld [vmem:[%s181 + $0x1b8] sm:$0xff]
        %v678 = vld [vmem:[%s181 + $0x1c0] sm:$0xff]
        %v679 = vld [vmem:[%s181 + $0x1c8] sm:$0xff]
        %v680 = vld [vmem:[%s181 + $0x1d0] sm:$0xff]
        %v681 = vld [vmem:[%s181 + $0x1d8] sm:$0xff]
        %v682 = vld [vmem:[%s181 + $0x1e0] sm:$0xff]
        %v683 = vld [vmem:[%s181 + $0x1e8] sm:$0xff]
        %v684 = vld [vmem:[%s181 + $0x1f0] sm:$0xff]
        %v685 = vld [vmem:[%s181 + $0x1f8] sm:$0xff]
        %v687 = vlaneseq
        %v688 = vshrl.u32 %v687, 7
        %v689 = vsub.s32 0, %v688
        %v690 = vrot.slane %v618, %v689
        %v692 = vmul.f32 %v622, %v690
        %v693 = vmul.f32 %v623, %v690
        %v694 = vmul.f32 %v624, %v690
        %v695 = vmul.f32 %v625, %v690
        %v696 = vmul.f32 %v626, %v690
        %v697 = vmul.f32 %v627, %v690
        %v698 = vmul.f32 %v628, %v690
        %v699 = vmul.f32 %v629, %v690
        %v700 = vmul.f32 %v630, %v690
        %v701 = vmul.f32 %v631, %v690
        %v702 = vmul.f32 %v632, %v690
        %v703 = vmul.f32 %v633, %v690
        %v704 = vmul.f32 %v634, %v690
        %v705 = vmul.f32 %v635, %v690
        %v706 = vmul.f32 %v636, %v690
        %v707 = vmul.f32 %v637, %v690
        %v708 = vmul.f32 %v638, %v690
        %v709 = vmul.f32 %v639, %v690
        %v710 = vmul.f32 %v640, %v690
        %v711 = vmul.f32 %v641, %v690
        %v712 = vmul.f32 %v642, %v690
        %v713 = vmul.f32 %v643, %v690
        %v714 = vmul.f32 %v644, %v690
        %v715 = vmul.f32 %v645, %v690
        %v716 = vmul.f32 %v646, %v690
        %v717 = vmul.f32 %v647, %v690
        %v718 = vmul.f32 %v648, %v690
        %v719 = vmul.f32 %v649, %v690
        %v720 = vmul.f32 %v650, %v690
        %v721 = vmul.f32 %v651, %v690
        %v722 = vmul.f32 %v652, %v690
        %v723 = vmul.f32 %v653, %v690
        %v724 = vmul.f32 %v654, %v690
        %v725 = vmul.f32 %v655, %v690
        %v726 = vmul.f32 %v656, %v690
        %v727 = vmul.f32 %v657, %v690
        %v728 = vmul.f32 %v658, %v690
        %v729 = vmul.f32 %v659, %v690
        %v730 = vmul.f32 %v660, %v690
        %v731 = vmul.f32 %v661, %v690
        %v732 = vmul.f32 %v662, %v690
        %v733 = vmul.f32 %v663, %v690
        %v734 = vmul.f32 %v664, %v690
        %v735 = vmul.f32 %v665, %v690
        %v736 = vmul.f32 %v666, %v690
        %v737 = vmul.f32 %v667, %v690
        %v738 = vmul.f32 %v668, %v690
        %v739 = vmul.f32 %v669, %v690
        %v740 = vmul.f32 %v670, %v690
        %v741 = vmul.f32 %v671, %v690
        %v742 = vmul.f32 %v672, %v690
        %v743 = vmul.f32 %v673, %v690
        %v744 = vmul.f32 %v674, %v690
        %v745 = vmul.f32 %v675, %v690
        %v746 = vmul.f32 %v676, %v690
        %v747 = vmul.f32 %v677, %v690
        %v748 = vmul.f32 %v678, %v690
        %v749 = vmul.f32 %v679, %v690
        %v750 = vmul.f32 %v680, %v690
        %v751 = vmul.f32 %v681, %v690
        %v752 = vmul.f32 %v682, %v690
        %v753 = vmul.f32 %v683, %v690
        %v754 = vmul.f32 %v684, %v690
        %v755 = vmul.f32 %v685, %v690
        %v757 = vlaneseq
        %v758 = vshrl.u32 %v757, 7
        %v759 = vsub.s32 0, %v758
        %v760 = vrot.slane %v621, %v759
        %v762 = vadd.f32 %v692, %v760
        %v763 = vadd.f32 %v693, %v760
        %v764 = vadd.f32 %v694, %v760
        %v765 = vadd.f32 %v695, %v760
        %v766 = vadd.f32 %v696, %v760
        %v767 = vadd.f32 %v697, %v760
        %v768 = vadd.f32 %v698, %v760
        %v769 = vadd.f32 %v699, %v760
        %v770 = vadd.f32 %v700, %v760
        %v771 = vadd.f32 %v701, %v760
        %v772 = vadd.f32 %v702, %v760
        %v773 = vadd.f32 %v703, %v760
        %v774 = vadd.f32 %v704, %v760
        %v775 = vadd.f32 %v705, %v760
        %v776 = vadd.f32 %v706, %v760
        %v777 = vadd.f32 %v707, %v760
        %v778 = vadd.f32 %v708, %v760
        %v779 = vadd.f32 %v709, %v760
        %v780 = vadd.f32 %v710, %v760
        %v781 = vadd.f32 %v711, %v760
        %v782 = vadd.f32 %v712, %v760
        %v783 = vadd.f32 %v713, %v760
        %v784 = vadd.f32 %v714, %v760
        %v785 = vadd.f32 %v715, %v760
        %v786 = vadd.f32 %v716, %v760
        %v787 = vadd.f32 %v717, %v760
        %v788 = vadd.f32 %v718, %v760
        %v789 = vadd.f32 %v719, %v760
        %v790 = vadd.f32 %v720, %v760
        %v791 = vadd.f32 %v721, %v760
        %v792 = vadd.f32 %v722, %v760
        %v793 = vadd.f32 %v723, %v760
        %v794 = vadd.f32 %v724, %v760
        %v795 = vadd.f32 %v725, %v760
        %v796 = vadd.f32 %v726, %v760
        %v797 = vadd.f32 %v727, %v760
        %v798 = vadd.f32 %v728, %v760
        %v799 = vadd.f32 %v729, %v760
        %v800 = vadd.f32 %v730, %v760
        %v801 = vadd.f32 %v731, %v760
        %v802 = vadd.f32 %v732, %v760
        %v803 = vadd.f32 %v733, %v760
        %v804 = vadd.f32 %v734, %v760
        %v805 = vadd.f32 %v735, %v760
        %v806 = vadd.f32 %v736, %v760
        %v807 = vadd.f32 %v737, %v760
        %v808 = vadd.f32 %v738, %v760
        %v809 = vadd.f32 %v739, %v760
        %v810 = vadd.f32 %v740, %v760
        %v811 = vadd.f32 %v741, %v760
        %v812 = vadd.f32 %v742, %v760
        %v813 = vadd.f32 %v743, %v760
        %v814 = vadd.f32 %v744, %v760
        %v815 = vadd.f32 %v745, %v760
        %v816 = vadd.f32 %v746, %v760
        %v817 = vadd.f32 %v747, %v760
        %v818 = vadd.f32 %v748, %v760
        %v819 = vadd.f32 %v749, %v760
        %v820 = vadd.f32 %v750, %v760
        %v821 = vadd.f32 %v751, %v760
        %v822 = vadd.f32 %v752, %v760
        %v823 = vadd.f32 %v753, %v760
        %v824 = vadd.f32 %v754, %v760
        %v825 = vadd.f32 %v755, %v760
        %v826 = vmax.f32 %v762, 0.0
        %v827 = vmax.f32 %v763, 0.0
        %v828 = vmax.f32 %v764, 0.0
        %v829 = vmax.f32 %v765, 0.0
        %v830 = vmax.f32 %v766, 0.0
        %v831 = vmax.f32 %v767, 0.0
        %v832 = vmax.f32 %v768, 0.0
        %v833 = vmax.f32 %v769, 0.0
        %v834 = vmax.f32 %v770, 0.0
        %v835 = vmax.f32 %v771, 0.0
        %v836 = vmax.f32 %v772, 0.0
        %v837 = vmax.f32 %v773, 0.0
        %v838 = vmax.f32 %v774, 0.0
        %v839 = vmax.f32 %v775, 0.0
        %v840 = vmax.f32 %v776, 0.0
        %v841 = vmax.f32 %v777, 0.0
        %v842 = vmax.f32 %v778, 0.0
        %v843 = vmax.f32 %v779, 0.0
        %v844 = vmax.f32 %v780, 0.0
        %v845 = vmax.f32 %v781, 0.0
        %v846 = vmax.f32 %v782, 0.0
        %v847 = vmax.f32 %v783, 0.0
        %v848 = vmax.f32 %v784, 0.0
        %v849 = vmax.f32 %v785, 0.0
        %v850 = vmax.f32 %v786, 0.0
        %v851 = vmax.f32 %v787, 0.0
        %v852 = vmax.f32 %v788, 0.0
        %v853 = vmax.f32 %v789, 0.0
        %v854 = vmax.f32 %v790, 0.0
        %v855 = vmax.f32 %v791, 0.0
        %v856 = vmax.f32 %v792, 0.0
        %v857 = vmax.f32 %v793, 0.0
        %v858 = vmax.f32 %v794, 0.0
        %v859 = vmax.f32 %v795, 0.0
        %v860 = vmax.f32 %v796, 0.0
        %v861 = vmax.f32 %v797, 0.0
        %v862 = vmax.f32 %v798, 0.0
        %v863 = vmax.f32 %v799, 0.0
        %v864 = vmax.f32 %v800, 0.0
        %v865 = vmax.f32 %v801, 0.0
        %v866 = vmax.f32 %v802, 0.0
        %v867 = vmax.f32 %v803, 0.0
        %v868 = vmax.f32 %v804, 0.0
        %v869 = vmax.f32 %v805, 0.0
        %v870 = vmax.f32 %v806, 0.0
        %v871 = vmax.f32 %v807, 0.0
        %v872 = vmax.f32 %v808, 0.0
        %v873 = vmax.f32 %v809, 0.0
        %v874 = vmax.f32 %v810, 0.0
        %v875 = vmax.f32 %v811, 0.0
        %v876 = vmax.f32 %v812, 0.0
        %v877 = vmax.f32 %v813, 0.0
        %v878 = vmax.f32 %v814, 0.0
        %v879 = vmax.f32 %v815, 0.0
        %v880 = vmax.f32 %v816, 0.0
        %v881 = vmax.f32 %v817, 0.0
        %v882 = vmax.f32 %v818, 0.0
        %v883 = vmax.f32 %v819, 0.0
        %v884 = vmax.f32 %v820, 0.0
        %v885 = vmax.f32 %v821, 0.0
        %v886 = vmax.f32 %v822, 0.0
        %v887 = vmax.f32 %v823, 0.0
        %v888 = vmax.f32 %v824, 0.0
        %v889 = vmax.f32 %v825, 0.0
        %v890 = vpack.c.bf16 %v827, %v826
        %v891 = vpack.c.bf16 %v829, %v828
        %v892 = vpack.c.bf16 %v831, %v830
        %v893 = vpack.c.bf16 %v833, %v832
        %v894 = vpack.c.bf16 %v835, %v834
        %v895 = vpack.c.bf16 %v837, %v836
        %v896 = vpack.c.bf16 %v839, %v838
        %v897 = vpack.c.bf16 %v841, %v840
        %v898 = vpack.c.bf16 %v843, %v842
        %v899 = vpack.c.bf16 %v845, %v844
        %v900 = vpack.c.bf16 %v847, %v846
        %v901 = vpack.c.bf16 %v849, %v848
        %v902 = vpack.c.bf16 %v851, %v850
        %v903 = vpack.c.bf16 %v853, %v852
        %v904 = vpack.c.bf16 %v855, %v854
        %v905 = vpack.c.bf16 %v857, %v856
        %v906 = vpack.c.bf16 %v859, %v858
        %v907 = vpack.c.bf16 %v861, %v860
        %v908 = vpack.c.bf16 %v863, %v862
        %v909 = vpack.c.bf16 %v865, %v864
        %v910 = vpack.c.bf16 %v867, %v866
        %v911 = vpack.c.bf16 %v869, %v868
        %v912 = vpack.c.bf16 %v871, %v870
        %v913 = vpack.c.bf16 %v873, %v872
        %v914 = vpack.c.bf16 %v875, %v874
        %v915 = vpack.c.bf16 %v877, %v876
        %v916 = vpack.c.bf16 %v879, %v878
        %v917 = vpack.c.bf16 %v881, %v880
        %v918 = vpack.c.bf16 %v883, %v882
        %v919 = vpack.c.bf16 %v885, %v884
        %v920 = vpack.c.bf16 %v887, %v886
        %v921 = vpack.c.bf16 %v889, %v888
        %v954 = vunpack.c.l.b16 %v890
        %v955 = vunpack.c.h.b16 %v890
        %v956 = vunpack.c.l.b16 %v891
        %v957 = vunpack.c.h.b16 %v891
        %v958 = vunpack.c.l.b16 %v892
        %v959 = vunpack.c.h.b16 %v892
        %v960 = vunpack.c.l.b16 %v893
        %v961 = vunpack.c.h.b16 %v893
        %v962 = vunpack.c.l.b16 %v894
        %v963 = vunpack.c.h.b16 %v894
        %v964 = vunpack.c.l.b16 %v895
        %v965 = vunpack.c.h.b16 %v895
        %v966 = vunpack.c.l.b16 %v896
        %v967 = vunpack.c.h.b16 %v896
        %v968 = vunpack.c.l.b16 %v897
        %v969 = vunpack.c.h.b16 %v897
        %v970 = vunpack.c.l.b16 %v898
        %v971 = vunpack.c.h.b16 %v898
        %v972 = vunpack.c.l.b16 %v899
        %v973 = vunpack.c.h.b16 %v899
        %v974 = vunpack.c.l.b16 %v900
        %v975 = vunpack.c.h.b16 %v900
        %v976 = vunpack.c.l.b16 %v901
        %v977 = vunpack.c.h.b16 %v901
        %v978 = vunpack.c.l.b16 %v902
        %v979 = vunpack.c.h.b16 %v902
        %v980 = vunpack.c.l.b16 %v903
        %v981 = vunpack.c.h.b16 %v903
        %v982 = vunpack.c.l.b16 %v904
        %v983 = vunpack.c.h.b16 %v904
        %v984 = vunpack.c.l.b16 %v905
        %v985 = vunpack.c.h.b16 %v905
        %v986 = vunpack.c.l.b16 %v906
        %v987 = vunpack.c.h.b16 %v906
        %v988 = vunpack.c.l.b16 %v907
        %v989 = vunpack.c.h.b16 %v907
        %v990 = vunpack.c.l.b16 %v908
        %v991 = vunpack.c.h.b16 %v908
        %v992 = vunpack.c.l.b16 %v909
        %v993 = vunpack.c.h.b16 %v909
        %v994 = vunpack.c.l.b16 %v910
        %v995 = vunpack.c.h.b16 %v910
        %v996 = vunpack.c.l.b16 %v911
        %v997 = vunpack.c.h.b16 %v911
        %v998 = vunpack.c.l.b16 %v912
        %v999 = vunpack.c.h.b16 %v912
        %v1000 = vunpack.c.l.b16 %v913
        %v1001 = vunpack.c.h.b16 %v913
        %v1002 = vunpack.c.l.b16 %v914
        %v1003 = vunpack.c.h.b16 %v914
        %v1004 = vunpack.c.l.b16 %v915
        %v1005 = vunpack.c.h.b16 %v915
        %v1006 = vunpack.c.l.b16 %v916
        %v1007 = vunpack.c.h.b16 %v916
        %v1008 = vunpack.c.l.b16 %v917
        %v1009 = vunpack.c.h.b16 %v917
        %v1010 = vunpack.c.l.b16 %v918
        %v1011 = vunpack.c.h.b16 %v918
        %v1012 = vunpack.c.l.b16 %v919
        %v1013 = vunpack.c.h.b16 %v919
        %v1014 = vunpack.c.l.b16 %v920
        %v1015 = vunpack.c.h.b16 %v920
        %v1016 = vunpack.c.l.b16 %v921
        %v1017 = vunpack.c.h.b16 %v921
        %v1018 = vpack.c.b16 %v954, %v954
        %v1019 = vpack.c.b16 %v955, %v955
        %v1020 = vpack.c.b16 %v956, %v956
        %v1021 = vpack.c.b16 %v957, %v957
        %v1022 = vpack.c.b16 %v958, %v958
        %v1023 = vpack.c.b16 %v959, %v959
        %v1024 = vpack.c.b16 %v960, %v960
        %v1025 = vpack.c.b16 %v961, %v961
        %v1026 = vpack.c.b16 %v962, %v962
        %v1027 = vpack.c.b16 %v963, %v963
        %v1028 = vpack.c.b16 %v964, %v964
        %v1029 = vpack.c.b16 %v965, %v965
        %v1030 = vpack.c.b16 %v966, %v966
        %v1031 = vpack.c.b16 %v967, %v967
        %v1032 = vpack.c.b16 %v968, %v968
        %v1033 = vpack.c.b16 %v969, %v969
        %v1034 = vpack.c.b16 %v970, %v970
        %v1035 = vpack.c.b16 %v971, %v971
        %v1036 = vpack.c.b16 %v972, %v972
        %v1037 = vpack.c.b16 %v973, %v973
        %v1038 = vpack.c.b16 %v974, %v974
        %v1039 = vpack.c.b16 %v975, %v975
        %v1040 = vpack.c.b16 %v976, %v976
        %v1041 = vpack.c.b16 %v977, %v977
        %v1042 = vpack.c.b16 %v978, %v978
        %v1043 = vpack.c.b16 %v979, %v979
        %v1044 = vpack.c.b16 %v980, %v980
        %v1045 = vpack.c.b16 %v981, %v981
        %v1046 = vpack.c.b16 %v982, %v982
        %v1047 = vpack.c.b16 %v983, %v983
        %v1048 = vpack.c.b16 %v984, %v984
        %v1049 = vpack.c.b16 %v985, %v985
        %v1050 = vpack.c.b16 %v986, %v986
        %v1051 = vpack.c.b16 %v987, %v987
        %v1052 = vpack.c.b16 %v988, %v988
        %v1053 = vpack.c.b16 %v989, %v989
        %v1054 = vpack.c.b16 %v990, %v990
        %v1055 = vpack.c.b16 %v991, %v991
        %v1056 = vpack.c.b16 %v992, %v992
        %v1057 = vpack.c.b16 %v993, %v993
        %v1058 = vpack.c.b16 %v994, %v994
        %v1059 = vpack.c.b16 %v995, %v995
        %v1060 = vpack.c.b16 %v996, %v996
        %v1061 = vpack.c.b16 %v997, %v997
        %v1062 = vpack.c.b16 %v998, %v998
        %v1063 = vpack.c.b16 %v999, %v999
        %v1064 = vpack.c.b16 %v1000, %v1000
        %v1065 = vpack.c.b16 %v1001, %v1001
        %v1066 = vpack.c.b16 %v1002, %v1002
        %v1067 = vpack.c.b16 %v1003, %v1003
        %v1068 = vpack.c.b16 %v1004, %v1004
        %v1069 = vpack.c.b16 %v1005, %v1005
        %v1070 = vpack.c.b16 %v1006, %v1006
        %v1071 = vpack.c.b16 %v1007, %v1007
        %v1072 = vpack.c.b16 %v1008, %v1008
        %v1073 = vpack.c.b16 %v1009, %v1009
        %v1074 = vpack.c.b16 %v1010, %v1010
        %v1075 = vpack.c.b16 %v1011, %v1011
        %v1076 = vpack.c.b16 %v1012, %v1012
        %v1077 = vpack.c.b16 %v1013, %v1013
        %v1078 = vpack.c.b16 %v1014, %v1014
        %v1079 = vpack.c.b16 %v1015, %v1015
        %v1080 = vpack.c.b16 %v1016, %v1016
        %v1081 = vpack.c.b16 %v1017, %v1017
        %vm1146 = vcmask 125952
        %1147 = vst.msk [vmem:[%s188] sm:$0xf] %vm1146, %v1018
        %1148 = vst.msk [vmem:[%s188 + $0x4] sm:$0xf] %vm1146, %v1019
        %1149 = vst.msk [vmem:[%s188 + $0x8] sm:$0xf] %vm1146, %v1020
        %1150 = vst.msk [vmem:[%s188 + $0xc] sm:$0xf] %vm1146, %v1021
        %1151 = vst.msk [vmem:[%s188 + $0x10] sm:$0xf] %vm1146, %v1022
        %1152 = vst.msk [vmem:[%s188 + $0x14] sm:$0xf] %vm1146, %v1023
        %1153 = vst.msk [vmem:[%s188 + $0x18] sm:$0xf] %vm1146, %v1024
        %1154 = vst.msk [vmem:[%s188 + $0x1c] sm:$0xf] %vm1146, %v1025
        %1155 = vst.msk [vmem:[%s188 + $0x20] sm:$0xf] %vm1146, %v1026
        %1156 = vst.msk [vmem:[%s188 + $0x24] sm:$0xf] %vm1146, %v1027
        %1157 = vst.msk [vmem:[%s188 + $0x28] sm:$0xf] %vm1146, %v1028
        %1158 = vst.msk [vmem:[%s188 + $0x2c] sm:$0xf] %vm1146, %v1029
        %1159 = vst.msk [vmem:[%s188 + $0x30] sm:$0xf] %vm1146, %v1030
        %1160 = vst.msk [vmem:[%s188 + $0x34] sm:$0xf] %vm1146, %v1031
        %1161 = vst.msk [vmem:[%s188 + $0x38] sm:$0xf] %vm1146, %v1032
        %1162 = vst.msk [vmem:[%s188 + $0x3c] sm:$0xf] %vm1146, %v1033
        %1163 = vst.msk [vmem:[%s188 + $0x40] sm:$0xf] %vm1146, %v1034
        %1164 = vst.msk [vmem:[%s188 + $0x44] sm:$0xf] %vm1146, %v1035
        %1165 = vst.msk [vmem:[%s188 + $0x48] sm:$0xf] %vm1146, %v1036
        %1166 = vst.msk [vmem:[%s188 + $0x4c] sm:$0xf] %vm1146, %v1037
        %1167 = vst.msk [vmem:[%s188 + $0x50] sm:$0xf] %vm1146, %v1038
        %1168 = vst.msk [vmem:[%s188 + $0x54] sm:$0xf] %vm1146, %v1039
        %1169 = vst.msk [vmem:[%s188 + $0x58] sm:$0xf] %vm1146, %v1040
        %1170 = vst.msk [vmem:[%s188 + $0x5c] sm:$0xf] %vm1146, %v1041
        %1171 = vst.msk [vmem:[%s188 + $0x60] sm:$0xf] %vm1146, %v1042
        %1172 = vst.msk [vmem:[%s188 + $0x64] sm:$0xf] %vm1146, %v1043
        %1173 = vst.msk [vmem:[%s188 + $0x68] sm:$0xf] %vm1146, %v1044
        %1174 = vst.msk [vmem:[%s188 + $0x6c] sm:$0xf] %vm1146, %v1045
        %1175 = vst.msk [vmem:[%s188 + $0x70] sm:$0xf] %vm1146, %v1046
        %1176 = vst.msk [vmem:[%s188 + $0x74] sm:$0xf] %vm1146, %v1047
        %1177 = vst.msk [vmem:[%s188 + $0x78] sm:$0xf] %vm1146, %v1048
        %1178 = vst.msk [vmem:[%s188 + $0x7c] sm:$0xf] %vm1146, %v1049
        %1179 = vst.msk [vmem:[%s188 + $0x80] sm:$0xf] %vm1146, %v1050
        %1180 = vst.msk [vmem:[%s188 + $0x84] sm:$0xf] %vm1146, %v1051
        %1181 = vst.msk [vmem:[%s188 + $0x88] sm:$0xf] %vm1146, %v1052
        %1182 = vst.msk [vmem:[%s188 + $0x8c] sm:$0xf] %vm1146, %v1053
        %1183 = vst.msk [vmem:[%s188 + $0x90] sm:$0xf] %vm1146, %v1054
        %1184 = vst.msk [vmem:[%s188 + $0x94] sm:$0xf] %vm1146, %v1055
        %1185 = vst.msk [vmem:[%s188 + $0x98] sm:$0xf] %vm1146, %v1056
        %1186 = vst.msk [vmem:[%s188 + $0x9c] sm:$0xf] %vm1146, %v1057
        %1187 = vst.msk [vmem:[%s188 + $0xa0] sm:$0xf] %vm1146, %v1058
        %1188 = vst.msk [vmem:[%s188 + $0xa4] sm:$0xf] %vm1146, %v1059
        %1189 = vst.msk [vmem:[%s188 + $0xa8] sm:$0xf] %vm1146, %v1060
        %1190 = vst.msk [vmem:[%s188 + $0xac] sm:$0xf] %vm1146, %v1061
        %1191 = vst.msk [vmem:[%s188 + $0xb0] sm:$0xf] %vm1146, %v1062
        %1192 = vst.msk [vmem:[%s188 + $0xb4] sm:$0xf] %vm1146, %v1063
        %1193 = vst.msk [vmem:[%s188 + $0xb8] sm:$0xf] %vm1146, %v1064
        %1194 = vst.msk [vmem:[%s188 + $0xbc] sm:$0xf] %vm1146, %v1065
        %1195 = vst.msk [vmem:[%s188 + $0xc0] sm:$0xf] %vm1146, %v1066
        %1196 = vst.msk [vmem:[%s188 + $0xc4] sm:$0xf] %vm1146, %v1067
        %1197 = vst.msk [vmem:[%s188 + $0xc8] sm:$0xf] %vm1146, %v1068
        %1198 = vst.msk [vmem:[%s188 + $0xcc] sm:$0xf] %vm1146, %v1069
        %1199 = vst.msk [vmem:[%s188 + $0xd0] sm:$0xf] %vm1146, %v1070
        %1200 = vst.msk [vmem:[%s188 + $0xd4] sm:$0xf] %vm1146, %v1071
        %1201 = vst.msk [vmem:[%s188 + $0xd8] sm:$0xf] %vm1146, %v1072
        %1202 = vst.msk [vmem:[%s188 + $0xdc] sm:$0xf] %vm1146, %v1073
        %1203 = vst.msk [vmem:[%s188 + $0xe0] sm:$0xf] %vm1146, %v1074
        %1204 = vst.msk [vmem:[%s188 + $0xe4] sm:$0xf] %vm1146, %v1075
        %1205 = vst.msk [vmem:[%s188 + $0xe8] sm:$0xf] %vm1146, %v1076
        %1206 = vst.msk [vmem:[%s188 + $0xec] sm:$0xf] %vm1146, %v1077
        %1207 = vst.msk [vmem:[%s188 + $0xf0] sm:$0xf] %vm1146, %v1078
        %1208 = vst.msk [vmem:[%s188 + $0xf4] sm:$0xf] %vm1146, %v1079
        %1209 = vst.msk [vmem:[%s188 + $0xf8] sm:$0xf] %vm1146, %v1080
        %1210 = vst.msk [vmem:[%s188 + $0xfc] sm:$0xf] %vm1146, %v1081
      $region44: #{generator_forward.15} parent=31 // pred_fallthru
        _
      %s1211 = smul.u32 %s19, %s18
      %s1212 = smul.u32 64, %s1211
      %p1213 = scmp.lt.s32.totalorder %s1212, 63
      %s1214 = scalar_select %p1213, %s1212, 63
      %s1215 = smul.addr %s1214, 4
      %s1216 = scalar_lea.vmem %s3, %s1215
      // Predicated region
      $region45: #{generator_forward.15} parent=31 // pred_check
        %p1217 = pneg %p114
      $region46: #{generator_forward.15} parent=31 // pred_check_branch
        %1219 = sbr.rel (%p1217) target = $region48
      $region47: #{generator_forward.15} parent=31 // pred_region
        %s1220 = smul.u32 %s19, %s18
        %s1221 = smul.u32 64, %s1220
      $region48: #{generator_forward.15} parent=31 // pred_fallthru
        _
    $region32: #{generator_forward.15} parent=5 // pred_fallthru
      _
    %p1222 = scmp.le.s32.totalorder 2, %s9
    // Predicated region
    $region49: #{generator_forward.15} parent=5 // pred_check
      %p1223 = pneg %p1222
    $region50: #{generator_forward.15} parent=5 // pred_check_branch
      %1225 = sbr.rel (%p1223) target = $region52
    $region51: #{generator_forward.15} parent=5 // pred_region
      %s1226 = ssub.s32 %s9, 2
      // Predicated region
      $region53: #{generator_forward.15} parent=51 // pred_check
        %p1227 = pneg %p120
      $region54: #{generator_forward.15} parent=51 // pred_check_branch
        %1229 = sbr.rel (%p1227) target = $region56
      $region55: #{generator_forward.15} parent=51 // pred_region
        %s1230 = smul.u32 %s21, %s20
        %s1231 = smul.u32 64, %s1230
        %p1232 = scmp.lt.s32.totalorder %s1231, 63
        %s1233 = scalar_select %p1232, %s1231, 63
        %s1234 = smul.addr %s1233, 4
        %s1235 = scalar_lea.vmem %s3, %s1234
      $region56: #{generator_forward.15} parent=51 // pred_fallthru
        _
    $region52: #{generator_forward.15} parent=5 // pred_fallthru
      _
  $region6: #{generator_forward.15} parent=0 // loop_footer
    %s13 = sadd.s32 1, %s9
  $region7: #{generator_forward.15} parent=0 // loop_footer_branch
    %8 = sbr.rel target = $region3
  $region8: #{generator_forward.15} parent=0 // loop_exit
    _

// kernel: generator_forward.16
$region0: #{generator_forward.16}
  #allocation0 [shape = 'u32[]', space=smem, size = 0x4, offset = 0x4, fixed_abs, tag = 'smem constant byte address 0x4 - core index']
  #allocation1 [shape = 'u32[144,128]{1,0:T(1,128)}', space=vmem, size = 0x12000, scoped, tag = 'internal scratch']
  %s0 = inlined_call_operand.vmem [shape: bf16[512,16], index: 0, kind: input, shape index: {}]
  %s1 = inlined_call_operand.vmem [shape: bf16[16,128], index: 1, kind: input, shape index: {}]
  %s2 = inlined_call_operand.vmem [shape: f32[512,128], index: 2, kind: output, shape index: {}]
  %s3 = sld [smem:[#allocation0]]
  $region18: #{generator_forward.16} parent=0
    _
  %s5 = ssub.s32 1, %s3
  %s6 = scalar_select 0, %s5, %s3
  // Predicated region
  $region2: #{generator_forward.16} parent=0 // pred_check
    _
  $region3: #{generator_forward.16} parent=0 // pred_check_branch
    %8 = sbr.rel (0) target = $region5
  $region4: #{generator_forward.16} parent=0 // pred_region
    _
  $region5: #{generator_forward.16} parent=0 // pred_fallthru
    _
  // Predicated region
  $region6: #{generator_forward.16} parent=0 // pred_check
    _
  $region7: #{generator_forward.16} parent=0 // pred_check_branch
    %10 = sbr.rel (0) target = $region9
  $region8: #{generator_forward.16} parent=0 // pred_region
    _
  $region9: #{generator_forward.16} parent=0 // pred_fallthru
    _
  %v12 = vld [vmem:[%s0] sm:$0xf]
  %v13 = vld [vmem:[%s0 + $0x4] sm:$0xf]
  %v14 = vld [vmem:[%s0 + $0x8] sm:$0xf]
  %v15 = vld [vmem:[%s0 + $0xc] sm:$0xf]
  %v16 = vld [vmem:[%s0 + $0x10] sm:$0xf]
  %v17 = vld [vmem:[%s0 + $0x14] sm:$0xf]
  %v18 = vld [vmem:[%s0 + $0x18] sm:$0xf]
  %v19 = vld [vmem:[%s0 + $0x1c] sm:$0xf]
  %v20 = vld [vmem:[%s0 + $0x20] sm:$0xf]
  %v21 = vld [vmem:[%s0 + $0x24] sm:$0xf]
  %v22 = vld [vmem:[%s0 + $0x28] sm:$0xf]
  %v23 = vld [vmem:[%s0 + $0x2c] sm:$0xf]
  %v24 = vld [vmem:[%s0 + $0x30] sm:$0xf]
  %v25 = vld [vmem:[%s0 + $0x34] sm:$0xf]
  %v26 = vld [vmem:[%s0 + $0x38] sm:$0xf]
  %v27 = vld [vmem:[%s0 + $0x3c] sm:$0xf]
  %v28 = vld [vmem:[%s0 + $0x40] sm:$0xf]
  %v29 = vld [vmem:[%s0 + $0x44] sm:$0xf]
  %v30 = vld [vmem:[%s0 + $0x48] sm:$0xf]
  %v31 = vld [vmem:[%s0 + $0x4c] sm:$0xf]
  %v32 = vld [vmem:[%s0 + $0x50] sm:$0xf]
  %v33 = vld [vmem:[%s0 + $0x54] sm:$0xf]
  %v34 = vld [vmem:[%s0 + $0x58] sm:$0xf]
  %v35 = vld [vmem:[%s0 + $0x5c] sm:$0xf]
  %v36 = vld [vmem:[%s0 + $0x60] sm:$0xf]
  %v37 = vld [vmem:[%s0 + $0x64] sm:$0xf]
  %v38 = vld [vmem:[%s0 + $0x68] sm:$0xf]
  %v39 = vld [vmem:[%s0 + $0x6c] sm:$0xf]
  %v40 = vld [vmem:[%s0 + $0x70] sm:$0xf]
  %v41 = vld [vmem:[%s0 + $0x74] sm:$0xf]
  %v42 = vld [vmem:[%s0 + $0x78] sm:$0xf]
  %v43 = vld [vmem:[%s0 + $0x7c] sm:$0xf]
  %v44 = vld [vmem:[%s0 + $0x80] sm:$0xf]
  %v45 = vld [vmem:[%s0 + $0x84] sm:$0xf]
  %v46 = vld [vmem:[%s0 + $0x88] sm:$0xf]
  %v47 = vld [vmem:[%s0 + $0x8c] sm:$0xf]
  %v48 = vld [vmem:[%s0 + $0x90] sm:$0xf]
  %v49 = vld [vmem:[%s0 + $0x94] sm:$0xf]
  %v50 = vld [vmem:[%s0 + $0x98] sm:$0xf]
  %v51 = vld [vmem:[%s0 + $0x9c] sm:$0xf]
  %v52 = vld [vmem:[%s0 + $0xa0] sm:$0xf]
  %v53 = vld [vmem:[%s0 + $0xa4] sm:$0xf]
  %v54 = vld [vmem:[%s0 + $0xa8] sm:$0xf]
  %v55 = vld [vmem:[%s0 + $0xac] sm:$0xf]
  %v56 = vld [vmem:[%s0 + $0xb0] sm:$0xf]
  %v57 = vld [vmem:[%s0 + $0xb4] sm:$0xf]
  %v58 = vld [vmem:[%s0 + $0xb8] sm:$0xf]
  %v59 = vld [vmem:[%s0 + $0xbc] sm:$0xf]
  %v60 = vld [vmem:[%s0 + $0xc0] sm:$0xf]
  %v61 = vld [vmem:[%s0 + $0xc4] sm:$0xf]
  %v62 = vld [vmem:[%s0 + $0xc8] sm:$0xf]
  %v63 = vld [vmem:[%s0 + $0xcc] sm:$0xf]
  %v64 = vld [vmem:[%s0 + $0xd0] sm:$0xf]
  %v65 = vld [vmem:[%s0 + $0xd4] sm:$0xf]
  %v66 = vld [vmem:[%s0 + $0xd8] sm:$0xf]
  %v67 = vld [vmem:[%s0 + $0xdc] sm:$0xf]
  %v68 = vld [vmem:[%s0 + $0xe0] sm:$0xf]
  %v69 = vld [vmem:[%s0 + $0xe4] sm:$0xf]
  %v70 = vld [vmem:[%s0 + $0xe8] sm:$0xf]
  %v71 = vld [vmem:[%s0 + $0xec] sm:$0xf]
  %v72 = vld [vmem:[%s0 + $0xf0] sm:$0xf]
  %v73 = vld [vmem:[%s0 + $0xf4] sm:$0xf]
  %v74 = vld [vmem:[%s0 + $0xf8] sm:$0xf]
  %v75 = vld [vmem:[%s0 + $0xfc] sm:$0xf]
  %v76 = vld [vmem:[%s1] sm:$0xf]
  %v77 = vld [vmem:[%s1 + $0x4] sm:$0xf]
  %v142 = vunpack.c.l.b16 %v12
  %v143 = vunpack.c.l.b16 %v13
  %v144 = vunpack.c.l.b16 %v14
  %v145 = vunpack.c.l.b16 %v15
  %v146 = vunpack.c.l.b16 %v16
  %v147 = vunpack.c.l.b16 %v17
  %v148 = vunpack.c.l.b16 %v18
  %v149 = vunpack.c.l.b16 %v19
  %v150 = vunpack.c.l.b16 %v20
  %v151 = vunpack.c.l.b16 %v21
  %v152 = vunpack.c.l.b16 %v22
  %v153 = vunpack.c.l.b16 %v23
  %v154 = vunpack.c.l.b16 %v24
  %v155 = vunpack.c.l.b16 %v25
  %v156 = vunpack.c.l.b16 %v26
  %v157 = vunpack.c.l.b16 %v27
  %v158 = vunpack.c.l.b16 %v28
  %v159 = vunpack.c.l.b16 %v29
  %v160 = vunpack.c.l.b16 %v30
  %v161 = vunpack.c.l.b16 %v31
  %v162 = vunpack.c.l.b16 %v32
  %v163 = vunpack.c.l.b16 %v33
  %v164 = vunpack.c.l.b16 %v34
  %v165 = vunpack.c.l.b16 %v35
  %v166 = vunpack.c.l.b16 %v36
  %v167 = vunpack.c.l.b16 %v37
  %v168 = vunpack.c.l.b16 %v38
  %v169 = vunpack.c.l.b16 %v39
  %v170 = vunpack.c.l.b16 %v40
  %v171 = vunpack.c.l.b16 %v41
  %v172 = vunpack.c.l.b16 %v42
  %v173 = vunpack.c.l.b16 %v43
  %v174 = vunpack.c.l.b16 %v44
  %v175 = vunpack.c.l.b16 %v45
  %v176 = vunpack.c.l.b16 %v46
  %v177 = vunpack.c.l.b16 %v47
  %v178 = vunpack.c.l.b16 %v48
  %v179 = vunpack.c.l.b16 %v49
  %v180 = vunpack.c.l.b16 %v50
  %v181 = vunpack.c.l.b16 %v51
  %v182 = vunpack.c.l.b16 %v52
  %v183 = vunpack.c.l.b16 %v53
  %v184 = vunpack.c.l.b16 %v54
  %v185 = vunpack.c.l.b16 %v55
  %v186 = vunpack.c.l.b16 %v56
  %v187 = vunpack.c.l.b16 %v57
  %v188 = vunpack.c.l.b16 %v58
  %v189 = vunpack.c.l.b16 %v59
  %v190 = vunpack.c.l.b16 %v60
  %v191 = vunpack.c.l.b16 %v61
  %v192 = vunpack.c.l.b16 %v62
  %v193 = vunpack.c.l.b16 %v63
  %v194 = vunpack.c.l.b16 %v64
  %v195 = vunpack.c.l.b16 %v65
  %v196 = vunpack.c.l.b16 %v66
  %v197 = vunpack.c.l.b16 %v67
  %v198 = vunpack.c.l.b16 %v68
  %v199 = vunpack.c.l.b16 %v69
  %v200 = vunpack.c.l.b16 %v70
  %v201 = vunpack.c.l.b16 %v71
  %v202 = vunpack.c.l.b16 %v72
  %v203 = vunpack.c.l.b16 %v73
  %v204 = vunpack.c.l.b16 %v74
  %v205 = vunpack.c.l.b16 %v75
  %v206 = vpack.c.b16 %v143, %v142
  %v207 = vpack.c.b16 %v145, %v144
  %v208 = vpack.c.b16 %v147, %v146
  %v209 = vpack.c.b16 %v149, %v148
  %v210 = vpack.c.b16 %v151, %v150
  %v211 = vpack.c.b16 %v153, %v152
  %v212 = vpack.c.b16 %v155, %v154
  %v213 = vpack.c.b16 %v157, %v156
  %v214 = vpack.c.b16 %v159, %v158
  %v215 = vpack.c.b16 %v161, %v160
  %v216 = vpack.c.b16 %v163, %v162
  %v217 = vpack.c.b16 %v165, %v164
  %v218 = vpack.c.b16 %v167, %v166
  %v219 = vpack.c.b16 %v169, %v168
  %v220 = vpack.c.b16 %v171, %v170
  %v221 = vpack.c.b16 %v173, %v172
  %v222 = vpack.c.b16 %v175, %v174
  %v223 = vpack.c.b16 %v177, %v176
  %v224 = vpack.c.b16 %v179, %v178
  %v225 = vpack.c.b16 %v181, %v180
  %v226 = vpack.c.b16 %v183, %v182
  %v227 = vpack.c.b16 %v185, %v184
  %v228 = vpack.c.b16 %v187, %v186
  %v229 = vpack.c.b16 %v189, %v188
  %v230 = vpack.c.b16 %v191, %v190
  %v231 = vpack.c.b16 %v193, %v192
  %v232 = vpack.c.b16 %v195, %v194
  %v233 = vpack.c.b16 %v197, %v196
  %v234 = vpack.c.b16 %v199, %v198
  %v235 = vpack.c.b16 %v201, %v200
  %v236 = vpack.c.b16 %v203, %v202
  %v237 = vpack.c.b16 %v205, %v204
  %v240 = vunpack.c.l.b16 %v76
  %v241 = vunpack.c.l.b16 %v77
  %v242 = vpack.c.b16 %v241, %v240
  %vm244 = vcmask 130048
  %v246 = vsel %vm244, %v206, 0
  %v249 = vsel %vm244, %v207, 0
  %v252 = vsel %vm244, %v208, 0
  %v255 = vsel %vm244, %v209, 0
  %v258 = vsel %vm244, %v210, 0
  %v261 = vsel %vm244, %v211, 0
  %v264 = vsel %vm244, %v212, 0
  %v267 = vsel %vm244, %v213, 0
  %v270 = vsel %vm244, %v214, 0
  %v273 = vsel %vm244, %v215, 0
  %v276 = vsel %vm244, %v216, 0
  %v279 = vsel %vm244, %v217, 0
  %v282 = vsel %vm244, %v218, 0
  %v285 = vsel %vm244, %v219, 0
  %v288 = vsel %vm244, %v220, 0
  %v291 = vsel %vm244, %v221, 0
  %v294 = vsel %vm244, %v222, 0
  %v297 = vsel %vm244, %v223, 0
  %v300 = vsel %vm244, %v224, 0
  %v303 = vsel %vm244, %v225, 0
  %v306 = vsel %vm244, %v226, 0
  %v309 = vsel %vm244, %v227, 0
  %v312 = vsel %vm244, %v228, 0
  %v315 = vsel %vm244, %v229, 0
  %v318 = vsel %vm244, %v230, 0
  %v321 = vsel %vm244, %v231, 0
  %v324 = vsel %vm244, %v232, 0
  %v327 = vsel %vm244, %v233, 0
  %v330 = vsel %vm244, %v234, 0
  %v333 = vsel %vm244, %v235, 0
  %v336 = vsel %vm244, %v236, 0
  %v339 = vsel %vm244, %v237, 0
  %341 = vmatprep.subr.bf16.mxu0 0
  %342 = vmatpush1.bf16.msra.mxu0 %v242
  %343 = vmatprep.subr.bf16.mxu0 0
  %344 = vmatpush1.bf16.msra.mxu0 0
  %345 = vmatprep.subr.bf16.mxu0 0
  %346 = vmatpush1.bf16.msra.mxu0 0
  %347 = vmatprep.subr.bf16.mxu0 0
  %348 = vmatpush1.bf16.msra.mxu0 0
  %349 = vmatprep.subr.bf16.mxu0 0
  %350 = vmatpush1.bf16.msra.mxu0 0
  %351 = vmatprep.subr.bf16.mxu0 0
  %352 = vmatpush1.bf16.msra.mxu0 0
  %353 = vmatprep.subr.bf16.mxu0 0
  %354 = vmatpush1.bf16.msra.mxu0 0
  %355 = vmatprep.subr.bf16.mxu0 0
  %356 = vmatpush1.bf16.msra.mxu0 0
  %357 = vmatprep.subr.bf16.mxu0 0
  %358 = vmatpush1.bf16.msra.mxu0 0
  %359 = vmatprep.subr.bf16.mxu0 0
  %360 = vmatpush1.bf16.msra.mxu0 0
  %361 = vmatprep.subr.bf16.mxu0 0
  %362 = vmatpush1.bf16.msra.mxu0 0
  %363 = vmatprep.subr.bf16.mxu0 0
  %364 = vmatpush1.bf16.msra.mxu0 0
  %365 = vmatprep.subr.bf16.mxu0 0
  %366 = vmatpush1.bf16.msra.mxu0 0
  %367 = vmatprep.subr.bf16.mxu0 0
  %368 = vmatpush1.bf16.msra.mxu0 0
  %369 = vmatprep.subr.bf16.mxu0 0
  %370 = vmatpush1.bf16.msra.mxu0 0
  %371 = vmatprep.subr.bf16.mxu0 0
  %372 = vmatpush1.bf16.msra.mxu0 0
  %373 = vmatprep.mubr.bf16.mxu0 0
  %374 = vmatmul.mubr.bf16.gmra.mrb[0].mxu0 %v246
  %v375 = vpop.f32.mrb[0].mxu0
  %v376 = vadd.f32 0.0, %v375
  %v377 = vpop.f32.mrb[0].mxu0
  %v378 = vpop.f32.mrb[0].mxu0
  %v379 = vadd.f32 0.0, %v378
  %v380 = vpop.f32.mrb[0].mxu0
  %381 = vmatprep.mubr.bf16.mxu0 0
  %382 = vmatmul.mubr.bf16.gmra.mrb[0].mxu0 %v249
  %v383 = vpop.f32.mrb[0].mxu0
  %v384 = vadd.f32 0.0, %v383
  %v385 = vpop.f32.mrb[0].mxu0
  %v386 = vpop.f32.mrb[0].mxu0
  %v387 = vadd.f32 0.0, %v386
  %v388 = vpop.f32.mrb[0].mxu0
  %389 = vmatprep.mubr.bf16.mxu0 0
  %390 = vmatmul.mubr.bf16.gmra.mrb[0].mxu0 %v252
  %v391 = vpop.f32.mrb[0].mxu0
  %v392 = vadd.f32 0.0, %v391
  %v393 = vpop.f32.mrb[0].mxu0
  %v394 = vpop.f32.mrb[0].mxu0
  %v395 = vadd.f32 0.0, %v394
  %v396 = vpop.f32.mrb[0].mxu0
  %397 = vmatprep.mubr.bf16.mxu0 0
  %398 = vmatmul.mubr.bf16.gmra.mrb[0].mxu0 %v255
  %v399 = vpop.f32.mrb[0].mxu0
  %v400 = vadd.f32 0.0, %v399
  %v401 = vpop.f32.mrb[0].mxu0
  %v402 = vpop.f32.mrb[0].mxu0
  %v403 = vadd.f32 0.0, %v402
  %v404 = vpop.f32.mrb[0].mxu0
  %405 = vmatprep.mubr.bf16.mxu0 0
  %406 = vmatmul.mubr.bf16.gmra.mrb[0].mxu0 %v258
  %v407 = vpop.f32.mrb[0].mxu0
  %v408 = vadd.f32 0.0, %v407
  %v409 = vpop.f32.mrb[0].mxu0
  %v410 = vpop.f32.mrb[0].mxu0
  %v411 = vadd.f32 0.0, %v410
  %v412 = vpop.f32.mrb[0].mxu0
  %413 = vmatprep.mubr.bf16.mxu0 0
  %414 = vmatmul.mubr.bf16.gmra.mrb[0].mxu0 %v261
  %v415 = vpop.f32.mrb[0].mxu0
  %v416 = vadd.f32 0.0, %v415
  %v417 = vpop.f32.mrb[0].mxu0
  %v418 = vpop.f32.mrb[0].mxu0
  %v419 = vadd.f32 0.0, %v418
  %v420 = vpop.f32.mrb[0].mxu0
  %421 = vmatprep.mubr.bf16.mxu0 0
  %422 = vmatmul.mubr.bf16.gmra.mrb[0].mxu0 %v264
  %v423 = vpop.f32.mrb[0].mxu0
  %v424 = vadd.f32 0.0, %v423
  %v425 = vpop.f32.mrb[0].mxu0
  %v426 = vpop.f32.mrb[0].mxu0
  %v427 = vadd.f32 0.0, %v426
  %v428 = vpop.f32.mrb[0].mxu0
  %429 = vmatprep.mubr.bf16.mxu0 0
  %430 = vmatmul.mubr.bf16.gmra.mrb[0].mxu0 %v267
  %v431 = vpop.f32.mrb[0].mxu0
  %v432 = vadd.f32 0.0, %v431
  %v433 = vpop.f32.mrb[0].mxu0
  %v434 = vpop.f32.mrb[0].mxu0
  %v435 = vadd.f32 0.0, %v434
  %v436 = vpop.f32.mrb[0].mxu0
  %437 = vmatprep.mubr.bf16.mxu0 0
  %438 = vmatmul.mubr.bf16.gmra.mrb[0].mxu0 %v270
  %v439 = vpop.f32.mrb[0].mxu0
  %v440 = vadd.f32 0.0, %v439
  %v441 = vpop.f32.mrb[0].mxu0
  %v442 = vpop.f32.mrb[0].mxu0
  %v443 = vadd.f32 0.0, %v442
  %v444 = vpop.f32.mrb[0].mxu0
  %445 = vmatprep.mubr.bf16.mxu0 0
  %446 = vmatmul.mubr.bf16.gmra.mrb[0].mxu0 %v273
  %v447 = vpop.f32.mrb[0].mxu0
  %v448 = vadd.f32 0.0, %v447
  %v449 = vpop.f32.mrb[0].mxu0
  %v450 = vpop.f32.mrb[0].mxu0
  %v451 = vadd.f32 0.0, %v450
  %v452 = vpop.f32.mrb[0].mxu0
  %453 = vmatprep.mubr.bf16.mxu0 0
  %454 = vmatmul.mubr.bf16.gmra.mrb[0].mxu0 %v276
  %v455 = vpop.f32.mrb[0].mxu0
  %v456 = vadd.f32 0.0, %v455
  %v457 = vpop.f32.mrb[0].mxu0
  %v458 = vpop.f32.mrb[0].mxu0
  %v459 = vadd.f32 0.0, %v458
  %v460 = vpop.f32.mrb[0].mxu0
  %461 = vmatprep.mubr.bf16.mxu0 0
  %462 = vmatmul.mubr.bf16.gmra.mrb[0].mxu0 %v279
  %v463 = vpop.f32.mrb[0].mxu0
  %v464 = vadd.f32 0.0, %v463
  %v465 = vpop.f32.mrb[0].mxu0
  %v466 = vpop.f32.mrb[0].mxu0
  %v467 = vadd.f32 0.0, %v466
  %v468 = vpop.f32.mrb[0].mxu0
  %469 = vmatprep.mubr.bf16.mxu0 0
  %470 = vmatmul.mubr.bf16.gmra.mrb[0].mxu0 %v282
  %v471 = vpop.f32.mrb[0].mxu0
  %v472 = vadd.f32 0.0, %v471
  %v473 = vpop.f32.mrb[0].mxu0
  %v474 = vpop.f32.mrb[0].mxu0
  %v475 = vadd.f32 0.0, %v474
  %v476 = vpop.f32.mrb[0].mxu0
  %477 = vmatprep.mubr.bf16.mxu0 0
  %478 = vmatmul.mubr.bf16.gmra.mrb[0].mxu0 %v285
  %v479 = vpop.f32.mrb[0].mxu0
  %v480 = vadd.f32 0.0, %v479
  %v481 = vpop.f32.mrb[0].mxu0
  %v482 = vpop.f32.mrb[0].mxu0
  %v483 = vadd.f32 0.0, %v482
  %v484 = vpop.f32.mrb[0].mxu0
  %485 = vmatprep.mubr.bf16.mxu0 0
  %486 = vmatmul.mubr.bf16.gmra.mrb[0].mxu0 %v288
  %v487 = vpop.f32.mrb[0].mxu0
  %v488 = vadd.f32 0.0, %v487
  %v489 = vpop.f32.mrb[0].mxu0
  %v490 = vpop.f32.mrb[0].mxu0
  %v491 = vadd.f32 0.0, %v490
  %v492 = vpop.f32.mrb[0].mxu0
  %493 = vmatprep.mubr.bf16.mxu0 0
  %494 = vmatmul.mubr.bf16.gmra.mrb[0].mxu0 %v291
  %v495 = vpop.f32.mrb[0].mxu0
  %v496 = vadd.f32 0.0, %v495
  %v497 = vpop.f32.mrb[0].mxu0
  %v498 = vpop.f32.mrb[0].mxu0
  %v499 = vadd.f32 0.0, %v498
  %v500 = vpop.f32.mrb[0].mxu0
  %501 = vmatprep.mubr.bf16.mxu0 0
  %502 = vmatmul.mubr.bf16.gmra.mrb[0].mxu0 %v294
  %v503 = vpop.f32.mrb[0].mxu0
  %v504 = vadd.f32 0.0, %v503
  %v505 = vpop.f32.mrb[0].mxu0
  %v506 = vpop.f32.mrb[0].mxu0
  %v507 = vadd.f32 0.0, %v506
  %v508 = vpop.f32.mrb[0].mxu0
  %509 = vmatprep.mubr.bf16.mxu0 0
  %510 = vmatmul.mubr.bf16.gmra.mrb[0].mxu0 %v297
  %v511 = vpop.f32.mrb[0].mxu0
  %v512 = vadd.f32 0.0, %v511
  %v513 = vpop.f32.mrb[0].mxu0
  %v514 = vpop.f32.mrb[0].mxu0
  %v515 = vadd.f32 0.0, %v514
  %v516 = vpop.f32.mrb[0].mxu0
  %517 = vmatprep.mubr.bf16.mxu0 0
  %518 = vmatmul.mubr.bf16.gmra.mrb[0].mxu0 %v300
  %v519 = vpop.f32.mrb[0].mxu0
  %v520 = vadd.f32 0.0, %v519
  %v521 = vpop.f32.mrb[0].mxu0
  %v522 = vpop.f32.mrb[0].mxu0
  %v523 = vadd.f32 0.0, %v522
  %v524 = vpop.f32.mrb[0].mxu0
  %525 = vmatprep.mubr.bf16.mxu0 0
  %526 = vmatmul.mubr.bf16.gmra.mrb[0].mxu0 %v303
  %v527 = vpop.f32.mrb[0].mxu0
  %v528 = vadd.f32 0.0, %v527
  %v529 = vpop.f32.mrb[0].mxu0
  %v530 = vpop.f32.mrb[0].mxu0
  %v531 = vadd.f32 0.0, %v530
  %v532 = vpop.f32.mrb[0].mxu0
  %533 = vmatprep.mubr.bf16.mxu0 0
  %534 = vmatmul.mubr.bf16.gmra.mrb[0].mxu0 %v306
  %v535 = vpop.f32.mrb[0].mxu0
  %v536 = vadd.f32 0.0, %v535
  %v537 = vpop.f32.mrb[0].mxu0
  %v538 = vpop.f32.mrb[0].mxu0
  %v539 = vadd.f32 0.0, %v538
  %v540 = vpop.f32.mrb[0].mxu0
  %541 = vmatprep.mubr.bf16.mxu0 0
  %542 = vmatmul.mubr.bf16.gmra.mrb[0].mxu0 %v309
  %v543 = vpop.f32.mrb[0].mxu0
  %v544 = vadd.f32 0.0, %v543
  %v545 = vpop.f32.mrb[0].mxu0
  %v546 = vpop.f32.mrb[0].mxu0
  %v547 = vadd.f32 0.0, %v546
  %v548 = vpop.f32.mrb[0].mxu0
  %549 = vmatprep.mubr.bf16.mxu0 0
  %550 = vmatmul.mubr.bf16.gmra.mrb[0].mxu0 %v312
  %v551 = vpop.f32.mrb[0].mxu0
  %v552 = vadd.f32 0.0, %v551
  %v553 = vpop.f32.mrb[0].mxu0
  %v554 = vpop.f32.mrb[0].mxu0
  %v555 = vadd.f32 0.0, %v554
  %v556 = vpop.f32.mrb[0].mxu0
  %557 = vmatprep.mubr.bf16.mxu0 0
  %558 = vmatmul.mubr.bf16.gmra.mrb[0].mxu0 %v315
  %v559 = vpop.f32.mrb[0].mxu0
  %v560 = vadd.f32 0.0, %v559
  %v561 = vpop.f32.mrb[0].mxu0
  %v562 = vpop.f32.mrb[0].mxu0
  %v563 = vadd.f32 0.0, %v562
  %v564 = vpop.f32.mrb[0].mxu0
  %565 = vmatprep.mubr.bf16.mxu0 0
  %566 = vmatmul.mubr.bf16.gmra.mrb[0].mxu0 %v318
  %v567 = vpop.f32.mrb[0].mxu0
  %v568 = vadd.f32 0.0, %v567
  %v569 = vpop.f32.mrb[0].mxu0
  %v570 = vpop.f32.mrb[0].mxu0
  %v571 = vadd.f32 0.0, %v570
  %v572 = vpop.f32.mrb[0].mxu0
  %573 = vmatprep.mubr.bf16.mxu0 0
  %574 = vmatmul.mubr.bf16.gmra.mrb[0].mxu0 %v321
  %v575 = vpop.f32.mrb[0].mxu0
  %v576 = vadd.f32 0.0, %v575
  %v577 = vpop.f32.mrb[0].mxu0
  %v578 = vpop.f32.mrb[0].mxu0
  %v579 = vadd.f32 0.0, %v578
  %v580 = vpop.f32.mrb[0].mxu0
  %581 = vmatprep.mubr.bf16.mxu0 0
  %582 = vmatmul.mubr.bf16.gmra.mrb[0].mxu0 %v324
  %v583 = vpop.f32.mrb[0].mxu0
  %v584 = vadd.f32 0.0, %v583
  %v585 = vpop.f32.mrb[0].mxu0
  %v586 = vpop.f32.mrb[0].mxu0
  %v587 = vadd.f32 0.0, %v586
  %v588 = vpop.f32.mrb[0].mxu0
  %589 = vmatprep.mubr.bf16.mxu0 0
  %590 = vmatmul.mubr.bf16.gmra.mrb[0].mxu0 %v327
  %v591 = vpop.f32.mrb[0].mxu0
  %v592 = vadd.f32 0.0, %v591
  %v593 = vpop.f32.mrb[0].mxu0
  %v594 = vpop.f32.mrb[0].mxu0
  %v595 = vadd.f32 0.0, %v594
  %v596 = vpop.f32.mrb[0].mxu0
  %597 = vmatprep.mubr.bf16.mxu0 0
  %598 = vmatmul.mubr.bf16.gmra.mrb[0].mxu0 %v330
  %v599 = vpop.f32.mrb[0].mxu0
  %v600 = vadd.f32 0.0, %v599
  %v601 = vpop.f32.mrb[0].mxu0
  %v602 = vpop.f32.mrb[0].mxu0
  %v603 = vadd.f32 0.0, %v602
  %v604 = vpop.f32.mrb[0].mxu0
  %605 = vmatprep.mubr.bf16.mxu0 0
  %606 = vmatmul.mubr.bf16.gmra.mrb[0].mxu0 %v333
  %v607 = vpop.f32.mrb[0].mxu0
  %v608 = vadd.f32 0.0, %v607
  %v609 = vpop.f32.mrb[0].mxu0
  %v610 = vpop.f32.mrb[0].mxu0
  %v611 = vadd.f32 0.0, %v610
  %v612 = vpop.f32.mrb[0].mxu0
  %613 = vmatprep.mubr.bf16.mxu0 0
  %614 = vmatmul.mubr.bf16.gmra.mrb[0].mxu0 %v336
  %v615 = vpop.f32.mrb[0].mxu0
  %v616 = vadd.f32 0.0, %v615
  %v617 = vpop.f32.mrb[0].mxu0
  %v618 = vpop.f32.mrb[0].mxu0
  %v619 = vadd.f32 0.0, %v618
  %v620 = vpop.f32.mrb[0].mxu0
  %621 = vmatprep.mubr.bf16.mxu0 0
  %622 = vmatmul.mubr.bf16.gmra.mrb[0].mxu0 %v339
  %v623 = vpop.f32.mrb[0].mxu0
  %v624 = vadd.f32 0.0, %v623
  %v625 = vpop.f32.mrb[0].mxu0
  %v626 = vpop.f32.mrb[0].mxu0
  %v627 = vadd.f32 0.0, %v626
  %v628 = vpop.f32.mrb[0].mxu0
  %629 = vdwg.mxu0
  %630 = vst [vmem:[%s2] sm:$0xff] %v376
  %631 = vst [vmem:[%s2 + $0x8] sm:$0xff] %v379
  %632 = vst [vmem:[%s2 + $0x10] sm:$0xff] %v384
  %633 = vst [vmem:[%s2 + $0x18] sm:$0xff] %v387
  %634 = vst [vmem:[%s2 + $0x20] sm:$0xff] %v392
  %635 = vst [vmem:[%s2 + $0x28] sm:$0xff] %v395
  %636 = vst [vmem:[%s2 + $0x30] sm:$0xff] %v400
  %637 = vst [vmem:[%s2 + $0x38] sm:$0xff] %v403
  %638 = vst [vmem:[%s2 + $0x40] sm:$0xff] %v408
  %639 = vst [vmem:[%s2 + $0x48] sm:$0xff] %v411
  %640 = vst [vmem:[%s2 + $0x50] sm:$0xff] %v416
  %641 = vst [vmem:[%s2 + $0x58] sm:$0xff] %v419
  %642 = vst [vmem:[%s2 + $0x60] sm:$0xff] %v424
  %643 = vst [vmem:[%s2 + $0x68] sm:$0xff] %v427
  %644 = vst [vmem:[%s2 + $0x70] sm:$0xff] %v432
  %645 = vst [vmem:[%s2 + $0x78] sm:$0xff] %v435
  %646 = vst [vmem:[%s2 + $0x80] sm:$0xff] %v440
  %647 = vst [vmem:[%s2 + $0x88] sm:$0xff] %v443
  %648 = vst [vmem:[%s2 + $0x90] sm:$0xff] %v448
  %649 = vst [vmem:[%s2 + $0x98] sm:$0xff] %v451
  %650 = vst [vmem:[%s2 + $0xa0] sm:$0xff] %v456
  %651 = vst [vmem:[%s2 + $0xa8] sm:$0xff] %v459
  %652 = vst [vmem:[%s2 + $0xb0] sm:$0xff] %v464
  %653 = vst [vmem:[%s2 + $0xb8] sm:$0xff] %v467
  %654 = vst [vmem:[%s2 + $0xc0] sm:$0xff] %v472
  %655 = vst [vmem:[%s2 + $0xc8] sm:$0xff] %v475
  %656 = vst [vmem:[%s2 + $0xd0] sm:$0xff] %v480
  %657 = vst [vmem:[%s2 + $0xd8] sm:$0xff] %v483
  %658 = vst [vmem:[%s2 + $0xe0] sm:$0xff] %v488
  %659 = vst [vmem:[%s2 + $0xe8] sm:$0xff] %v491
  %660 = vst [vmem:[%s2 + $0xf0] sm:$0xff] %v496
  %661 = vst [vmem:[%s2 + $0xf8] sm:$0xff] %v499
  %662 = vst [vmem:[%s2 + $0x100] sm:$0xff] %v504
  %663 = vst [vmem:[%s2 + $0x108] sm:$0xff] %v507
  %664 = vst [vmem:[%s2 + $0x110] sm:$0xff] %v512
  %665 = vst [vmem:[%s2 + $0x118] sm:$0xff] %v515
  %666 = vst [vmem:[%s2 + $0x120] sm:$0xff] %v520
  %667 = vst [vmem:[%s2 + $0x128] sm:$0xff] %v523
  %668 = vst [vmem:[%s2 + $0x130] sm:$0xff] %v528
  %669 = vst [vmem:[%s2 + $0x138] sm:$0xff] %v531
  %670 = vst [vmem:[%s2 + $0x140] sm:$0xff] %v536
  %671 = vst [vmem:[%s2 + $0x148] sm:$0xff] %v539
  %672 = vst [vmem:[%s2 + $0x150] sm:$0xff] %v544
  %673 = vst [vmem:[%s2 + $0x158] sm:$0xff] %v547
  %674 = vst [vmem:[%s2 + $0x160] sm:$0xff] %v552
  %675 = vst [vmem:[%s2 + $0x168] sm:$0xff] %v555
  %676 = vst [vmem:[%s2 + $0x170] sm:$0xff] %v560
  %677 = vst [vmem:[%s2 + $0x178] sm:$0xff] %v563
  %678 = vst [vmem:[%s2 + $0x180] sm:$0xff] %v568
  %679 = vst [vmem:[%s2 + $0x188] sm:$0xff] %v571
  %680 = vst [vmem:[%s2 + $0x190] sm:$0xff] %v576
  %681 = vst [vmem:[%s2 + $0x198] sm:$0xff] %v579
  %682 = vst [vmem:[%s2 + $0x1a0] sm:$0xff] %v584
  %683 = vst [vmem:[%s2 + $0x1a8] sm:$0xff] %v587
  %684 = vst [vmem:[%s2 + $0x1b0] sm:$0xff] %v592
  %685 = vst [vmem:[%s2 + $0x1b8] sm:$0xff] %v595
  %686 = vst [vmem:[%s2 + $0x1c0] sm:$0xff] %v600
  %687 = vst [vmem:[%s2 + $0x1c8] sm:$0xff] %v603
  %688 = vst [vmem:[%s2 + $0x1d0] sm:$0xff] %v608
  %689 = vst [vmem:[%s2 + $0x1d8] sm:$0xff] %v611
  %690 = vst [vmem:[%s2 + $0x1e0] sm:$0xff] %v616
  %691 = vst [vmem:[%s2 + $0x1e8] sm:$0xff] %v619
  %692 = vst [vmem:[%s2 + $0x1f0] sm:$0xff] %v624
  %693 = vst [vmem:[%s2 + $0x1f8] sm:$0xff] %v627
  // Predicated region
  $region10: #{generator_forward.16} parent=0 // pred_check
    _
  $region11: #{generator_forward.16} parent=0 // pred_check_branch
    %695 = sbr.rel (0) target = $region13
  $region12: #{generator_forward.16} parent=0 // pred_region
    _
  $region13: #{generator_forward.16} parent=0 // pred_fallthru
    _
  // Predicated region
  $region14: #{generator_forward.16} parent=0 // pred_check
    _
  $region15: #{generator_forward.16} parent=0 // pred_check_branch
    %697 = sbr.rel (0) target = $region17
  $region16: #{generator_forward.16} parent=0 // pred_region
    _
  $region17: #{generator_forward.16} parent=0 // pred_fallthru
    _

// kernel: generator_forward.17
$region0: #{generator_forward.17}
  #allocation0 [shape = 'u32[]', space=smem, size = 0x4, offset = 0x4, fixed_abs, tag = 'smem constant byte address 0x4 - core index']
  #allocation1 [shape = 'u32[144,128]{1,0:T(1,128)}', space=vmem, size = 0x12000, scoped, tag = 'internal scratch']
  #allocation2 [shape = 'f32[1,8]{1,0:T(1,128)}', space=vmem, size = 0x200, scoped, tag = 'scratch operand']
  #allocation3 [shape = 'f32[1,8]{1,0:T(1,128)}', space=vmem, size = 0x200, scoped, tag = 'scratch operand']
  %s0 = inlined_call_operand.vmem [shape: f32[2048,8], index: 0, kind: input, shape index: {}]
  %s1 = inlined_call_operand.vmem [shape: f32[1,8], index: 1, kind: input, shape index: {}]
  %s2 = inlined_call_operand.vmem [shape: f32[1,8], index: 2, kind: input, shape index: {}]
  %s3 = inlined_call_operand.vmem [shape: bf16[2048,8], index: 3, kind: output, shape index: {}]
  %s4 = sld [smem:[#allocation0]]
  $region57: #{generator_forward.17} parent=0
    _
  %s6 = ssub.s32 1, %s4
  %s7 = scalar_select 0, %s6, %s4
  loop: start=0, step=1, limit=10
  $region2: #{generator_forward.17} parent=0 // loop_pre_header
    _
  $region3: #{generator_forward.17} parent=0 // loop_header
    %s9 = sphi 0, %s13
    %p10 = scmp.ge.s32.totalorder %s9, 10
    %s16 = sphi 0, %s28
    %s17 = sphi 0, %s24
    %s18 = sphi 0, %s16
    %s19 = sphi 0, %s17
    %s20 = sphi 0, %s18
    %s21 = sphi 0, %s19
    %s31 = sphi 0, %s33
    %s34 = sphi 0, %s31
    %s35 = sphi 0, %s34
    %s51 = sphi 0, %s35
    %s55 = sphi 0, %s55
    %s57 = sphi 0, %s55
    %s58 = sphi 0, %s57
    %s72 = sphi 0, %s58
    %s76 = sphi 0, %s76
    %s78 = sphi 0, %s76
    %s79 = sphi 0, %s78
    %s93 = sphi 0, %s79
    %s101 = sphi 0, %s103
    %s104 = sphi 0, %s101
    %s105 = sphi 0, %s104
    %s121 = sphi 0, %s105
  $region4: #{generator_forward.17} parent=0 // loop_header_branch
    %12 = sbr.rel (%p10) target = $region8
  $region5: #{generator_forward.17} parent=0 // loop_body
    %s14 = ssub.s32 %s9, 1
    %s15 = ssub.s32 %s9, 2
    %s22 = sadd.s32 1, %s17
    %p23 = scmp.ge.s32.totalorder %s22, 4
    %s24 = scalar_select %p23, 0, %s22
    %s25 = sadd.s32 1, %s16
    %s26 = scalar_select %p23, %s25, %s16
    %p27 = scmp.ge.s32.totalorder %s26, 2
    %s28 = scalar_select %p27, 0, %s26
    %s29 = ssub.s32 %s17, %s24
    %p30 = scmp.eq.s32.totalorder %s29, 0
    %s32 = sadd.s32 %s31, 1
    %s33 = scalar_select %p30, %s31, %s32
    %p36 = pneg %p30
    %p37 = scmp.eq.s32.totalorder %s9, 7
    %p38 = por %p36, %p37
    %p39 = scmp.ne.s32.totalorder %s31, %s34
    %p40 = scmp.eq.s32.totalorder %s9, 0
    %p41 = por %p39, %p40
    %p42 = scmp.ne.s32.totalorder %s31, %s34
    %p43 = scmp.eq.s32.totalorder %s14, 7
    %p44 = por %p42, %p43
    %p45 = scmp.ne.s32.totalorder %s34, %s35
    %p46 = scmp.eq.s32.totalorder %s14, 0
    %p47 = por %p45, %p46
    %p48 = scmp.ne.s32.totalorder %s34, %s35
    %p49 = scmp.eq.s32.totalorder %s15, 7
    %p50 = por %p48, %p49
    %p52 = scmp.ne.s32.totalorder %s35, %s51
    %p53 = scmp.eq.s32.totalorder %s15, 0
    %p54 = por %p52, %p53
    %s56 = sadd.s32 %s55, 1
    %p59 = scmp.eq.s32.totalorder %s9, 7
    %p60 = scmp.ne.s32.totalorder %s55, %s57
    %p61 = scmp.eq.s32.totalorder %s9, 0
    %p62 = por %p60, %p61
    %p63 = scmp.ne.s32.totalorder %s55, %s57
    %p64 = scmp.eq.s32.totalorder %s14, 7
    %p65 = por %p63, %p64
    %p66 = scmp.ne.s32.totalorder %s57, %s58
    %p67 = scmp.eq.s32.totalorder %s14, 0
    %p68 = por %p66, %p67
    %p69 = scmp.ne.s32.totalorder %s57, %s58
    %p70 = scmp.eq.s32.totalorder %s15, 7
    %p71 = por %p69, %p70
    %p73 = scmp.ne.s32.totalorder %s58, %s72
    %p74 = scmp.eq.s32.totalorder %s15, 0
    %p75 = por %p73, %p74
    %s77 = sadd.s32 %s76, 1
    %p80 = scmp.eq.s32.totalorder %s9, 7
    %p81 = scmp.ne.s32.totalorder %s76, %s78
    %p82 = scmp.eq.s32.totalorder %s9, 0
    %p83 = por %p81, %p82
    %p84 = scmp.ne.s32.totalorder %s76, %s78
    %p85 = scmp.eq.s32.totalorder %s14, 7
    %p86 = por %p84, %p85
    %p87 = scmp.ne.s32.totalorder %s78, %s79
    %p88 = scmp.eq.s32.totalorder %s14, 0
    %p89 = por %p87, %p88
    %p90 = scmp.ne.s32.totalorder %s78, %s79
    %p91 = scmp.eq.s32.totalorder %s15, 7
    %p92 = por %p90, %p91
    %p94 = scmp.ne.s32.totalorder %s79, %s93
    %p95 = scmp.eq.s32.totalorder %s15, 0
    %p96 = por %p94, %p95
    %s97 = smul.u32 %s17, %s16
    %s98 = smul.u32 %s24, %s28
    %s99 = ssub.s32 %s97, %s98
    %p100 = scmp.eq.s32.totalorder %s99, 0
    %s102 = sadd.s32 %s101, 1
    %s103 = scalar_select %p100, %s101, %s102
    %p106 = pneg %p100
    %p107 = scmp.eq.s32.totalorder %s9, 7
    %p108 = por %p106, %p107
    %p109 = scmp.ne.s32.totalorder %s101, %s104
    %p110 = scmp.eq.s32.totalorder %s9, 0
    %p111 = por %p109, %p110
    %p112 = scmp.ne.s32.totalorder %s101, %s104
    %p113 = scmp.eq.s32.totalorder %s14, 7
    %p114 = por %p112, %p113
    %p115 = scmp.ne.s32.totalorder %s104, %s105
    %p116 = scmp.eq.s32.totalorder %s14, 0
    %p117 = por %p115, %p116
    %p118 = scmp.ne.s32.totalorder %s104, %s105
    %p119 = scmp.eq.s32.totalorder %s15, 7
    %p120 = por %p118, %p119
    %p122 = scmp.ne.s32.totalorder %s105, %s121
    %p123 = scmp.eq.s32.totalorder %s15, 0
    %p124 = por %p122, %p123
    %p125 = scmp.le.s32.totalorder 1, %s9
    %p126 = scmp.lt.s32.totalorder %s9, 9
    %p127 = pnand %p125, %p126
    %p128 = pneg %p127
    // Predicated region
    $region9: #{generator_forward.17} parent=5 // pred_check
      _
    $region10: #{generator_forward.17} parent=5 // pred_check_branch
      %130 = sbr.rel (%p127) target = $region12
    $region11: #{generator_forward.17} parent=5 // pred_region
      %s131 = ssub.s32 %s9, 1
      // Predicated region
      $region13: #{generator_forward.17} parent=11 // pred_check
        %p132 = pneg %p68
      $region14: #{generator_forward.17} parent=11 // pred_check_branch
        %134 = sbr.rel (%p132) target = $region16
      $region15: #{generator_forward.17} parent=11 // pred_region
        _
      $region16: #{generator_forward.17} parent=11 // pred_fallthru
        _
      // Predicated region
      $region17: #{generator_forward.17} parent=11 // pred_check
        %p135 = pneg %p89
      $region18: #{generator_forward.17} parent=11 // pred_check_branch
        %137 = sbr.rel (%p135) target = $region20
      $region19: #{generator_forward.17} parent=11 // pred_region
        _
      $region20: #{generator_forward.17} parent=11 // pred_fallthru
        _
    $region12: #{generator_forward.17} parent=5 // pred_fallthru
      _
    %p138 = scmp.lt.s32.totalorder %s9, 8
    // Predicated region
    $region21: #{generator_forward.17} parent=5 // pred_check
      %p139 = pneg %p138
    $region22: #{generator_forward.17} parent=5 // pred_check_branch
      %141 = sbr.rel (%p139) target = $region24
    $region23: #{generator_forward.17} parent=5 // pred_region
      // Predicated region
      $region25: #{generator_forward.17} parent=23 // pred_check
        %p142 = pneg %p41
      $region26: #{generator_forward.17} parent=23 // pred_check_branch
        %144 = sbr.rel (%p142) target = $region28
      $region27: #{generator_forward.17} parent=23 // pred_region
        %s145 = smul.u32 64, %s17
        %p146 = scmp.lt.s32.totalorder %s145, 255
        %s147 = scalar_select %p146, %s145, 255
        %s148 = smul.addr %s147, 8
        %s149 = scalar_lea.vmem %s0, %s148
        %s150 = smul.u32 64, %s17
      $region28: #{generator_forward.17} parent=23 // pred_fallthru
        _
    $region24: #{generator_forward.17} parent=5 // pred_fallthru
      _
    %p151 = scmp.le.s32.totalorder 1, %s9
    %p152 = scmp.lt.s32.totalorder %s9, 9
    %p153 = pnand %p151, %p152
    %p154 = pneg %p153
    // Predicated region
    $region29: #{generator_forward.17} parent=5 // pred_check
      _
    $region30: #{generator_forward.17} parent=5 // pred_check_branch
      %156 = sbr.rel (%p153) target = $region32
    $region31: #{generator_forward.17} parent=5 // pred_region
      %s157 = ssub.s32 %s9, 1
      %s158 = smul.u32 64, %s19
      %p159 = scmp.lt.s32.totalorder %s158, 255
      %s160 = scalar_select %p159, %s158, 255
      %s161 = smul.addr %s160, 8
      %s162 = scalar_lea.vmem %s0, %s161
      %p163 = pneg %p47
      %p164 = pneg %p44
      %p165 = pneg %p68
      %p166 = pneg %p65
      %p167 = pneg %p89
      %p168 = pneg %p86
      %p169 = pneg %p117
      %p170 = pneg %p114
      %s171 = smul.u32 %s19, %s18
      %s172 = smul.u32 64, %s171
      %p173 = scmp.lt.s32.totalorder %s172, 255
      %s174 = scalar_select %p173, %s172, 255
      %s175 = smul.addr %s174, 4
      %s176 = scalar_lea.vmem %s3, %s175
      %s177 = smul.u32 64, %s19
      %p178 = scmp.lt.s32.totalorder %s177, 255
      %s179 = scalar_select %p178, %s177, 255
      %s180 = smul.addr %s179, 8
      %s181 = scalar_lea.vmem %s0, %s180
      %s182 = smul.u32 64, %s19
      %s183 = smul.u32 %s19, %s18
      %s184 = smul.u32 64, %s183
      %p185 = scmp.lt.s32.totalorder %s184, 255
      %s186 = scalar_select %p185, %s184, 255
      %s187 = smul.addr %s186, 4
      %s188 = scalar_lea.vmem %s3, %s187
      %s189 = smul.u32 %s19, %s18
      %s190 = smul.u32 64, %s189
      %p191 = scmp.eq.s32.totalorder %s18, 0
      %p192 = scmp.eq.s32.totalorder %s19, 0
      %p193 = pnand %p191, %p192
      %p194 = pneg %p193
      // Predicated region
      $region33: #{generator_forward.17} parent=31 // pred_check
        _
      $region34: #{generator_forward.17} parent=31 // pred_check_branch
        %196 = sbr.rel (%p193) target = $region36
      $region35: #{generator_forward.17} parent=31 // pred_region
        %vm197 = vcmask 57344
        %198 = vst.msk [vmem:[#allocation2] sm:$0x1] %vm197, 0.0
        %199 = vst.msk [vmem:[#allocation3] sm:$0x1] %vm197, 0.0
      $region36: #{generator_forward.17} parent=31 // pred_fallthru
        _
      // Predicated region
      $region37: #{generator_forward.17} parent=31 // pred_check
        %p200 = pneg %p191
      $region38: #{generator_forward.17} parent=31 // pred_check_branch
        %202 = sbr.rel (%p200) target = $region40
      $region39: #{generator_forward.17} parent=31 // pred_region
        %v203 = vld [vmem:[%s181] sm:$0xff]
        %v204 = vld [vmem:[%s181 + $0x8] sm:$0xff]
        %v205 = vld [vmem:[%s181 + $0x10] sm:$0xff]
        %v206 = vld [vmem:[%s181 + $0x18] sm:$0xff]
        %v207 = vld [vmem:[%s181 + $0x20] sm:$0xff]
        %v208 = vld [vmem:[%s181 + $0x28] sm:$0xff]
        %v209 = vld [vmem:[%s181 + $0x30] sm:$0xff]
        %v210 = vld [vmem:[%s181 + $0x38] sm:$0xff]
        %v211 = vld [vmem:[%s181 + $0x40] sm:$0xff]
        %v212 = vld [vmem:[%s181 + $0x48] sm:$0xff]
        %v213 = vld [vmem:[%s181 + $0x50] sm:$0xff]
        %v214 = vld [vmem:[%s181 + $0x58] sm:$0xff]
        %v215 = vld [vmem:[%s181 + $0x60] sm:$0xff]
        %v216 = vld [vmem:[%s181 + $0x68] sm:$0xff]
        %v217 = vld [vmem:[%s181 + $0x70] sm:$0xff]
        %v218 = vld [vmem:[%s181 + $0x78] sm:$0xff]
        %v219 = vld [vmem:[%s181 + $0x80] sm:$0xff]
        %v220 = vld [vmem:[%s181 + $0x88] sm:$0xff]
        %v221 = vld [vmem:[%s181 + $0x90] sm:$0xff]
        %v222 = vld [vmem:[%s181 + $0x98] sm:$0xff]
        %v223 = vld [vmem:[%s181 + $0xa0] sm:$0xff]
        %v224 = vld [vmem:[%s181 + $0xa8] sm:$0xff]
        %v225 = vld [vmem:[%s181 + $0xb0] sm:$0xff]
        %v226 = vld [vmem:[%s181 + $0xb8] sm:$0xff]
        %v227 = vld [vmem:[%s181 + $0xc0] sm:$0xff]
        %v228 = vld [vmem:[%s181 + $0xc8] sm:$0xff]
        %v229 = vld [vmem:[%s181 + $0xd0] sm:$0xff]
        %v230 = vld [vmem:[%s181 + $0xd8] sm:$0xff]
        %v231 = vld [vmem:[%s181 + $0xe0] sm:$0xff]
        %v232 = vld [vmem:[%s181 + $0xe8] sm:$0xff]
        %v233 = vld [vmem:[%s181 + $0xf0] sm:$0xff]
        %v234 = vld [vmem:[%s181 + $0xf8] sm:$0xff]
        %v235 = vld [vmem:[%s181 + $0x100] sm:$0xff]
        %v236 = vld [vmem:[%s181 + $0x108] sm:$0xff]
        %v237 = vld [vmem:[%s181 + $0x110] sm:$0xff]
        %v238 = vld [vmem:[%s181 + $0x118] sm:$0xff]
        %v239 = vld [vmem:[%s181 + $0x120] sm:$0xff]
        %v240 = vld [vmem:[%s181 + $0x128] sm:$0xff]
        %v241 = vld [vmem:[%s181 + $0x130] sm:$0xff]
        %v242 = vld [vmem:[%s181 + $0x138] sm:$0xff]
        %v243 = vld [vmem:[%s181 + $0x140] sm:$0xff]
        %v244 = vld [vmem:[%s181 + $0x148] sm:$0xff]
        %v245 = vld [vmem:[%s181 + $0x150] sm:$0xff]
        %v246 = vld [vmem:[%s181 + $0x158] sm:$0xff]
        %v247 = vld [vmem:[%s181 + $0x160] sm:$0xff]
        %v248 = vld [vmem:[%s181 + $0x168] sm:$0xff]
        %v249 = vld [vmem:[%s181 + $0x170] sm:$0xff]
        %v250 = vld [vmem:[%s181 + $0x178] sm:$0xff]
        %v251 = vld [vmem:[%s181 + $0x180] sm:$0xff]
        %v252 = vld [vmem:[%s181 + $0x188] sm:$0xff]
        %v253 = vld [vmem:[%s181 + $0x190] sm:$0xff]
        %v254 = vld [vmem:[%s181 + $0x198] sm:$0xff]
        %v255 = vld [vmem:[%s181 + $0x1a0] sm:$0xff]
        %v256 = vld [vmem:[%s181 + $0x1a8] sm:$0xff]
        %v257 = vld [vmem:[%s181 + $0x1b0] sm:$0xff]
        %v258 = vld [vmem:[%s181 + $0x1b8] sm:$0xff]
        %v259 = vld [vmem:[%s181 + $0x1c0] sm:$0xff]
        %v260 = vld [vmem:[%s181 + $0x1c8] sm:$0xff]
        %v261 = vld [vmem:[%s181 + $0x1d0] sm:$0xff]
        %v262 = vld [vmem:[%s181 + $0x1d8] sm:$0xff]
        %v263 = vld [vmem:[%s181 + $0x1e0] sm:$0xff]
        %v264 = vld [vmem:[%s181 + $0x1e8] sm:$0xff]
        %v265 = vld [vmem:[%s181 + $0x1f0] sm:$0xff]
        %v266 = vld [vmem:[%s181 + $0x1f8] sm:$0xff]
        %v267 = vld [vmem:[#allocation2] sm:$0x1]
        %vm268 = vcmask 64512
        %v269 = vsel %vm268, %v203, 0.0
        %v270 = vsel %vm268, %v204, 0.0
        %v271 = vadd.f32 %v269, %v270
        %v272 = vsel %vm268, %v205, 0.0
        %v273 = vadd.f32 %v271, %v272
        %v274 = vsel %vm268, %v206, 0.0
        %v275 = vadd.f32 %v273, %v274
        %v276 = vsel %vm268, %v207, 0.0
        %v277 = vadd.f32 %v275, %v276
        %v278 = vsel %vm268, %v208, 0.0
        %v279 = vadd.f32 %v277, %v278
        %v280 = vsel %vm268, %v209, 0.0
        %v281 = vadd.f32 %v279, %v280
        %v282 = vsel %vm268, %v210, 0.0
        %v283 = vadd.f32 %v281, %v282
        %v284 = vsel %vm268, %v211, 0.0
        %v285 = vadd.f32 %v283, %v284
        %v286 = vsel %vm268, %v212, 0.0
        %v287 = vadd.f32 %v285, %v286
        %v288 = vsel %vm268, %v213, 0.0
        %v289 = vadd.f32 %v287, %v288
        %v290 = vsel %vm268, %v214, 0.0
        %v291 = vadd.f32 %v289, %v290
        %v292 = vsel %vm268, %v215, 0.0
        %v293 = vadd.f32 %v291, %v292
        %v294 = vsel %vm268, %v216, 0.0
        %v295 = vadd.f32 %v293, %v294
        %v296 = vsel %vm268, %v217, 0.0
        %v297 = vadd.f32 %v295, %v296
        %v298 = vsel %vm268, %v218, 0.0
        %v299 = vadd.f32 %v297, %v298
        %v300 = vsel %vm268, %v219, 0.0
        %v301 = vadd.f32 %v299, %v300
        %v302 = vsel %vm268, %v220, 0.0
        %v303 = vadd.f32 %v301, %v302
        %v304 = vsel %vm268, %v221, 0.0
        %v305 = vadd.f32 %v303, %v304
        %v306 = vsel %vm268, %v222, 0.0
        %v307 = vadd.f32 %v305, %v306
        %v308 = vsel %vm268, %v223, 0.0
        %v309 = vadd.f32 %v307, %v308
        %v310 = vsel %vm268, %v224, 0.0
        %v311 = vadd.f32 %v309, %v310
        %v312 = vsel %vm268, %v225, 0.0
        %v313 = vadd.f32 %v311, %v312
        %v314 = vsel %vm268, %v226, 0.0
        %v315 = vadd.f32 %v313, %v314
        %v316 = vsel %vm268, %v227, 0.0
        %v317 = vadd.f32 %v315, %v316
        %v318 = vsel %vm268, %v228, 0.0
        %v319 = vadd.f32 %v317, %v318
        %v320 = vsel %vm268, %v229, 0.0
        %v321 = vadd.f32 %v319, %v320
        %v322 = vsel %vm268, %v230, 0.0
        %v323 = vadd.f32 %v321, %v322
        %v324 = vsel %vm268, %v231, 0.0
        %v325 = vadd.f32 %v323, %v324
        %v326 = vsel %vm268, %v232, 0.0
        %v327 = vadd.f32 %v325, %v326
        %v328 = vsel %vm268, %v233, 0.0
        %v329 = vadd.f32 %v327, %v328
        %v330 = vsel %vm268, %v234, 0.0
        %v331 = vadd.f32 %v329, %v330
        %v332 = vsel %vm268, %v235, 0.0
        %v333 = vadd.f32 %v331, %v332
        %v334 = vsel %vm268, %v236, 0.0
        %v335 = vadd.f32 %v333, %v334
        %v336 = vsel %vm268, %v237, 0.0
        %v337 = vadd.f32 %v335, %v336
        %v338 = vsel %vm268, %v238, 0.0
        %v339 = vadd.f32 %v337, %v338
        %v340 = vsel %vm268, %v239, 0.0
        %v341 = vadd.f32 %v339, %v340
        %v342 = vsel %vm268, %v240, 0.0
        %v343 = vadd.f32 %v341, %v342
        %v344 = vsel %vm268, %v241, 0.0
        %v345 = vadd.f32 %v343, %v344
        %v346 = vsel %vm268, %v242, 0.0
        %v347 = vadd.f32 %v345, %v346
        %v348 = vsel %vm268, %v243, 0.0
        %v349 = vadd.f32 %v347, %v348
        %v350 = vsel %vm268, %v244, 0.0
        %v351 = vadd.f32 %v349, %v350
        %v352 = vsel %vm268, %v245, 0.0
        %v353 = vadd.f32 %v351, %v352
        %v354 = vsel %vm268, %v246, 0.0
        %v355 = vadd.f32 %v353, %v354
        %v356 = vsel %vm268, %v247, 0.0
        %v357 = vadd.f32 %v355, %v356
        %v358 = vsel %vm268, %v248, 0.0
        %v359 = vadd.f32 %v357, %v358
        %v360 = vsel %vm268, %v249, 0.0
        %v361 = vadd.f32 %v359, %v360
        %v362 = vsel %vm268, %v250, 0.0
        %v363 = vadd.f32 %v361, %v362
        %v364 = vsel %vm268, %v251, 0.0
        %v365 = vadd.f32 %v363, %v364
        %v366 = vsel %vm268, %v252, 0.0
        %v367 = vadd.f32 %v365, %v366
        %v368 = vsel %vm268, %v253, 0.0
        %v369 = vadd.f32 %v367, %v368
        %v370 = vsel %vm268, %v254, 0.0
        %v371 = vadd.f32 %v369, %v370
        %v372 = vsel %vm268, %v255, 0.0
        %v373 = vadd.f32 %v371, %v372
        %v374 = vsel %vm268, %v256, 0.0
        %v375 = vadd.f32 %v373, %v374
        %v376 = vsel %vm268, %v257, 0.0
        %v377 = vadd.f32 %v375, %v376
        %v378 = vsel %vm268, %v258, 0.0
        %v379 = vadd.f32 %v377, %v378
        %v380 = vsel %vm268, %v259, 0.0
        %v381 = vadd.f32 %v379, %v380
        %v382 = vsel %vm268, %v260, 0.0
        %v383 = vadd.f32 %v381, %v382
        %v384 = vsel %vm268, %v261, 0.0
        %v385 = vadd.f32 %v383, %v384
        %v386 = vsel %vm268, %v262, 0.0
        %v387 = vadd.f32 %v385, %v386
        %v388 = vsel %vm268, %v263, 0.0
        %v389 = vadd.f32 %v387, %v388
        %v390 = vsel %vm268, %v264, 0.0
        %v391 = vadd.f32 %v389, %v390
        %v392 = vsel %vm268, %v265, 0.0
        %v393 = vadd.f32 %v391, %v392
        %v394 = vsel %vm268, %v266, 0.0
        %v395 = vadd.f32 %v393, %v394
        %v396 = vrot.slane %v395, 4
        %v397 = vadd.f32 %v395, %v396
        %v398 = vrot.slane %v397, 2
        %v399 = vadd.f32 %v397, %v398
        %v400 = vrot.slane %v399, 1
        %v401 = vadd.f32 %v399, %v400
        %v402 = vadd.f32 %v267, %v401
        %vm403 = vcmask 57344
        %404 = vst.msk [vmem:[#allocation2] sm:$0x1] %vm403, %v402
        %v405 = vld [vmem:[#allocation3] sm:$0x1]
        %v406 = vmul.f32 %v203, %v203
        %v407 = vmul.f32 %v204, %v204
        %v408 = vmul.f32 %v205, %v205
        %v409 = vmul.f32 %v206, %v206
        %v410 = vmul.f32 %v207, %v207
        %v411 = vmul.f32 %v208, %v208
        %v412 = vmul.f32 %v209, %v209
        %v413 = vmul.f32 %v210, %v210
        %v414 = vmul.f32 %v211, %v211
        %v415 = vmul.f32 %v212, %v212
        %v416 = vmul.f32 %v213, %v213
        %v417 = vmul.f32 %v214, %v214
        %v418 = vmul.f32 %v215, %v215
        %v419 = vmul.f32 %v216, %v216
        %v420 = vmul.f32 %v217, %v217
        %v421 = vmul.f32 %v218, %v218
        %v422 = vmul.f32 %v219, %v219
        %v423 = vmul.f32 %v220, %v220
        %v424 = vmul.f32 %v221, %v221
        %v425 = vmul.f32 %v222, %v222
        %v426 = vmul.f32 %v223, %v223
        %v427 = vmul.f32 %v224, %v224
        %v428 = vmul.f32 %v225, %v225
        %v429 = vmul.f32 %v226, %v226
        %v430 = vmul.f32 %v227, %v227
        %v431 = vmul.f32 %v228, %v228
        %v432 = vmul.f32 %v229, %v229
        %v433 = vmul.f32 %v230, %v230
        %v434 = vmul.f32 %v231, %v231
        %v435 = vmul.f32 %v232, %v232
        %v436 = vmul.f32 %v233, %v233
        %v437 = vmul.f32 %v234, %v234
        %v438 = vmul.f32 %v235, %v235
        %v439 = vmul.f32 %v236, %v236
        %v440 = vmul.f32 %v237, %v237
        %v441 = vmul.f32 %v238, %v238
        %v442 = vmul.f32 %v239, %v239
        %v443 = vmul.f32 %v240, %v240
        %v444 = vmul.f32 %v241, %v241
        %v445 = vmul.f32 %v242, %v242
        %v446 = vmul.f32 %v243, %v243
        %v447 = vmul.f32 %v244, %v244
        %v448 = vmul.f32 %v245, %v245
        %v449 = vmul.f32 %v246, %v246
        %v450 = vmul.f32 %v247, %v247
        %v451 = vmul.f32 %v248, %v248
        %v452 = vmul.f32 %v249, %v249
        %v453 = vmul.f32 %v250, %v250
        %v454 = vmul.f32 %v251, %v251
        %v455 = vmul.f32 %v252, %v252
        %v456 = vmul.f32 %v253, %v253
        %v457 = vmul.f32 %v254, %v254
        %v458 = vmul.f32 %v255, %v255
        %v459 = vmul.f32 %v256, %v256
        %v460 = vmul.f32 %v257, %v257
        %v461 = vmul.f32 %v258, %v258
        %v462 = vmul.f32 %v259, %v259
        %v463 = vmul.f32 %v260, %v260
        %v464 = vmul.f32 %v261, %v261
        %v465 = vmul.f32 %v262, %v262
        %v466 = vmul.f32 %v263, %v263
        %v467 = vmul.f32 %v264, %v264
        %v468 = vmul.f32 %v265, %v265
        %v469 = vmul.f32 %v266, %v266
        %v470 = vsel %vm268, %v406, 0.0
        %v471 = vsel %vm268, %v407, 0.0
        %v472 = vadd.f32 %v470, %v471
        %v473 = vsel %vm268, %v408, 0.0
        %v474 = vadd.f32 %v472, %v473
        %v475 = vsel %vm268, %v409, 0.0
        %v476 = vadd.f32 %v474, %v475
        %v477 = vsel %vm268, %v410, 0.0
        %v478 = vadd.f32 %v476, %v477
        %v479 = vsel %vm268, %v411, 0.0
        %v480 = vadd.f32 %v478, %v479
        %v481 = vsel %vm268, %v412, 0.0
        %v482 = vadd.f32 %v480, %v481
        %v483 = vsel %vm268, %v413, 0.0
        %v484 = vadd.f32 %v482, %v483
        %v485 = vsel %vm268, %v414, 0.0
        %v486 = vadd.f32 %v484, %v485
        %v487 = vsel %vm268, %v415, 0.0
        %v488 = vadd.f32 %v486, %v487
        %v489 = vsel %vm268, %v416, 0.0
        %v490 = vadd.f32 %v488, %v489
        %v491 = vsel %vm268, %v417, 0.0
        %v492 = vadd.f32 %v490, %v491
        %v493 = vsel %vm268, %v418, 0.0
        %v494 = vadd.f32 %v492, %v493
        %v495 = vsel %vm268, %v419, 0.0
        %v496 = vadd.f32 %v494, %v495
        %v497 = vsel %vm268, %v420, 0.0
        %v498 = vadd.f32 %v496, %v497
        %v499 = vsel %vm268, %v421, 0.0
        %v500 = vadd.f32 %v498, %v499
        %v501 = vsel %vm268, %v422, 0.0
        %v502 = vadd.f32 %v500, %v501
        %v503 = vsel %vm268, %v423, 0.0
        %v504 = vadd.f32 %v502, %v503
        %v505 = vsel %vm268, %v424, 0.0
        %v506 = vadd.f32 %v504, %v505
        %v507 = vsel %vm268, %v425, 0.0
        %v508 = vadd.f32 %v506, %v507
        %v509 = vsel %vm268, %v426, 0.0
        %v510 = vadd.f32 %v508, %v509
        %v511 = vsel %vm268, %v427, 0.0
        %v512 = vadd.f32 %v510, %v511
        %v513 = vsel %vm268, %v428, 0.0
        %v514 = vadd.f32 %v512, %v513
        %v515 = vsel %vm268, %v429, 0.0
        %v516 = vadd.f32 %v514, %v515
        %v517 = vsel %vm268, %v430, 0.0
        %v518 = vadd.f32 %v516, %v517
        %v519 = vsel %vm268, %v431, 0.0
        %v520 = vadd.f32 %v518, %v519
        %v521 = vsel %vm268, %v432, 0.0
        %v522 = vadd.f32 %v520, %v521
        %v523 = vsel %vm268, %v433, 0.0
        %v524 = vadd.f32 %v522, %v523
        %v525 = vsel %vm268, %v434, 0.0
        %v526 = vadd.f32 %v524, %v525
        %v527 = vsel %vm268, %v435, 0.0
        %v528 = vadd.f32 %v526, %v527
        %v529 = vsel %vm268, %v436, 0.0
        %v530 = vadd.f32 %v528, %v529
        %v531 = vsel %vm268, %v437, 0.0
        %v532 = vadd.f32 %v530, %v531
        %v533 = vsel %vm268, %v438, 0.0
        %v534 = vadd.f32 %v532, %v533
        %v535 = vsel %vm268, %v439, 0.0
        %v536 = vadd.f32 %v534, %v535
        %v537 = vsel %vm268, %v440, 0.0
        %v538 = vadd.f32 %v536, %v537
        %v539 = vsel %vm268, %v441, 0.0
        %v540 = vadd.f32 %v538, %v539
        %v541 = vsel %vm268, %v442, 0.0
        %v542 = vadd.f32 %v540, %v541
        %v543 = vsel %vm268, %v443, 0.0
        %v544 = vadd.f32 %v542, %v543
        %v545 = vsel %vm268, %v444, 0.0
        %v546 = vadd.f32 %v544, %v545
        %v547 = vsel %vm268, %v445, 0.0
        %v548 = vadd.f32 %v546, %v547
        %v549 = vsel %vm268, %v446, 0.0
        %v550 = vadd.f32 %v548, %v549
        %v551 = vsel %vm268, %v447, 0.0
        %v552 = vadd.f32 %v550, %v551
        %v553 = vsel %vm268, %v448, 0.0
        %v554 = vadd.f32 %v552, %v553
        %v555 = vsel %vm268, %v449, 0.0
        %v556 = vadd.f32 %v554, %v555
        %v557 = vsel %vm268, %v450, 0.0
        %v558 = vadd.f32 %v556, %v557
        %v559 = vsel %vm268, %v451, 0.0
        %v560 = vadd.f32 %v558, %v559
        %v561 = vsel %vm268, %v452, 0.0
        %v562 = vadd.f32 %v560, %v561
        %v563 = vsel %vm268, %v453, 0.0
        %v564 = vadd.f32 %v562, %v563
        %v565 = vsel %vm268, %v454, 0.0
        %v566 = vadd.f32 %v564, %v565
        %v567 = vsel %vm268, %v455, 0.0
        %v568 = vadd.f32 %v566, %v567
        %v569 = vsel %vm268, %v456, 0.0
        %v570 = vadd.f32 %v568, %v569
        %v571 = vsel %vm268, %v457, 0.0
        %v572 = vadd.f32 %v570, %v571
        %v573 = vsel %vm268, %v458, 0.0
        %v574 = vadd.f32 %v572, %v573
        %v575 = vsel %vm268, %v459, 0.0
        %v576 = vadd.f32 %v574, %v575
        %v577 = vsel %vm268, %v460, 0.0
        %v578 = vadd.f32 %v576, %v577
        %v579 = vsel %vm268, %v461, 0.0
        %v580 = vadd.f32 %v578, %v579
        %v581 = vsel %vm268, %v462, 0.0
        %v582 = vadd.f32 %v580, %v581
        %v583 = vsel %vm268, %v463, 0.0
        %v584 = vadd.f32 %v582, %v583
        %v585 = vsel %vm268, %v464, 0.0
        %v586 = vadd.f32 %v584, %v585
        %v587 = vsel %vm268, %v465, 0.0
        %v588 = vadd.f32 %v586, %v587
        %v589 = vsel %vm268, %v466, 0.0
        %v590 = vadd.f32 %v588, %v589
        %v591 = vsel %vm268, %v467, 0.0
        %v592 = vadd.f32 %v590, %v591
        %v593 = vsel %vm268, %v468, 0.0
        %v594 = vadd.f32 %v592, %v593
        %v595 = vsel %vm268, %v469, 0.0
        %v596 = vadd.f32 %v594, %v595
        %v597 = vrot.slane %v596, 4
        %v598 = vadd.f32 %v596, %v597
        %v599 = vrot.slane %v598, 2
        %v600 = vadd.f32 %v598, %v599
        %v601 = vrot.slane %v600, 1
        %v602 = vadd.f32 %v600, %v601
        %v603 = vadd.f32 %v405, %v602
        %604 = vst.msk [vmem:[#allocation3] sm:$0x1] %vm403, %v603
      $region40: #{generator_forward.17} parent=31 // pred_fallthru
        _
      %p605 = scmp.eq.s32.totalorder %s18, 1
      // Predicated region
      $region41: #{generator_forward.17} parent=31 // pred_check
        %p606 = pneg %p605
      $region42: #{generator_forward.17} parent=31 // pred_check_branch
        %608 = sbr.rel (%p606) target = $region44
      $region43: #{generator_forward.17} parent=31 // pred_region
        %v609 = vld [vmem:[#allocation2] sm:$0x1]
        %v610 = vmul.f32 %v609, 0.00048828125
        %v611 = vld [vmem:[#allocation3] sm:$0x1]
        %v612 = vmul.f32 %v611, 0.00048828125
        %v613 = vmul.f32 %v610, %v610
        %v614 = vsub.f32 %v612, %v613
        %v615 = vld [vmem:[%s1] sm:$0x1]
        %v616 = vadd.f32 %v614, 1e-05
        %v617 = vrsqrt.pop %v616
        %v618 = vmul.f32 %v615, %v617
        %v619 = vld [vmem:[%s2] sm:$0x1]
        %v620 = vmul.f32 %v610, %v618
        %v621 = vsub.f32 %v619, %v620
        %v622 = vld [vmem:[%s181] sm:$0xff]
        %v623 = vld [vmem:[%s181 + $0x8] sm:$0xff]
        %v624 = vld [vmem:[%s181 + $0x10] sm:$0xff]
        %v625 = vld [vmem:[%s181 + $0x18] sm:$0xff]
        %v626 = vld [vmem:[%s181 + $0x20] sm:$0xff]
        %v627 = vld [vmem:[%s181 + $0x28] sm:$0xff]
        %v628 = vld [vmem:[%s181 + $0x30] sm:$0xff]
        %v629 = vld [vmem:[%s181 + $0x38] sm:$0xff]
        %v630 = vld [vmem:[%s181 + $0x40] sm:$0xff]
        %v631 = vld [vmem:[%s181 + $0x48] sm:$0xff]
        %v632 = vld [vmem:[%s181 + $0x50] sm:$0xff]
        %v633 = vld [vmem:[%s181 + $0x58] sm:$0xff]
        %v634 = vld [vmem:[%s181 + $0x60] sm:$0xff]
        %v635 = vld [vmem:[%s181 + $0x68] sm:$0xff]
        %v636 = vld [vmem:[%s181 + $0x70] sm:$0xff]
        %v637 = vld [vmem:[%s181 + $0x78] sm:$0xff]
        %v638 = vld [vmem:[%s181 + $0x80] sm:$0xff]
        %v639 = vld [vmem:[%s181 + $0x88] sm:$0xff]
        %v640 = vld [vmem:[%s181 + $0x90] sm:$0xff]
        %v641 = vld [vmem:[%s181 + $0x98] sm:$0xff]
        %v642 = vld [vmem:[%s181 + $0xa0] sm:$0xff]
        %v643 = vld [vmem:[%s181 + $0xa8] sm:$0xff]
        %v644 = vld [vmem:[%s181 + $0xb0] sm:$0xff]
        %v645 = vld [vmem:[%s181 + $0xb8] sm:$0xff]
        %v646 = vld [vmem:[%s181 + $0xc0] sm:$0xff]
        %v647 = vld [vmem:[%s181 + $0xc8] sm:$0xff]
        %v648 = vld [vmem:[%s181 + $0xd0] sm:$0xff]
        %v649 = vld [vmem:[%s181 + $0xd8] sm:$0xff]
        %v650 = vld [vmem:[%s181 + $0xe0] sm:$0xff]
        %v651 = vld [vmem:[%s181 + $0xe8] sm:$0xff]
        %v652 = vld [vmem:[%s181 + $0xf0] sm:$0xff]
        %v653 = vld [vmem:[%s181 + $0xf8] sm:$0xff]
        %v654 = vld [vmem:[%s181 + $0x100] sm:$0xff]
        %v655 = vld [vmem:[%s181 + $0x108] sm:$0xff]
        %v656 = vld [vmem:[%s181 + $0x110] sm:$0xff]
        %v657 = vld [vmem:[%s181 + $0x118] sm:$0xff]
        %v658 = vld [vmem:[%s181 + $0x120] sm:$0xff]
        %v659 = vld [vmem:[%s181 + $0x128] sm:$0xff]
        %v660 = vld [vmem:[%s181 + $0x130] sm:$0xff]
        %v661 = vld [vmem:[%s181 + $0x138] sm:$0xff]
        %v662 = vld [vmem:[%s181 + $0x140] sm:$0xff]
        %v663 = vld [vmem:[%s181 + $0x148] sm:$0xff]
        %v664 = vld [vmem:[%s181 + $0x150] sm:$0xff]
        %v665 = vld [vmem:[%s181 + $0x158] sm:$0xff]
        %v666 = vld [vmem:[%s181 + $0x160] sm:$0xff]
        %v667 = vld [vmem:[%s181 + $0x168] sm:$0xff]
        %v668 = vld [vmem:[%s181 + $0x170] sm:$0xff]
        %v669 = vld [vmem:[%s181 + $0x178] sm:$0xff]
        %v670 = vld [vmem:[%s181 + $0x180] sm:$0xff]
        %v671 = vld [vmem:[%s181 + $0x188] sm:$0xff]
        %v672 = vld [vmem:[%s181 + $0x190] sm:$0xff]
        %v673 = vld [vmem:[%s181 + $0x198] sm:$0xff]
        %v674 = vld [vmem:[%s181 + $0x1a0] sm:$0xff]
        %v675 = vld [vmem:[%s181 + $0x1a8] sm:$0xff]
        %v676 = vld [vmem:[%s181 + $0x1b0] sm:$0xff]
        %v677 = vld [vmem:[%s181 + $0x1b8] sm:$0xff]
        %v678 = vld [vmem:[%s181 + $0x1c0] sm:$0xff]
        %v679 = vld [vmem:[%s181 + $0x1c8] sm:$0xff]
        %v680 = vld [vmem:[%s181 + $0x1d0] sm:$0xff]
        %v681 = vld [vmem:[%s181 + $0x1d8] sm:$0xff]
        %v682 = vld [vmem:[%s181 + $0x1e0] sm:$0xff]
        %v683 = vld [vmem:[%s181 + $0x1e8] sm:$0xff]
        %v684 = vld [vmem:[%s181 + $0x1f0] sm:$0xff]
        %v685 = vld [vmem:[%s181 + $0x1f8] sm:$0xff]
        %v687 = vlaneseq
        %v688 = vshrl.u32 %v687, 7
        %v689 = vsub.s32 0, %v688
        %v690 = vrot.slane %v618, %v689
        %v692 = vmul.f32 %v622, %v690
        %v693 = vmul.f32 %v623, %v690
        %v694 = vmul.f32 %v624, %v690
        %v695 = vmul.f32 %v625, %v690
        %v696 = vmul.f32 %v626, %v690
        %v697 = vmul.f32 %v627, %v690
        %v698 = vmul.f32 %v628, %v690
        %v699 = vmul.f32 %v629, %v690
        %v700 = vmul.f32 %v630, %v690
        %v701 = vmul.f32 %v631, %v690
        %v702 = vmul.f32 %v632, %v690
        %v703 = vmul.f32 %v633, %v690
        %v704 = vmul.f32 %v634, %v690
        %v705 = vmul.f32 %v635, %v690
        %v706 = vmul.f32 %v636, %v690
        %v707 = vmul.f32 %v637, %v690
        %v708 = vmul.f32 %v638, %v690
        %v709 = vmul.f32 %v639, %v690
        %v710 = vmul.f32 %v640, %v690
        %v711 = vmul.f32 %v641, %v690
        %v712 = vmul.f32 %v642, %v690
        %v713 = vmul.f32 %v643, %v690
        %v714 = vmul.f32 %v644, %v690
        %v715 = vmul.f32 %v645, %v690
        %v716 = vmul.f32 %v646, %v690
        %v717 = vmul.f32 %v647, %v690
        %v718 = vmul.f32 %v648, %v690
        %v719 = vmul.f32 %v649, %v690
        %v720 = vmul.f32 %v650, %v690
        %v721 = vmul.f32 %v651, %v690
        %v722 = vmul.f32 %v652, %v690
        %v723 = vmul.f32 %v653, %v690
        %v724 = vmul.f32 %v654, %v690
        %v725 = vmul.f32 %v655, %v690
        %v726 = vmul.f32 %v656, %v690
        %v727 = vmul.f32 %v657, %v690
        %v728 = vmul.f32 %v658, %v690
        %v729 = vmul.f32 %v659, %v690
        %v730 = vmul.f32 %v660, %v690
        %v731 = vmul.f32 %v661, %v690
        %v732 = vmul.f32 %v662, %v690
        %v733 = vmul.f32 %v663, %v690
        %v734 = vmul.f32 %v664, %v690
        %v735 = vmul.f32 %v665, %v690
        %v736 = vmul.f32 %v666, %v690
        %v737 = vmul.f32 %v667, %v690
        %v738 = vmul.f32 %v668, %v690
        %v739 = vmul.f32 %v669, %v690
        %v740 = vmul.f32 %v670, %v690
        %v741 = vmul.f32 %v671, %v690
        %v742 = vmul.f32 %v672, %v690
        %v743 = vmul.f32 %v673, %v690
        %v744 = vmul.f32 %v674, %v690
        %v745 = vmul.f32 %v675, %v690
        %v746 = vmul.f32 %v676, %v690
        %v747 = vmul.f32 %v677, %v690
        %v748 = vmul.f32 %v678, %v690
        %v749 = vmul.f32 %v679, %v690
        %v750 = vmul.f32 %v680, %v690
        %v751 = vmul.f32 %v681, %v690
        %v752 = vmul.f32 %v682, %v690
        %v753 = vmul.f32 %v683, %v690
        %v754 = vmul.f32 %v684, %v690
        %v755 = vmul.f32 %v685, %v690
        %v757 = vlaneseq
        %v758 = vshrl.u32 %v757, 7
        %v759 = vsub.s32 0, %v758
        %v760 = vrot.slane %v621, %v759
        %v762 = vadd.f32 %v692, %v760
        %v763 = vadd.f32 %v693, %v760
        %v764 = vadd.f32 %v694, %v760
        %v765 = vadd.f32 %v695, %v760
        %v766 = vadd.f32 %v696, %v760
        %v767 = vadd.f32 %v697, %v760
        %v768 = vadd.f32 %v698, %v760
        %v769 = vadd.f32 %v699, %v760
        %v770 = vadd.f32 %v700, %v760
        %v771 = vadd.f32 %v701, %v760
        %v772 = vadd.f32 %v702, %v760
        %v773 = vadd.f32 %v703, %v760
        %v774 = vadd.f32 %v704, %v760
        %v775 = vadd.f32 %v705, %v760
        %v776 = vadd.f32 %v706, %v760
        %v777 = vadd.f32 %v707, %v760
        %v778 = vadd.f32 %v708, %v760
        %v779 = vadd.f32 %v709, %v760
        %v780 = vadd.f32 %v710, %v760
        %v781 = vadd.f32 %v711, %v760
        %v782 = vadd.f32 %v712, %v760
        %v783 = vadd.f32 %v713, %v760
        %v784 = vadd.f32 %v714, %v760
        %v785 = vadd.f32 %v715, %v760
        %v786 = vadd.f32 %v716, %v760
        %v787 = vadd.f32 %v717, %v760
        %v788 = vadd.f32 %v718, %v760
        %v789 = vadd.f32 %v719, %v760
        %v790 = vadd.f32 %v720, %v760
        %v791 = vadd.f32 %v721, %v760
        %v792 = vadd.f32 %v722, %v760
        %v793 = vadd.f32 %v723, %v760
        %v794 = vadd.f32 %v724, %v760
        %v795 = vadd.f32 %v725, %v760
        %v796 = vadd.f32 %v726, %v760
        %v797 = vadd.f32 %v727, %v760
        %v798 = vadd.f32 %v728, %v760
        %v799 = vadd.f32 %v729, %v760
        %v800 = vadd.f32 %v730, %v760
        %v801 = vadd.f32 %v731, %v760
        %v802 = vadd.f32 %v732, %v760
        %v803 = vadd.f32 %v733, %v760
        %v804 = vadd.f32 %v734, %v760
        %v805 = vadd.f32 %v735, %v760
        %v806 = vadd.f32 %v736, %v760
        %v807 = vadd.f32 %v737, %v760
        %v808 = vadd.f32 %v738, %v760
        %v809 = vadd.f32 %v739, %v760
        %v810 = vadd.f32 %v740, %v760
        %v811 = vadd.f32 %v741, %v760
        %v812 = vadd.f32 %v742, %v760
        %v813 = vadd.f32 %v743, %v760
        %v814 = vadd.f32 %v744, %v760
        %v815 = vadd.f32 %v745, %v760
        %v816 = vadd.f32 %v746, %v760
        %v817 = vadd.f32 %v747, %v760
        %v818 = vadd.f32 %v748, %v760
        %v819 = vadd.f32 %v749, %v760
        %v820 = vadd.f32 %v750, %v760
        %v821 = vadd.f32 %v751, %v760
        %v822 = vadd.f32 %v752, %v760
        %v823 = vadd.f32 %v753, %v760
        %v824 = vadd.f32 %v754, %v760
        %v825 = vadd.f32 %v755, %v760
        %v826 = vmax.f32 %v762, 0.0
        %v827 = vmax.f32 %v763, 0.0
        %v828 = vmax.f32 %v764, 0.0
        %v829 = vmax.f32 %v765, 0.0
        %v830 = vmax.f32 %v766, 0.0
        %v831 = vmax.f32 %v767, 0.0
        %v832 = vmax.f32 %v768, 0.0
        %v833 = vmax.f32 %v769, 0.0
        %v834 = vmax.f32 %v770, 0.0
        %v835 = vmax.f32 %v771, 0.0
        %v836 = vmax.f32 %v772, 0.0
        %v837 = vmax.f32 %v773, 0.0
        %v838 = vmax.f32 %v774, 0.0
        %v839 = vmax.f32 %v775, 0.0
        %v840 = vmax.f32 %v776, 0.0
        %v841 = vmax.f32 %v777, 0.0
        %v842 = vmax.f32 %v778, 0.0
        %v843 = vmax.f32 %v779, 0.0
        %v844 = vmax.f32 %v780, 0.0
        %v845 = vmax.f32 %v781, 0.0
        %v846 = vmax.f32 %v782, 0.0
        %v847 = vmax.f32 %v783, 0.0
        %v848 = vmax.f32 %v784, 0.0
        %v849 = vmax.f32 %v785, 0.0
        %v850 = vmax.f32 %v786, 0.0
        %v851 = vmax.f32 %v787, 0.0
        %v852 = vmax.f32 %v788, 0.0
        %v853 = vmax.f32 %v789, 0.0
        %v854 = vmax.f32 %v790, 0.0
        %v855 = vmax.f32 %v791, 0.0
        %v856 = vmax.f32 %v792, 0.0
        %v857 = vmax.f32 %v793, 0.0
        %v858 = vmax.f32 %v794, 0.0
        %v859 = vmax.f32 %v795, 0.0
        %v860 = vmax.f32 %v796, 0.0
        %v861 = vmax.f32 %v797, 0.0
        %v862 = vmax.f32 %v798, 0.0
        %v863 = vmax.f32 %v799, 0.0
        %v864 = vmax.f32 %v800, 0.0
        %v865 = vmax.f32 %v801, 0.0
        %v866 = vmax.f32 %v802, 0.0
        %v867 = vmax.f32 %v803, 0.0
        %v868 = vmax.f32 %v804, 0.0
        %v869 = vmax.f32 %v805, 0.0
        %v870 = vmax.f32 %v806, 0.0
        %v871 = vmax.f32 %v807, 0.0
        %v872 = vmax.f32 %v808, 0.0
        %v873 = vmax.f32 %v809, 0.0
        %v874 = vmax.f32 %v810, 0.0
        %v875 = vmax.f32 %v811, 0.0
        %v876 = vmax.f32 %v812, 0.0
        %v877 = vmax.f32 %v813, 0.0
        %v878 = vmax.f32 %v814, 0.0
        %v879 = vmax.f32 %v815, 0.0
        %v880 = vmax.f32 %v816, 0.0
        %v881 = vmax.f32 %v817, 0.0
        %v882 = vmax.f32 %v818, 0.0
        %v883 = vmax.f32 %v819, 0.0
        %v884 = vmax.f32 %v820, 0.0
        %v885 = vmax.f32 %v821, 0.0
        %v886 = vmax.f32 %v822, 0.0
        %v887 = vmax.f32 %v823, 0.0
        %v888 = vmax.f32 %v824, 0.0
        %v889 = vmax.f32 %v825, 0.0
        %v890 = vpack.c.bf16 %v827, %v826
        %v891 = vpack.c.bf16 %v829, %v828
        %v892 = vpack.c.bf16 %v831, %v830
        %v893 = vpack.c.bf16 %v833, %v832
        %v894 = vpack.c.bf16 %v835, %v834
        %v895 = vpack.c.bf16 %v837, %v836
        %v896 = vpack.c.bf16 %v839, %v838
        %v897 = vpack.c.bf16 %v841, %v840
        %v898 = vpack.c.bf16 %v843, %v842
        %v899 = vpack.c.bf16 %v845, %v844
        %v900 = vpack.c.bf16 %v847, %v846
        %v901 = vpack.c.bf16 %v849, %v848
        %v902 = vpack.c.bf16 %v851, %v850
        %v903 = vpack.c.bf16 %v853, %v852
        %v904 = vpack.c.bf16 %v855, %v854
        %v905 = vpack.c.bf16 %v857, %v856
        %v906 = vpack.c.bf16 %v859, %v858
        %v907 = vpack.c.bf16 %v861, %v860
        %v908 = vpack.c.bf16 %v863, %v862
        %v909 = vpack.c.bf16 %v865, %v864
        %v910 = vpack.c.bf16 %v867, %v866
        %v911 = vpack.c.bf16 %v869, %v868
        %v912 = vpack.c.bf16 %v871, %v870
        %v913 = vpack.c.bf16 %v873, %v872
        %v914 = vpack.c.bf16 %v875, %v874
        %v915 = vpack.c.bf16 %v877, %v876
        %v916 = vpack.c.bf16 %v879, %v878
        %v917 = vpack.c.bf16 %v881, %v880
        %v918 = vpack.c.bf16 %v883, %v882
        %v919 = vpack.c.bf16 %v885, %v884
        %v920 = vpack.c.bf16 %v887, %v886
        %v921 = vpack.c.bf16 %v889, %v888
        %v954 = vunpack.c.l.b16 %v890
        %v955 = vunpack.c.h.b16 %v890
        %v956 = vunpack.c.l.b16 %v891
        %v957 = vunpack.c.h.b16 %v891
        %v958 = vunpack.c.l.b16 %v892
        %v959 = vunpack.c.h.b16 %v892
        %v960 = vunpack.c.l.b16 %v893
        %v961 = vunpack.c.h.b16 %v893
        %v962 = vunpack.c.l.b16 %v894
        %v963 = vunpack.c.h.b16 %v894
        %v964 = vunpack.c.l.b16 %v895
        %v965 = vunpack.c.h.b16 %v895
        %v966 = vunpack.c.l.b16 %v896
        %v967 = vunpack.c.h.b16 %v896
        %v968 = vunpack.c.l.b16 %v897
        %v969 = vunpack.c.h.b16 %v897
        %v970 = vunpack.c.l.b16 %v898
        %v971 = vunpack.c.h.b16 %v898
        %v972 = vunpack.c.l.b16 %v899
        %v973 = vunpack.c.h.b16 %v899
        %v974 = vunpack.c.l.b16 %v900
        %v975 = vunpack.c.h.b16 %v900
        %v976 = vunpack.c.l.b16 %v901
        %v977 = vunpack.c.h.b16 %v901
        %v978 = vunpack.c.l.b16 %v902
        %v979 = vunpack.c.h.b16 %v902
        %v980 = vunpack.c.l.b16 %v903
        %v981 = vunpack.c.h.b16 %v903
        %v982 = vunpack.c.l.b16 %v904
        %v983 = vunpack.c.h.b16 %v904
        %v984 = vunpack.c.l.b16 %v905
        %v985 = vunpack.c.h.b16 %v905
        %v986 = vunpack.c.l.b16 %v906
        %v987 = vunpack.c.h.b16 %v906
        %v988 = vunpack.c.l.b16 %v907
        %v989 = vunpack.c.h.b16 %v907
        %v990 = vunpack.c.l.b16 %v908
        %v991 = vunpack.c.h.b16 %v908
        %v992 = vunpack.c.l.b16 %v909
        %v993 = vunpack.c.h.b16 %v909
        %v994 = vunpack.c.l.b16 %v910
        %v995 = vunpack.c.h.b16 %v910
        %v996 = vunpack.c.l.b16 %v911
        %v997 = vunpack.c.h.b16 %v911
        %v998 = vunpack.c.l.b16 %v912
        %v999 = vunpack.c.h.b16 %v912
        %v1000 = vunpack.c.l.b16 %v913
        %v1001 = vunpack.c.h.b16 %v913
        %v1002 = vunpack.c.l.b16 %v914
        %v1003 = vunpack.c.h.b16 %v914
        %v1004 = vunpack.c.l.b16 %v915
        %v1005 = vunpack.c.h.b16 %v915
        %v1006 = vunpack.c.l.b16 %v916
        %v1007 = vunpack.c.h.b16 %v916
        %v1008 = vunpack.c.l.b16 %v917
        %v1009 = vunpack.c.h.b16 %v917
        %v1010 = vunpack.c.l.b16 %v918
        %v1011 = vunpack.c.h.b16 %v918
        %v1012 = vunpack.c.l.b16 %v919
        %v1013 = vunpack.c.h.b16 %v919
        %v1014 = vunpack.c.l.b16 %v920
        %v1015 = vunpack.c.h.b16 %v920
        %v1016 = vunpack.c.l.b16 %v921
        %v1017 = vunpack.c.h.b16 %v921
        %v1018 = vpack.c.b16 %v954, %v954
        %v1019 = vpack.c.b16 %v955, %v955
        %v1020 = vpack.c.b16 %v956, %v956
        %v1021 = vpack.c.b16 %v957, %v957
        %v1022 = vpack.c.b16 %v958, %v958
        %v1023 = vpack.c.b16 %v959, %v959
        %v1024 = vpack.c.b16 %v960, %v960
        %v1025 = vpack.c.b16 %v961, %v961
        %v1026 = vpack.c.b16 %v962, %v962
        %v1027 = vpack.c.b16 %v963, %v963
        %v1028 = vpack.c.b16 %v964, %v964
        %v1029 = vpack.c.b16 %v965, %v965
        %v1030 = vpack.c.b16 %v966, %v966
        %v1031 = vpack.c.b16 %v967, %v967
        %v1032 = vpack.c.b16 %v968, %v968
        %v1033 = vpack.c.b16 %v969, %v969
        %v1034 = vpack.c.b16 %v970, %v970
        %v1035 = vpack.c.b16 %v971, %v971
        %v1036 = vpack.c.b16 %v972, %v972
        %v1037 = vpack.c.b16 %v973, %v973
        %v1038 = vpack.c.b16 %v974, %v974
        %v1039 = vpack.c.b16 %v975, %v975
        %v1040 = vpack.c.b16 %v976, %v976
        %v1041 = vpack.c.b16 %v977, %v977
        %v1042 = vpack.c.b16 %v978, %v978
        %v1043 = vpack.c.b16 %v979, %v979
        %v1044 = vpack.c.b16 %v980, %v980
        %v1045 = vpack.c.b16 %v981, %v981
        %v1046 = vpack.c.b16 %v982, %v982
        %v1047 = vpack.c.b16 %v983, %v983
        %v1048 = vpack.c.b16 %v984, %v984
        %v1049 = vpack.c.b16 %v985, %v985
        %v1050 = vpack.c.b16 %v986, %v986
        %v1051 = vpack.c.b16 %v987, %v987
        %v1052 = vpack.c.b16 %v988, %v988
        %v1053 = vpack.c.b16 %v989, %v989
        %v1054 = vpack.c.b16 %v990, %v990
        %v1055 = vpack.c.b16 %v991, %v991
        %v1056 = vpack.c.b16 %v992, %v992
        %v1057 = vpack.c.b16 %v993, %v993
        %v1058 = vpack.c.b16 %v994, %v994
        %v1059 = vpack.c.b16 %v995, %v995
        %v1060 = vpack.c.b16 %v996, %v996
        %v1061 = vpack.c.b16 %v997, %v997
        %v1062 = vpack.c.b16 %v998, %v998
        %v1063 = vpack.c.b16 %v999, %v999
        %v1064 = vpack.c.b16 %v1000, %v1000
        %v1065 = vpack.c.b16 %v1001, %v1001
        %v1066 = vpack.c.b16 %v1002, %v1002
        %v1067 = vpack.c.b16 %v1003, %v1003
        %v1068 = vpack.c.b16 %v1004, %v1004
        %v1069 = vpack.c.b16 %v1005, %v1005
        %v1070 = vpack.c.b16 %v1006, %v1006
        %v1071 = vpack.c.b16 %v1007, %v1007
        %v1072 = vpack.c.b16 %v1008, %v1008
        %v1073 = vpack.c.b16 %v1009, %v1009
        %v1074 = vpack.c.b16 %v1010, %v1010
        %v1075 = vpack.c.b16 %v1011, %v1011
        %v1076 = vpack.c.b16 %v1012, %v1012
        %v1077 = vpack.c.b16 %v1013, %v1013
        %v1078 = vpack.c.b16 %v1014, %v1014
        %v1079 = vpack.c.b16 %v1015, %v1015
        %v1080 = vpack.c.b16 %v1016, %v1016
        %v1081 = vpack.c.b16 %v1017, %v1017
        %vm1146 = vcmask 60416
        %1147 = vst.msk [vmem:[%s188] sm:$0xf] %vm1146, %v1018
        %1148 = vst.msk [vmem:[%s188 + $0x4] sm:$0xf] %vm1146, %v1019
        %1149 = vst.msk [vmem:[%s188 + $0x8] sm:$0xf] %vm1146, %v1020
        %1150 = vst.msk [vmem:[%s188 + $0xc] sm:$0xf] %vm1146, %v1021
        %1151 = vst.msk [vmem:[%s188 + $0x10] sm:$0xf] %vm1146, %v1022
        %1152 = vst.msk [vmem:[%s188 + $0x14] sm:$0xf] %vm1146, %v1023
        %1153 = vst.msk [vmem:[%s188 + $0x18] sm:$0xf] %vm1146, %v1024
        %1154 = vst.msk [vmem:[%s188 + $0x1c] sm:$0xf] %vm1146, %v1025
        %1155 = vst.msk [vmem:[%s188 + $0x20] sm:$0xf] %vm1146, %v1026
        %1156 = vst.msk [vmem:[%s188 + $0x24] sm:$0xf] %vm1146, %v1027
        %1157 = vst.msk [vmem:[%s188 + $0x28] sm:$0xf] %vm1146, %v1028
        %1158 = vst.msk [vmem:[%s188 + $0x2c] sm:$0xf] %vm1146, %v1029
        %1159 = vst.msk [vmem:[%s188 + $0x30] sm:$0xf] %vm1146, %v1030
        %1160 = vst.msk [vmem:[%s188 + $0x34] sm:$0xf] %vm1146, %v1031
        %1161 = vst.msk [vmem:[%s188 + $0x38] sm:$0xf] %vm1146, %v1032
        %1162 = vst.msk [vmem:[%s188 + $0x3c] sm:$0xf] %vm1146, %v1033
        %1163 = vst.msk [vmem:[%s188 + $0x40] sm:$0xf] %vm1146, %v1034
        %1164 = vst.msk [vmem:[%s188 + $0x44] sm:$0xf] %vm1146, %v1035
        %1165 = vst.msk [vmem:[%s188 + $0x48] sm:$0xf] %vm1146, %v1036
        %1166 = vst.msk [vmem:[%s188 + $0x4c] sm:$0xf] %vm1146, %v1037
        %1167 = vst.msk [vmem:[%s188 + $0x50] sm:$0xf] %vm1146, %v1038
        %1168 = vst.msk [vmem:[%s188 + $0x54] sm:$0xf] %vm1146, %v1039
        %1169 = vst.msk [vmem:[%s188 + $0x58] sm:$0xf] %vm1146, %v1040
        %1170 = vst.msk [vmem:[%s188 + $0x5c] sm:$0xf] %vm1146, %v1041
        %1171 = vst.msk [vmem:[%s188 + $0x60] sm:$0xf] %vm1146, %v1042
        %1172 = vst.msk [vmem:[%s188 + $0x64] sm:$0xf] %vm1146, %v1043
        %1173 = vst.msk [vmem:[%s188 + $0x68] sm:$0xf] %vm1146, %v1044
        %1174 = vst.msk [vmem:[%s188 + $0x6c] sm:$0xf] %vm1146, %v1045
        %1175 = vst.msk [vmem:[%s188 + $0x70] sm:$0xf] %vm1146, %v1046
        %1176 = vst.msk [vmem:[%s188 + $0x74] sm:$0xf] %vm1146, %v1047
        %1177 = vst.msk [vmem:[%s188 + $0x78] sm:$0xf] %vm1146, %v1048
        %1178 = vst.msk [vmem:[%s188 + $0x7c] sm:$0xf] %vm1146, %v1049
        %1179 = vst.msk [vmem:[%s188 + $0x80] sm:$0xf] %vm1146, %v1050
        %1180 = vst.msk [vmem:[%s188 + $0x84] sm:$0xf] %vm1146, %v1051
        %1181 = vst.msk [vmem:[%s188 + $0x88] sm:$0xf] %vm1146, %v1052
        %1182 = vst.msk [vmem:[%s188 + $0x8c] sm:$0xf] %vm1146, %v1053
        %1183 = vst.msk [vmem:[%s188 + $0x90] sm:$0xf] %vm1146, %v1054
        %1184 = vst.msk [vmem:[%s188 + $0x94] sm:$0xf] %vm1146, %v1055
        %1185 = vst.msk [vmem:[%s188 + $0x98] sm:$0xf] %vm1146, %v1056
        %1186 = vst.msk [vmem:[%s188 + $0x9c] sm:$0xf] %vm1146, %v1057
        %1187 = vst.msk [vmem:[%s188 + $0xa0] sm:$0xf] %vm1146, %v1058
        %1188 = vst.msk [vmem:[%s188 + $0xa4] sm:$0xf] %vm1146, %v1059
        %1189 = vst.msk [vmem:[%s188 + $0xa8] sm:$0xf] %vm1146, %v1060
        %1190 = vst.msk [vmem:[%s188 + $0xac] sm:$0xf] %vm1146, %v1061
        %1191 = vst.msk [vmem:[%s188 + $0xb0] sm:$0xf] %vm1146, %v1062
        %1192 = vst.msk [vmem:[%s188 + $0xb4] sm:$0xf] %vm1146, %v1063
        %1193 = vst.msk [vmem:[%s188 + $0xb8] sm:$0xf] %vm1146, %v1064
        %1194 = vst.msk [vmem:[%s188 + $0xbc] sm:$0xf] %vm1146, %v1065
        %1195 = vst.msk [vmem:[%s188 + $0xc0] sm:$0xf] %vm1146, %v1066
        %1196 = vst.msk [vmem:[%s188 + $0xc4] sm:$0xf] %vm1146, %v1067
        %1197 = vst.msk [vmem:[%s188 + $0xc8] sm:$0xf] %vm1146, %v1068
        %1198 = vst.msk [vmem:[%s188 + $0xcc] sm:$0xf] %vm1146, %v1069
        %1199 = vst.msk [vmem:[%s188 + $0xd0] sm:$0xf] %vm1146, %v1070
        %1200 = vst.msk [vmem:[%s188 + $0xd4] sm:$0xf] %vm1146, %v1071
        %1201 = vst.msk [vmem:[%s188 + $0xd8] sm:$0xf] %vm1146, %v1072
        %1202 = vst.msk [vmem:[%s188 + $0xdc] sm:$0xf] %vm1146, %v1073
        %1203 = vst.msk [vmem:[%s188 + $0xe0] sm:$0xf] %vm1146, %v1074
        %1204 = vst.msk [vmem:[%s188 + $0xe4] sm:$0xf] %vm1146, %v1075
        %1205 = vst.msk [vmem:[%s188 + $0xe8] sm:$0xf] %vm1146, %v1076
        %1206 = vst.msk [vmem:[%s188 + $0xec] sm:$0xf] %vm1146, %v1077
        %1207 = vst.msk [vmem:[%s188 + $0xf0] sm:$0xf] %vm1146, %v1078
        %1208 = vst.msk [vmem:[%s188 + $0xf4] sm:$0xf] %vm1146, %v1079
        %1209 = vst.msk [vmem:[%s188 + $0xf8] sm:$0xf] %vm1146, %v1080
        %1210 = vst.msk [vmem:[%s188 + $0xfc] sm:$0xf] %vm1146, %v1081
      $region44: #{generator_forward.17} parent=31 // pred_fallthru
        _
      %s1211 = smul.u32 %s19, %s18
      %s1212 = smul.u32 64, %s1211
      %p1213 = scmp.lt.s32.totalorder %s1212, 255
      %s1214 = scalar_select %p1213, %s1212, 255
      %s1215 = smul.addr %s1214, 4
      %s1216 = scalar_lea.vmem %s3, %s1215
      // Predicated region
      $region45: #{generator_forward.17} parent=31 // pred_check
        %p1217 = pneg %p114
      $region46: #{generator_forward.17} parent=31 // pred_check_branch
        %1219 = sbr.rel (%p1217) target = $region48
      $region47: #{generator_forward.17} parent=31 // pred_region
        %s1220 = smul.u32 %s19, %s18
        %s1221 = smul.u32 64, %s1220
      $region48: #{generator_forward.17} parent=31 // pred_fallthru
        _
    $region32: #{generator_forward.17} parent=5 // pred_fallthru
      _
    %p1222 = scmp.le.s32.totalorder 2, %s9
    // Predicated region
    $region49: #{generator_forward.17} parent=5 // pred_check
      %p1223 = pneg %p1222
    $region50: #{generator_forward.17} parent=5 // pred_check_branch
      %1225 = sbr.rel (%p1223) target = $region52
    $region51: #{generator_forward.17} parent=5 // pred_region
      %s1226 = ssub.s32 %s9, 2
      // Predicated region
      $region53: #{generator_forward.17} parent=51 // pred_check
        %p1227 = pneg %p120
      $region54: #{generator_forward.17} parent=51 // pred_check_branch
        %1229 = sbr.rel (%p1227) target = $region56
      $region55: #{generator_forward.17} parent=51 // pred_region
        %s1230 = smul.u32 %s21, %s20
        %s1231 = smul.u32 64, %s1230
        %p1232 = scmp.lt.s32.totalorder %s1231, 255
        %s1233 = scalar_select %p1232, %s1231, 255
        %s1234 = smul.addr %s1233, 4
        %s1235 = scalar_lea.vmem %s3, %s1234
      $region56: #{generator_forward.17} parent=51 // pred_fallthru
        _
    $region52: #{generator_forward.17} parent=5 // pred_fallthru
      _
  $region6: #{generator_forward.17} parent=0 // loop_footer
    %s13 = sadd.s32 1, %s9
  $region7: #{generator_forward.17} parent=0 // loop_footer_branch
    %8 = sbr.rel target = $region3
  $region8: #{generator_forward.17} parent=0 // loop_exit
    _

// kernel: generator_forward.18
$region0: #{generator_forward.18}
  #allocation0 [shape = 'u32[]', space=smem, size = 0x4, offset = 0x4, fixed_abs, tag = 'smem constant byte address 0x4 - core index']
  #allocation1 [shape = 'u32[144,128]{1,0:T(1,128)}', space=vmem, size = 0x12000, scoped, tag = 'internal scratch']
  %s0 = inlined_call_operand.vmem [shape: bf16[2048,8], index: 0, kind: input, shape index: {}]
  %s1 = inlined_call_operand.vmem [shape: bf16[8,128], index: 1, kind: input, shape index: {}]
  %s2 = inlined_call_operand.vmem [shape: f32[2048,128], index: 2, kind: output, shape index: {}]
  %s3 = sld [smem:[#allocation0]]
  $region41: #{generator_forward.18} parent=0
    _
  %s5 = ssub.s32 1, %s3
  %s6 = scalar_select 0, %s5, %s3
  loop: start=0, step=1, limit=6
  $region2: #{generator_forward.18} parent=0 // loop_pre_header
    _
  $region3: #{generator_forward.18} parent=0 // loop_header
    %s8 = sphi 0, %s12
    %p9 = scmp.ge.s32.totalorder %s8, 6
    %s18 = sphi 0, %s20
    %s21 = sphi 0, %s18
    %s22 = sphi 0, %s21
    %s38 = sphi 0, %s22
    %s42 = sphi 0, %s42
    %s44 = sphi 0, %s42
    %s45 = sphi 0, %s44
    %s59 = sphi 0, %s45
    %s65 = sphi 0, %s67
    %s68 = sphi 0, %s65
    %s69 = sphi 0, %s68
    %s85 = sphi 0, %s69
  $region4: #{generator_forward.18} parent=0 // loop_header_branch
    %11 = sbr.rel (%p9) target = $region8
  $region5: #{generator_forward.18} parent=0 // loop_body
    %s13 = ssub.s32 %s8, 1
    %s14 = ssub.s32 %s8, 2
    %s15 = sadd.s32 %s8, 1
    %s16 = ssub.s32 %s8, %s15
    %p17 = scmp.eq.s32.totalorder %s16, 0
    %s19 = sadd.s32 %s18, 1
    %s20 = scalar_select %p17, %s18, %s19
    %p23 = pneg %p17
    %p24 = scmp.eq.s32.totalorder %s8, 3
    %p25 = por %p23, %p24
    %p26 = scmp.ne.s32.totalorder %s18, %s21
    %p27 = scmp.eq.s32.totalorder %s8, 0
    %p28 = por %p26, %p27
    %p29 = scmp.ne.s32.totalorder %s18, %s21
    %p30 = scmp.eq.s32.totalorder %s13, 3
    %p31 = por %p29, %p30
    %p32 = scmp.ne.s32.totalorder %s21, %s22
    %p33 = scmp.eq.s32.totalorder %s13, 0
    %p34 = por %p32, %p33
    %p35 = scmp.ne.s32.totalorder %s21, %s22
    %p36 = scmp.eq.s32.totalorder %s14, 3
    %p37 = por %p35, %p36
    %p39 = scmp.ne.s32.totalorder %s22, %s38
    %p40 = scmp.eq.s32.totalorder %s14, 0
    %p41 = por %p39, %p40
    %s43 = sadd.s32 %s42, 1
    %p46 = scmp.eq.s32.totalorder %s8, 3
    %p47 = scmp.ne.s32.totalorder %s42, %s44
    %p48 = scmp.eq.s32.totalorder %s8, 0
    %p49 = por %p47, %p48
    %p50 = scmp.ne.s32.totalorder %s42, %s44
    %p51 = scmp.eq.s32.totalorder %s13, 3
    %p52 = por %p50, %p51
    %p53 = scmp.ne.s32.totalorder %s44, %s45
    %p54 = scmp.eq.s32.totalorder %s13, 0
    %p55 = por %p53, %p54
    %p56 = scmp.ne.s32.totalorder %s44, %s45
    %p57 = scmp.eq.s32.totalorder %s14, 3
    %p58 = por %p56, %p57
    %p60 = scmp.ne.s32.totalorder %s45, %s59
    %p61 = scmp.eq.s32.totalorder %s14, 0
    %p62 = por %p60, %p61
    %s63 = ssub.s32 %s8, %s15
    %p64 = scmp.eq.s32.totalorder %s63, 0
    %s66 = sadd.s32 %s65, 1
    %s67 = scalar_select %p64, %s65, %s66
    %p70 = pneg %p64
    %p71 = scmp.eq.s32.totalorder %s8, 3
    %p72 = por %p70, %p71
    %p73 = scmp.ne.s32.totalorder %s65, %s68
    %p74 = scmp.eq.s32.totalorder %s8, 0
    %p75 = por %p73, %p74
    %p76 = scmp.ne.s32.totalorder %s65, %s68
    %p77 = scmp.eq.s32.totalorder %s13, 3
    %p78 = por %p76, %p77
    %p79 = scmp.ne.s32.totalorder %s68, %s69
    %p80 = scmp.eq.s32.totalorder %s13, 0
    %p81 = por %p79, %p80
    %p82 = scmp.ne.s32.totalorder %s68, %s69
    %p83 = scmp.eq.s32.totalorder %s14, 3
    %p84 = por %p82, %p83
    %p86 = scmp.ne.s32.totalorder %s69, %s85
    %p87 = scmp.eq.s32.totalorder %s14, 0
    %p88 = por %p86, %p87
    %p89 = scmp.le.s32.totalorder 1, %s8
    %p90 = scmp.lt.s32.totalorder %s8, 5
    %p91 = pnand %p89, %p90
    %p92 = pneg %p91
    // Predicated region
    $region9: #{generator_forward.18} parent=5 // pred_check
      _
    $region10: #{generator_forward.18} parent=5 // pred_check_branch
      %94 = sbr.rel (%p91) target = $region12
    $region11: #{generator_forward.18} parent=5 // pred_region
      %s95 = ssub.s32 %s8, 1
      // Predicated region
      $region13: #{generator_forward.18} parent=11 // pred_check
        %p96 = pneg %p55
      $region14: #{generator_forward.18} parent=11 // pred_check_branch
        %98 = sbr.rel (%p96) target = $region16
      $region15: #{generator_forward.18} parent=11 // pred_region
        _
      $region16: #{generator_forward.18} parent=11 // pred_fallthru
        _
    $region12: #{generator_forward.18} parent=5 // pred_fallthru
      _
    %p99 = scmp.lt.s32.totalorder %s8, 4
    // Predicated region
    $region17: #{generator_forward.18} parent=5 // pred_check
      %p100 = pneg %p99
    $region18: #{generator_forward.18} parent=5 // pred_check_branch
      %102 = sbr.rel (%p100) target = $region20
    $region19: #{generator_forward.18} parent=5 // pred_region
      // Predicated region
      $region21: #{generator_forward.18} parent=19 // pred_check
        %p103 = pneg %p28
      $region22: #{generator_forward.18} parent=19 // pred_check_branch
        %105 = sbr.rel (%p103) target = $region24
      $region23: #{generator_forward.18} parent=19 // pred_region
        %s106 = smul.u32 64, %s8
        %p107 = scmp.lt.s32.totalorder %s106, 255
        %s108 = scalar_select %p107, %s106, 255
        %s109 = smul.addr %s108, 4
        %s110 = scalar_lea.vmem %s0, %s109
        %s111 = smul.u32 64, %s8
      $region24: #{generator_forward.18} parent=19 // pred_fallthru
        _
    $region20: #{generator_forward.18} parent=5 // pred_fallthru
      _
    %p112 = scmp.le.s32.totalorder 1, %s8
    %p113 = scmp.lt.s32.totalorder %s8, 5
    %p114 = pnand %p112, %p113
    %p115 = pneg %p114
    // Predicated region
    $region25: #{generator_forward.18} parent=5 // pred_check
      _
    $region26: #{generator_forward.18} parent=5 // pred_check_branch
      %117 = sbr.rel (%p114) target = $region28
    $region27: #{generator_forward.18} parent=5 // pred_region
      %s118 = ssub.s32 %s8, 1
      %s119 = smul.u32 64, %s13
      %p120 = scmp.lt.s32.totalorder %s119, 255
      %s121 = scalar_select %p120, %s119, 255
      %s122 = smul.addr %s121, 4
      %s123 = scalar_lea.vmem %s0, %s122
      %p124 = pneg %p34
      %p125 = pneg %p31
      %p126 = pneg %p55
      %p127 = pneg %p52
      %p128 = pneg %p81
      %p129 = pneg %p78
      %s130 = smul.u32 64, %s13
      %p131 = scmp.lt.s32.totalorder %s130, 255
      %s132 = scalar_select %p131, %s130, 255
      %s133 = smul.addr %s132, 8
      %s134 = scalar_lea.vmem %s2, %s133
      %s135 = smul.u32 64, %s13
      %p136 = scmp.lt.s32.totalorder %s135, 255
      %s137 = scalar_select %p136, %s135, 255
      %s138 = smul.addr %s137, 4
      %s139 = scalar_lea.vmem %s0, %s138
      %s140 = smul.u32 64, %s13
      %s141 = smul.u32 64, %s13
      %p142 = scmp.lt.s32.totalorder %s141, 255
      %s143 = scalar_select %p142, %s141, 255
      %s144 = smul.addr %s143, 8
      %s145 = scalar_lea.vmem %s2, %s144
      %s146 = smul.u32 64, %s13
      %v148 = vld [vmem:[%s139] sm:$0xf]
      %v149 = vld [vmem:[%s139 + $0x4] sm:$0xf]
      %v150 = vld [vmem:[%s139 + $0x8] sm:$0xf]
      %v151 = vld [vmem:[%s139 + $0xc] sm:$0xf]
      %v152 = vld [vmem:[%s139 + $0x10] sm:$0xf]
      %v153 = vld [vmem:[%s139 + $0x14] sm:$0xf]
      %v154 = vld [vmem:[%s139 + $0x18] sm:$0xf]
      %v155 = vld [vmem:[%s139 + $0x1c] sm:$0xf]
      %v156 = vld [vmem:[%s139 + $0x20] sm:$0xf]
      %v157 = vld [vmem:[%s139 + $0x24] sm:$0xf]
      %v158 = vld [vmem:[%s139 + $0x28] sm:$0xf]
      %v159 = vld [vmem:[%s139 + $0x2c] sm:$0xf]
      %v160 = vld [vmem:[%s139 + $0x30] sm:$0xf]
      %v161 = vld [vmem:[%s139 + $0x34] sm:$0xf]
      %v162 = vld [vmem:[%s139 + $0x38] sm:$0xf]
      %v163 = vld [vmem:[%s139 + $0x3c] sm:$0xf]
      %v164 = vld [vmem:[%s139 + $0x40] sm:$0xf]
      %v165 = vld [vmem:[%s139 + $0x44] sm:$0xf]
      %v166 = vld [vmem:[%s139 + $0x48] sm:$0xf]
      %v167 = vld [vmem:[%s139 + $0x4c] sm:$0xf]
      %v168 = vld [vmem:[%s139 + $0x50] sm:$0xf]
      %v169 = vld [vmem:[%s139 + $0x54] sm:$0xf]
      %v170 = vld [vmem:[%s139 + $0x58] sm:$0xf]
      %v171 = vld [vmem:[%s139 + $0x5c] sm:$0xf]
      %v172 = vld [vmem:[%s139 + $0x60] sm:$0xf]
      %v173 = vld [vmem:[%s139 + $0x64] sm:$0xf]
      %v174 = vld [vmem:[%s139 + $0x68] sm:$0xf]
      %v175 = vld [vmem:[%s139 + $0x6c] sm:$0xf]
      %v176 = vld [vmem:[%s139 + $0x70] sm:$0xf]
      %v177 = vld [vmem:[%s139 + $0x74] sm:$0xf]
      %v178 = vld [vmem:[%s139 + $0x78] sm:$0xf]
      %v179 = vld [vmem:[%s139 + $0x7c] sm:$0xf]
      %v180 = vld [vmem:[%s139 + $0x80] sm:$0xf]
      %v181 = vld [vmem:[%s139 + $0x84] sm:$0xf]
      %v182 = vld [vmem:[%s139 + $0x88] sm:$0xf]
      %v183 = vld [vmem:[%s139 + $0x8c] sm:$0xf]
      %v184 = vld [vmem:[%s139 + $0x90] sm:$0xf]
      %v185 = vld [vmem:[%s139 + $0x94] sm:$0xf]
      %v186 = vld [vmem:[%s139 + $0x98] sm:$0xf]
      %v187 = vld [vmem:[%s139 + $0x9c] sm:$0xf]
      %v188 = vld [vmem:[%s139 + $0xa0] sm:$0xf]
      %v189 = vld [vmem:[%s139 + $0xa4] sm:$0xf]
      %v190 = vld [vmem:[%s139 + $0xa8] sm:$0xf]
      %v191 = vld [vmem:[%s139 + $0xac] sm:$0xf]
      %v192 = vld [vmem:[%s139 + $0xb0] sm:$0xf]
      %v193 = vld [vmem:[%s139 + $0xb4] sm:$0xf]
      %v194 = vld [vmem:[%s139 + $0xb8] sm:$0xf]
      %v195 = vld [vmem:[%s139 + $0xbc] sm:$0xf]
      %v196 = vld [vmem:[%s139 + $0xc0] sm:$0xf]
      %v197 = vld [vmem:[%s139 + $0xc4] sm:$0xf]
      %v198 = vld [vmem:[%s139 + $0xc8] sm:$0xf]
      %v199 = vld [vmem:[%s139 + $0xcc] sm:$0xf]
      %v200 = vld [vmem:[%s139 + $0xd0] sm:$0xf]
      %v201 = vld [vmem:[%s139 + $0xd4] sm:$0xf]
      %v202 = vld [vmem:[%s139 + $0xd8] sm:$0xf]
      %v203 = vld [vmem:[%s139 + $0xdc] sm:$0xf]
      %v204 = vld [vmem:[%s139 + $0xe0] sm:$0xf]
      %v205 = vld [vmem:[%s139 + $0xe4] sm:$0xf]
      %v206 = vld [vmem:[%s139 + $0xe8] sm:$0xf]
      %v207 = vld [vmem:[%s139 + $0xec] sm:$0xf]
      %v208 = vld [vmem:[%s139 + $0xf0] sm:$0xf]
      %v209 = vld [vmem:[%s139 + $0xf4] sm:$0xf]
      %v210 = vld [vmem:[%s139 + $0xf8] sm:$0xf]
      %v211 = vld [vmem:[%s139 + $0xfc] sm:$0xf]
      %v212 = vld [vmem:[%s1] sm:$0xf]
      %v277 = vunpack.c.l.b16 %v148
      %v278 = vunpack.c.l.b16 %v149
      %v279 = vunpack.c.l.b16 %v150
      %v280 = vunpack.c.l.b16 %v151
      %v281 = vunpack.c.l.b16 %v152
      %v282 = vunpack.c.l.b16 %v153
      %v283 = vunpack.c.l.b16 %v154
      %v284 = vunpack.c.l.b16 %v155
      %v285 = vunpack.c.l.b16 %v156
      %v286 = vunpack.c.l.b16 %v157
      %v287 = vunpack.c.l.b16 %v158
      %v288 = vunpack.c.l.b16 %v159
      %v289 = vunpack.c.l.b16 %v160
      %v290 = vunpack.c.l.b16 %v161
      %v291 = vunpack.c.l.b16 %v162
      %v292 = vunpack.c.l.b16 %v163
      %v293 = vunpack.c.l.b16 %v164
      %v294 = vunpack.c.l.b16 %v165
      %v295 = vunpack.c.l.b16 %v166
      %v296 = vunpack.c.l.b16 %v167
      %v297 = vunpack.c.l.b16 %v168
      %v298 = vunpack.c.l.b16 %v169
      %v299 = vunpack.c.l.b16 %v170
      %v300 = vunpack.c.l.b16 %v171
      %v301 = vunpack.c.l.b16 %v172
      %v302 = vunpack.c.l.b16 %v173
      %v303 = vunpack.c.l.b16 %v174
      %v304 = vunpack.c.l.b16 %v175
      %v305 = vunpack.c.l.b16 %v176
      %v306 = vunpack.c.l.b16 %v177
      %v307 = vunpack.c.l.b16 %v178
      %v308 = vunpack.c.l.b16 %v179
      %v309 = vunpack.c.l.b16 %v180
      %v310 = vunpack.c.l.b16 %v181
      %v311 = vunpack.c.l.b16 %v182
      %v312 = vunpack.c.l.b16 %v183
      %v313 = vunpack.c.l.b16 %v184
      %v314 = vunpack.c.l.b16 %v185
      %v315 = vunpack.c.l.b16 %v186
      %v316 = vunpack.c.l.b16 %v187
      %v317 = vunpack.c.l.b16 %v188
      %v318 = vunpack.c.l.b16 %v189
      %v319 = vunpack.c.l.b16 %v190
      %v320 = vunpack.c.l.b16 %v191
      %v321 = vunpack.c.l.b16 %v192
      %v322 = vunpack.c.l.b16 %v193
      %v323 = vunpack.c.l.b16 %v194
      %v324 = vunpack.c.l.b16 %v195
      %v325 = vunpack.c.l.b16 %v196
      %v326 = vunpack.c.l.b16 %v197
      %v327 = vunpack.c.l.b16 %v198
      %v328 = vunpack.c.l.b16 %v199
      %v329 = vunpack.c.l.b16 %v200
      %v330 = vunpack.c.l.b16 %v201
      %v331 = vunpack.c.l.b16 %v202
      %v332 = vunpack.c.l.b16 %v203
      %v333 = vunpack.c.l.b16 %v204
      %v334 = vunpack.c.l.b16 %v205
      %v335 = vunpack.c.l.b16 %v206
      %v336 = vunpack.c.l.b16 %v207
      %v337 = vunpack.c.l.b16 %v208
      %v338 = vunpack.c.l.b16 %v209
      %v339 = vunpack.c.l.b16 %v210
      %v340 = vunpack.c.l.b16 %v211
      %v341 = vpack.c.b16 %v278, %v277
      %v342 = vpack.c.b16 %v280, %v279
      %v343 = vpack.c.b16 %v282, %v281
      %v344 = vpack.c.b16 %v284, %v283
      %v345 = vpack.c.b16 %v286, %v285
      %v346 = vpack.c.b16 %v288, %v287
      %v347 = vpack.c.b16 %v290, %v289
      %v348 = vpack.c.b16 %v292, %v291
      %v349 = vpack.c.b16 %v294, %v293
      %v350 = vpack.c.b16 %v296, %v295
      %v351 = vpack.c.b16 %v298, %v297
      %v352 = vpack.c.b16 %v300, %v299
      %v353 = vpack.c.b16 %v302, %v301
      %v354 = vpack.c.b16 %v304, %v303
      %v355 = vpack.c.b16 %v306, %v305
      %v356 = vpack.c.b16 %v308, %v307
      %v357 = vpack.c.b16 %v310, %v309
      %v358 = vpack.c.b16 %v312, %v311
      %v359 = vpack.c.b16 %v314, %v313
      %v360 = vpack.c.b16 %v316, %v315
      %v361 = vpack.c.b16 %v318, %v317
      %v362 = vpack.c.b16 %v320, %v319
      %v363 = vpack.c.b16 %v322, %v321
      %v364 = vpack.c.b16 %v324, %v323
      %v365 = vpack.c.b16 %v326, %v325
      %v366 = vpack.c.b16 %v328, %v327
      %v367 = vpack.c.b16 %v330, %v329
      %v368 = vpack.c.b16 %v332, %v331
      %v369 = vpack.c.b16 %v334, %v333
      %v370 = vpack.c.b16 %v336, %v335
      %v371 = vpack.c.b16 %v338, %v337
      %v372 = vpack.c.b16 %v340, %v339
      %vm373 = vcmask 64512
      %v375 = vsel %vm373, %v341, 0
      %v378 = vsel %vm373, %v342, 0
      %v381 = vsel %vm373, %v343, 0
      %v384 = vsel %vm373, %v344, 0
      %v387 = vsel %vm373, %v345, 0
      %v390 = vsel %vm373, %v346, 0
      %v393 = vsel %vm373, %v347, 0
      %v396 = vsel %vm373, %v348, 0
      %v399 = vsel %vm373, %v349, 0
      %v402 = vsel %vm373, %v350, 0
      %v405 = vsel %vm373, %v351, 0
      %v408 = vsel %vm373, %v352, 0
      %v411 = vsel %vm373, %v353, 0
      %v414 = vsel %vm373, %v354, 0
      %v417 = vsel %vm373, %v355, 0
      %v420 = vsel %vm373, %v356, 0
      %v423 = vsel %vm373, %v357, 0
      %v426 = vsel %vm373, %v358, 0
      %v429 = vsel %vm373, %v359, 0
      %v432 = vsel %vm373, %v360, 0
      %v435 = vsel %vm373, %v361, 0
      %v438 = vsel %vm373, %v362, 0
      %v441 = vsel %vm373, %v363, 0
      %v444 = vsel %vm373, %v364, 0
      %v447 = vsel %vm373, %v365, 0
      %v450 = vsel %vm373, %v366, 0
      %v453 = vsel %vm373, %v367, 0
      %v456 = vsel %vm373, %v368, 0
      %v459 = vsel %vm373, %v369, 0
      %v462 = vsel %vm373, %v370, 0
      %v465 = vsel %vm373, %v371, 0
      %v468 = vsel %vm373, %v372, 0
      %vm470 = vcmask 1043456
      %v472 = vsel %vm470, %v212, 0
      %474 = vmatprep.subr.bf16.mxu0 0
      %475 = vmatpush1.bf16.msra.mxu0 %v472
      %476 = vmatprep.subr.bf16.mxu0 0
      %477 = vmatpush1.bf16.msra.mxu0 0
      %478 = vmatprep.subr.bf16.mxu0 0
      %479 = vmatpush1.bf16.msra.mxu0 0
      %480 = vmatprep.subr.bf16.mxu0 0
      %481 = vmatpush1.bf16.msra.mxu0 0
      %482 = vmatprep.subr.bf16.mxu0 0
      %483 = vmatpush1.bf16.msra.mxu0 0
      %484 = vmatprep.subr.bf16.mxu0 0
      %485 = vmatpush1.bf16.msra.mxu0 0
      %486 = vmatprep.subr.bf16.mxu0 0
      %487 = vmatpush1.bf16.msra.mxu0 0
      %488 = vmatprep.subr.bf16.mxu0 0
      %489 = vmatpush1.bf16.msra.mxu0 0
      %490 = vmatprep.subr.bf16.mxu0 0
      %491 = vmatpush1.bf16.msra.mxu0 0
      %492 = vmatprep.subr.bf16.mxu0 0
      %493 = vmatpush1.bf16.msra.mxu0 0
      %494 = vmatprep.subr.bf16.mxu0 0
      %495 = vmatpush1.bf16.msra.mxu0 0
      %496 = vmatprep.subr.bf16.mxu0 0
      %497 = vmatpush1.bf16.msra.mxu0 0
      %498 = vmatprep.subr.bf16.mxu0 0
      %499 = vmatpush1.bf16.msra.mxu0 0
      %500 = vmatprep.subr.bf16.mxu0 0
      %501 = vmatpush1.bf16.msra.mxu0 0
      %502 = vmatprep.subr.bf16.mxu0 0
      %503 = vmatpush1.bf16.msra.mxu0 0
      %504 = vmatprep.subr.bf16.mxu0 0
      %505 = vmatpush1.bf16.msra.mxu0 0
      %506 = vmatprep.mubr.bf16.mxu0 0
      %507 = vmatmul.mubr.bf16.gmra.mrb[0].mxu0 %v375
      %v508 = vpop.f32.mrb[0].mxu0
      %v509 = vadd.f32 0.0, %v508
      %v510 = vpop.f32.mrb[0].mxu0
      %v511 = vpop.f32.mrb[0].mxu0
      %v512 = vadd.f32 0.0, %v511
      %v513 = vpop.f32.mrb[0].mxu0
      %514 = vmatprep.mubr.bf16.mxu0 0
      %515 = vmatmul.mubr.bf16.gmra.mrb[0].mxu0 %v378
      %v516 = vpop.f32.mrb[0].mxu0
      %v517 = vadd.f32 0.0, %v516
      %v518 = vpop.f32.mrb[0].mxu0
      %v519 = vpop.f32.mrb[0].mxu0
      %v520 = vadd.f32 0.0, %v519
      %v521 = vpop.f32.mrb[0].mxu0
      %522 = vmatprep.mubr.bf16.mxu0 0
      %523 = vmatmul.mubr.bf16.gmra.mrb[0].mxu0 %v381
      %v524 = vpop.f32.mrb[0].mxu0
      %v525 = vadd.f32 0.0, %v524
      %v526 = vpop.f32.mrb[0].mxu0
      %v527 = vpop.f32.mrb[0].mxu0
      %v528 = vadd.f32 0.0, %v527
      %v529 = vpop.f32.mrb[0].mxu0
      %530 = vmatprep.mubr.bf16.mxu0 0
      %531 = vmatmul.mubr.bf16.gmra.mrb[0].mxu0 %v384
      %v532 = vpop.f32.mrb[0].mxu0
      %v533 = vadd.f32 0.0, %v532
      %v534 = vpop.f32.mrb[0].mxu0
      %v535 = vpop.f32.mrb[0].mxu0
      %v536 = vadd.f32 0.0, %v535
      %v537 = vpop.f32.mrb[0].mxu0
      %538 = vmatprep.mubr.bf16.mxu0 0
      %539 = vmatmul.mubr.bf16.gmra.mrb[0].mxu0 %v387
      %v540 = vpop.f32.mrb[0].mxu0
      %v541 = vadd.f32 0.0, %v540
      %v542 = vpop.f32.mrb[0].mxu0
      %v543 = vpop.f32.mrb[0].mxu0
      %v544 = vadd.f32 0.0, %v543
      %v545 = vpop.f32.mrb[0].mxu0
      %546 = vmatprep.mubr.bf16.mxu0 0
      %547 = vmatmul.mubr.bf16.gmra.mrb[0].mxu0 %v390
      %v548 = vpop.f32.mrb[0].mxu0
      %v549 = vadd.f32 0.0, %v548
      %v550 = vpop.f32.mrb[0].mxu0
      %v551 = vpop.f32.mrb[0].mxu0
      %v552 = vadd.f32 0.0, %v551
      %v553 = vpop.f32.mrb[0].mxu0
      %554 = vmatprep.mubr.bf16.mxu0 0
      %555 = vmatmul.mubr.bf16.gmra.mrb[0].mxu0 %v393
      %v556 = vpop.f32.mrb[0].mxu0
      %v557 = vadd.f32 0.0, %v556
      %v558 = vpop.f32.mrb[0].mxu0
      %v559 = vpop.f32.mrb[0].mxu0
      %v560 = vadd.f32 0.0, %v559
      %v561 = vpop.f32.mrb[0].mxu0
      %562 = vmatprep.mubr.bf16.mxu0 0
      %563 = vmatmul.mubr.bf16.gmra.mrb[0].mxu0 %v396
      %v564 = vpop.f32.mrb[0].mxu0
      %v565 = vadd.f32 0.0, %v564
      %v566 = vpop.f32.mrb[0].mxu0
      %v567 = vpop.f32.mrb[0].mxu0
      %v568 = vadd.f32 0.0, %v567
      %v569 = vpop.f32.mrb[0].mxu0
      %570 = vmatprep.mubr.bf16.mxu0 0
      %571 = vmatmul.mubr.bf16.gmra.mrb[0].mxu0 %v399
      %v572 = vpop.f32.mrb[0].mxu0
      %v573 = vadd.f32 0.0, %v572
      %v574 = vpop.f32.mrb[0].mxu0
      %v575 = vpop.f32.mrb[0].mxu0
      %v576 = vadd.f32 0.0, %v575
      %v577 = vpop.f32.mrb[0].mxu0
      %578 = vmatprep.mubr.bf16.mxu0 0
      %579 = vmatmul.mubr.bf16.gmra.mrb[0].mxu0 %v402
      %v580 = vpop.f32.mrb[0].mxu0
      %v581 = vadd.f32 0.0, %v580
      %v582 = vpop.f32.mrb[0].mxu0
      %v583 = vpop.f32.mrb[0].mxu0
      %v584 = vadd.f32 0.0, %v583
      %v585 = vpop.f32.mrb[0].mxu0
      %586 = vmatprep.mubr.bf16.mxu0 0
      %587 = vmatmul.mubr.bf16.gmra.mrb[0].mxu0 %v405
      %v588 = vpop.f32.mrb[0].mxu0
      %v589 = vadd.f32 0.0, %v588
      %v590 = vpop.f32.mrb[0].mxu0
      %v591 = vpop.f32.mrb[0].mxu0
      %v592 = vadd.f32 0.0, %v591
      %v593 = vpop.f32.mrb[0].mxu0
      %594 = vmatprep.mubr.bf16.mxu0 0
      %595 = vmatmul.mubr.bf16.gmra.mrb[0].mxu0 %v408
      %v596 = vpop.f32.mrb[0].mxu0
      %v597 = vadd.f32 0.0, %v596
      %v598 = vpop.f32.mrb[0].mxu0
      %v599 = vpop.f32.mrb[0].mxu0
      %v600 = vadd.f32 0.0, %v599
      %v601 = vpop.f32.mrb[0].mxu0
      %602 = vmatprep.mubr.bf16.mxu0 0
      %603 = vmatmul.mubr.bf16.gmra.mrb[0].mxu0 %v411
      %v604 = vpop.f32.mrb[0].mxu0
      %v605 = vadd.f32 0.0, %v604
      %v606 = vpop.f32.mrb[0].mxu0
      %v607 = vpop.f32.mrb[0].mxu0
      %v608 = vadd.f32 0.0, %v607
      %v609 = vpop.f32.mrb[0].mxu0
      %610 = vmatprep.mubr.bf16.mxu0 0
      %611 = vmatmul.mubr.bf16.gmra.mrb[0].mxu0 %v414
      %v612 = vpop.f32.mrb[0].mxu0
      %v613 = vadd.f32 0.0, %v612
      %v614 = vpop.f32.mrb[0].mxu0
      %v615 = vpop.f32.mrb[0].mxu0
      %v616 = vadd.f32 0.0, %v615
      %v617 = vpop.f32.mrb[0].mxu0
      %618 = vmatprep.mubr.bf16.mxu0 0
      %619 = vmatmul.mubr.bf16.gmra.mrb[0].mxu0 %v417
      %v620 = vpop.f32.mrb[0].mxu0
      %v621 = vadd.f32 0.0, %v620
      %v622 = vpop.f32.mrb[0].mxu0
      %v623 = vpop.f32.mrb[0].mxu0
      %v624 = vadd.f32 0.0, %v623
      %v625 = vpop.f32.mrb[0].mxu0
      %626 = vmatprep.mubr.bf16.mxu0 0
      %627 = vmatmul.mubr.bf16.gmra.mrb[0].mxu0 %v420
      %v628 = vpop.f32.mrb[0].mxu0
      %v629 = vadd.f32 0.0, %v628
      %v630 = vpop.f32.mrb[0].mxu0
      %v631 = vpop.f32.mrb[0].mxu0
      %v632 = vadd.f32 0.0, %v631
      %v633 = vpop.f32.mrb[0].mxu0
      %634 = vmatprep.mubr.bf16.mxu0 0
      %635 = vmatmul.mubr.bf16.gmra.mrb[0].mxu0 %v423
      %v636 = vpop.f32.mrb[0].mxu0
      %v637 = vadd.f32 0.0, %v636
      %v638 = vpop.f32.mrb[0].mxu0
      %v639 = vpop.f32.mrb[0].mxu0
      %v640 = vadd.f32 0.0, %v639
      %v641 = vpop.f32.mrb[0].mxu0
      %642 = vmatprep.mubr.bf16.mxu0 0
      %643 = vmatmul.mubr.bf16.gmra.mrb[0].mxu0 %v426
      %v644 = vpop.f32.mrb[0].mxu0
      %v645 = vadd.f32 0.0, %v644
      %v646 = vpop.f32.mrb[0].mxu0
      %v647 = vpop.f32.mrb[0].mxu0
      %v648 = vadd.f32 0.0, %v647
      %v649 = vpop.f32.mrb[0].mxu0
      %650 = vmatprep.mubr.bf16.mxu0 0
      %651 = vmatmul.mubr.bf16.gmra.mrb[0].mxu0 %v429
      %v652 = vpop.f32.mrb[0].mxu0
      %v653 = vadd.f32 0.0, %v652
      %v654 = vpop.f32.mrb[0].mxu0
      %v655 = vpop.f32.mrb[0].mxu0
      %v656 = vadd.f32 0.0, %v655
      %v657 = vpop.f32.mrb[0].mxu0
      %658 = vmatprep.mubr.bf16.mxu0 0
      %659 = vmatmul.mubr.bf16.gmra.mrb[0].mxu0 %v432
      %v660 = vpop.f32.mrb[0].mxu0
      %v661 = vadd.f32 0.0, %v660
      %v662 = vpop.f32.mrb[0].mxu0
      %v663 = vpop.f32.mrb[0].mxu0
      %v664 = vadd.f32 0.0, %v663
      %v665 = vpop.f32.mrb[0].mxu0
      %666 = vmatprep.mubr.bf16.mxu0 0
      %667 = vmatmul.mubr.bf16.gmra.mrb[0].mxu0 %v435
      %v668 = vpop.f32.mrb[0].mxu0
      %v669 = vadd.f32 0.0, %v668
      %v670 = vpop.f32.mrb[0].mxu0
      %v671 = vpop.f32.mrb[0].mxu0
      %v672 = vadd.f32 0.0, %v671
      %v673 = vpop.f32.mrb[0].mxu0
      %674 = vmatprep.mubr.bf16.mxu0 0
      %675 = vmatmul.mubr.bf16.gmra.mrb[0].mxu0 %v438
      %v676 = vpop.f32.mrb[0].mxu0
      %v677 = vadd.f32 0.0, %v676
      %v678 = vpop.f32.mrb[0].mxu0
      %v679 = vpop.f32.mrb[0].mxu0
      %v680 = vadd.f32 0.0, %v679
      %v681 = vpop.f32.mrb[0].mxu0
      %682 = vmatprep.mubr.bf16.mxu0 0
      %683 = vmatmul.mubr.bf16.gmra.mrb[0].mxu0 %v441
      %v684 = vpop.f32.mrb[0].mxu0
      %v685 = vadd.f32 0.0, %v684
      %v686 = vpop.f32.mrb[0].mxu0
      %v687 = vpop.f32.mrb[0].mxu0
      %v688 = vadd.f32 0.0, %v687
      %v689 = vpop.f32.mrb[0].mxu0
      %690 = vmatprep.mubr.bf16.mxu0 0
      %691 = vmatmul.mubr.bf16.gmra.mrb[0].mxu0 %v444
      %v692 = vpop.f32.mrb[0].mxu0
      %v693 = vadd.f32 0.0, %v692
      %v694 = vpop.f32.mrb[0].mxu0
      %v695 = vpop.f32.mrb[0].mxu0
      %v696 = vadd.f32 0.0, %v695
      %v697 = vpop.f32.mrb[0].mxu0
      %698 = vmatprep.mubr.bf16.mxu0 0
      %699 = vmatmul.mubr.bf16.gmra.mrb[0].mxu0 %v447
      %v700 = vpop.f32.mrb[0].mxu0
      %v701 = vadd.f32 0.0, %v700
      %v702 = vpop.f32.mrb[0].mxu0
      %v703 = vpop.f32.mrb[0].mxu0
      %v704 = vadd.f32 0.0, %v703
      %v705 = vpop.f32.mrb[0].mxu0
      %706 = vmatprep.mubr.bf16.mxu0 0
      %707 = vmatmul.mubr.bf16.gmra.mrb[0].mxu0 %v450
      %v708 = vpop.f32.mrb[0].mxu0
      %v709 = vadd.f32 0.0, %v708
      %v710 = vpop.f32.mrb[0].mxu0
      %v711 = vpop.f32.mrb[0].mxu0
      %v712 = vadd.f32 0.0, %v711
      %v713 = vpop.f32.mrb[0].mxu0
      %714 = vmatprep.mubr.bf16.mxu0 0
      %715 = vmatmul.mubr.bf16.gmra.mrb[0].mxu0 %v453
      %v716 = vpop.f32.mrb[0].mxu0
      %v717 = vadd.f32 0.0, %v716
      %v718 = vpop.f32.mrb[0].mxu0
      %v719 = vpop.f32.mrb[0].mxu0
      %v720 = vadd.f32 0.0, %v719
      %v721 = vpop.f32.mrb[0].mxu0
      %722 = vmatprep.mubr.bf16.mxu0 0
      %723 = vmatmul.mubr.bf16.gmra.mrb[0].mxu0 %v456
      %v724 = vpop.f32.mrb[0].mxu0
      %v725 = vadd.f32 0.0, %v724
      %v726 = vpop.f32.mrb[0].mxu0
      %v727 = vpop.f32.mrb[0].mxu0
      %v728 = vadd.f32 0.0, %v727
      %v729 = vpop.f32.mrb[0].mxu0
      %730 = vmatprep.mubr.bf16.mxu0 0
      %731 = vmatmul.mubr.bf16.gmra.mrb[0].mxu0 %v459
      %v732 = vpop.f32.mrb[0].mxu0
      %v733 = vadd.f32 0.0, %v732
      %v734 = vpop.f32.mrb[0].mxu0
      %v735 = vpop.f32.mrb[0].mxu0
      %v736 = vadd.f32 0.0, %v735
      %v737 = vpop.f32.mrb[0].mxu0
      %738 = vmatprep.mubr.bf16.mxu0 0
      %739 = vmatmul.mubr.bf16.gmra.mrb[0].mxu0 %v462
      %v740 = vpop.f32.mrb[0].mxu0
      %v741 = vadd.f32 0.0, %v740
      %v742 = vpop.f32.mrb[0].mxu0
      %v743 = vpop.f32.mrb[0].mxu0
      %v744 = vadd.f32 0.0, %v743
      %v745 = vpop.f32.mrb[0].mxu0
      %746 = vmatprep.mubr.bf16.mxu0 0
      %747 = vmatmul.mubr.bf16.gmra.mrb[0].mxu0 %v465
      %v748 = vpop.f32.mrb[0].mxu0
      %v749 = vadd.f32 0.0, %v748
      %v750 = vpop.f32.mrb[0].mxu0
      %v751 = vpop.f32.mrb[0].mxu0
      %v752 = vadd.f32 0.0, %v751
      %v753 = vpop.f32.mrb[0].mxu0
      %754 = vmatprep.mubr.bf16.mxu0 0
      %755 = vmatmul.mubr.bf16.gmra.mrb[0].mxu0 %v468
      %v756 = vpop.f32.mrb[0].mxu0
      %v757 = vadd.f32 0.0, %v756
      %v758 = vpop.f32.mrb[0].mxu0
      %v759 = vpop.f32.mrb[0].mxu0
      %v760 = vadd.f32 0.0, %v759
      %v761 = vpop.f32.mrb[0].mxu0
      %762 = vdwg.mxu0
      %763 = vst [vmem:[%s145] sm:$0xff] %v509
      %764 = vst [vmem:[%s145 + $0x8] sm:$0xff] %v512
      %765 = vst [vmem:[%s145 + $0x10] sm:$0xff] %v517
      %766 = vst [vmem:[%s145 + $0x18] sm:$0xff] %v520
      %767 = vst [vmem:[%s145 + $0x20] sm:$0xff] %v525
      %768 = vst [vmem:[%s145 + $0x28] sm:$0xff] %v528
      %769 = vst [vmem:[%s145 + $0x30] sm:$0xff] %v533
      %770 = vst [vmem:[%s145 + $0x38] sm:$0xff] %v536
      %771 = vst [vmem:[%s145 + $0x40] sm:$0xff] %v541
      %772 = vst [vmem:[%s145 + $0x48] sm:$0xff] %v544
      %773 = vst [vmem:[%s145 + $0x50] sm:$0xff] %v549
      %774 = vst [vmem:[%s145 + $0x58] sm:$0xff] %v552
      %775 = vst [vmem:[%s145 + $0x60] sm:$0xff] %v557
      %776 = vst [vmem:[%s145 + $0x68] sm:$0xff] %v560
      %777 = vst [vmem:[%s145 + $0x70] sm:$0xff] %v565
      %778 = vst [vmem:[%s145 + $0x78] sm:$0xff] %v568
      %779 = vst [vmem:[%s145 + $0x80] sm:$0xff] %v573
      %780 = vst [vmem:[%s145 + $0x88] sm:$0xff] %v576
      %781 = vst [vmem:[%s145 + $0x90] sm:$0xff] %v581
      %782 = vst [vmem:[%s145 + $0x98] sm:$0xff] %v584
      %783 = vst [vmem:[%s145 + $0xa0] sm:$0xff] %v589
      %784 = vst [vmem:[%s145 + $0xa8] sm:$0xff] %v592
      %785 = vst [vmem:[%s145 + $0xb0] sm:$0xff] %v597
      %786 = vst [vmem:[%s145 + $0xb8] sm:$0xff] %v600
      %787 = vst [vmem:[%s145 + $0xc0] sm:$0xff] %v605
      %788 = vst [vmem:[%s145 + $0xc8] sm:$0xff] %v608
      %789 = vst [vmem:[%s145 + $0xd0] sm:$0xff] %v613
      %790 = vst [vmem:[%s145 + $0xd8] sm:$0xff] %v616
      %791 = vst [vmem:[%s145 + $0xe0] sm:$0xff] %v621
      %792 = vst [vmem:[%s145 + $0xe8] sm:$0xff] %v624
      %793 = vst [vmem:[%s145 + $0xf0] sm:$0xff] %v629
      %794 = vst [vmem:[%s145 + $0xf8] sm:$0xff] %v632
      %795 = vst [vmem:[%s145 + $0x100] sm:$0xff] %v637
      %796 = vst [vmem:[%s145 + $0x108] sm:$0xff] %v640
      %797 = vst [vmem:[%s145 + $0x110] sm:$0xff] %v645
      %798 = vst [vmem:[%s145 + $0x118] sm:$0xff] %v648
      %799 = vst [vmem:[%s145 + $0x120] sm:$0xff] %v653
      %800 = vst [vmem:[%s145 + $0x128] sm:$0xff] %v656
      %801 = vst [vmem:[%s145 + $0x130] sm:$0xff] %v661
      %802 = vst [vmem:[%s145 + $0x138] sm:$0xff] %v664
      %803 = vst [vmem:[%s145 + $0x140] sm:$0xff] %v669
      %804 = vst [vmem:[%s145 + $0x148] sm:$0xff] %v672
      %805 = vst [vmem:[%s145 + $0x150] sm:$0xff] %v677
      %806 = vst [vmem:[%s145 + $0x158] sm:$0xff] %v680
      %807 = vst [vmem:[%s145 + $0x160] sm:$0xff] %v685
      %808 = vst [vmem:[%s145 + $0x168] sm:$0xff] %v688
      %809 = vst [vmem:[%s145 + $0x170] sm:$0xff] %v693
      %810 = vst [vmem:[%s145 + $0x178] sm:$0xff] %v696
      %811 = vst [vmem:[%s145 + $0x180] sm:$0xff] %v701
      %812 = vst [vmem:[%s145 + $0x188] sm:$0xff] %v704
      %813 = vst [vmem:[%s145 + $0x190] sm:$0xff] %v709
      %814 = vst [vmem:[%s145 + $0x198] sm:$0xff] %v712
      %815 = vst [vmem:[%s145 + $0x1a0] sm:$0xff] %v717
      %816 = vst [vmem:[%s145 + $0x1a8] sm:$0xff] %v720
      %817 = vst [vmem:[%s145 + $0x1b0] sm:$0xff] %v725
      %818 = vst [vmem:[%s145 + $0x1b8] sm:$0xff] %v728
      %819 = vst [vmem:[%s145 + $0x1c0] sm:$0xff] %v733
      %820 = vst [vmem:[%s145 + $0x1c8] sm:$0xff] %v736
      %821 = vst [vmem:[%s145 + $0x1d0] sm:$0xff] %v741
      %822 = vst [vmem:[%s145 + $0x1d8] sm:$0xff] %v744
      %823 = vst [vmem:[%s145 + $0x1e0] sm:$0xff] %v749
      %824 = vst [vmem:[%s145 + $0x1e8] sm:$0xff] %v752
      %825 = vst [vmem:[%s145 + $0x1f0] sm:$0xff] %v757
      %826 = vst [vmem:[%s145 + $0x1f8] sm:$0xff] %v760
      %s827 = smul.u32 64, %s13
      %p828 = scmp.lt.s32.totalorder %s827, 255
      %s829 = scalar_select %p828, %s827, 255
      %s830 = smul.addr %s829, 8
      %s831 = scalar_lea.vmem %s2, %s830
      // Predicated region
      $region29: #{generator_forward.18} parent=27 // pred_check
        %p832 = pneg %p78
      $region30: #{generator_forward.18} parent=27 // pred_check_branch
        %834 = sbr.rel (%p832) target = $region32
      $region31: #{generator_forward.18} parent=27 // pred_region
        %s835 = smul.u32 64, %s13
      $region32: #{generator_forward.18} parent=27 // pred_fallthru
        _
    $region28: #{generator_forward.18} parent=5 // pred_fallthru
      _
    %p836 = scmp.le.s32.totalorder 2, %s8
    // Predicated region
    $region33: #{generator_forward.18} parent=5 // pred_check
      %p837 = pneg %p836
    $region34: #{generator_forward.18} parent=5 // pred_check_branch
      %839 = sbr.rel (%p837) target = $region36
    $region35: #{generator_forward.18} parent=5 // pred_region
      %s840 = ssub.s32 %s8, 2
      // Predicated region
      $region37: #{generator_forward.18} parent=35 // pred_check
        %p841 = pneg %p84
      $region38: #{generator_forward.18} parent=35 // pred_check_branch
        %843 = sbr.rel (%p841) target = $region40
      $region39: #{generator_forward.18} parent=35 // pred_region
        %s844 = smul.u32 64, %s14
        %p845 = scmp.lt.s32.totalorder %s844, 255
        %s846 = scalar_select %p845, %s844, 255
        %s847 = smul.addr %s846, 8
        %s848 = scalar_lea.vmem %s2, %s847
      $region40: #{generator_forward.18} parent=35 // pred_fallthru
        _
    $region36: #{generator_forward.18} parent=5 // pred_fallthru
      _
  $region6: #{generator_forward.18} parent=0 // loop_footer
    %s12 = sadd.s32 1, %s8
  $region7: #{generator_forward.18} parent=0 // loop_footer_branch
    %7 = sbr.rel target = $region3
  $region8: #{generator_forward.18} parent=0 // loop_exit
    _

// kernel: generator_forward.19
$region0: #{generator_forward.19}
  #allocation0 [shape = 'u32[]', space=smem, size = 0x4, offset = 0x4, fixed_abs, tag = 'smem constant byte address 0x4 - core index']
  #allocation1 [shape = 'u32[144,128]{1,0:T(1,128)}', space=vmem, size = 0x12000, scoped, tag = 'internal scratch']
  %s0 = inlined_call_operand.vmem [shape: f32[256,128], index: 0, kind: input, shape index: {}]
  %s1 = inlined_call_operand.vmem [shape: f32[256,128], index: 1, kind: output, shape index: {}]
  %s2 = sld [smem:[#allocation0]]
  $region14: #{generator_forward.19} parent=0
    _
  %s4 = ssub.s32 1, %s2
  %s5 = scalar_select 0, %s4, %s2
  // Predicated region
  $region2: #{generator_forward.19} parent=0 // pred_check
    _
  $region3: #{generator_forward.19} parent=0 // pred_check_branch
    %7 = sbr.rel (0) target = $region5
  $region4: #{generator_forward.19} parent=0 // pred_region
    _
  $region5: #{generator_forward.19} parent=0 // pred_fallthru
    _
  %v8 = vld [vmem:[%s0] sm:$0xff]
  %v9 = vld [vmem:[%s0 + $0x8] sm:$0xff]
  %v10 = vld [vmem:[%s0 + $0x10] sm:$0xff]
  %v11 = vld [vmem:[%s0 + $0x18] sm:$0xff]
  %v12 = vld [vmem:[%s0 + $0x20] sm:$0xff]
  %v13 = vld [vmem:[%s0 + $0x28] sm:$0xff]
  %v14 = vld [vmem:[%s0 + $0x30] sm:$0xff]
  %v15 = vld [vmem:[%s0 + $0x38] sm:$0xff]
  %v16 = vld [vmem:[%s0 + $0x40] sm:$0xff]
  %v17 = vld [vmem:[%s0 + $0x48] sm:$0xff]
  %v18 = vld [vmem:[%s0 + $0x50] sm:$0xff]
  %v19 = vld [vmem:[%s0 + $0x58] sm:$0xff]
  %v20 = vld [vmem:[%s0 + $0x60] sm:$0xff]
  %v21 = vld [vmem:[%s0 + $0x68] sm:$0xff]
  %v22 = vld [vmem:[%s0 + $0x70] sm:$0xff]
  %v23 = vld [vmem:[%s0 + $0x78] sm:$0xff]
  %v24 = vld [vmem:[%s0 + $0x80] sm:$0xff]
  %v25 = vld [vmem:[%s0 + $0x88] sm:$0xff]
  %v26 = vld [vmem:[%s0 + $0x90] sm:$0xff]
  %v27 = vld [vmem:[%s0 + $0x98] sm:$0xff]
  %v28 = vld [vmem:[%s0 + $0xa0] sm:$0xff]
  %v29 = vld [vmem:[%s0 + $0xa8] sm:$0xff]
  %v30 = vld [vmem:[%s0 + $0xb0] sm:$0xff]
  %v31 = vld [vmem:[%s0 + $0xb8] sm:$0xff]
  %v32 = vld [vmem:[%s0 + $0xc0] sm:$0xff]
  %v33 = vld [vmem:[%s0 + $0xc8] sm:$0xff]
  %v34 = vld [vmem:[%s0 + $0xd0] sm:$0xff]
  %v35 = vld [vmem:[%s0 + $0xd8] sm:$0xff]
  %v36 = vld [vmem:[%s0 + $0xe0] sm:$0xff]
  %v37 = vld [vmem:[%s0 + $0xe8] sm:$0xff]
  %v38 = vld [vmem:[%s0 + $0xf0] sm:$0xff]
  %v39 = vld [vmem:[%s0 + $0xf8] sm:$0xff]
  %v40 = vtanh.pop %v8
  %v41 = vtanh.pop %v9
  %v42 = vtanh.pop %v10
  %v43 = vtanh.pop %v11
  %v44 = vtanh.pop %v12
  %v45 = vtanh.pop %v13
  %v46 = vtanh.pop %v14
  %v47 = vtanh.pop %v15
  %v48 = vtanh.pop %v16
  %v49 = vtanh.pop %v17
  %v50 = vtanh.pop %v18
  %v51 = vtanh.pop %v19
  %v52 = vtanh.pop %v20
  %v53 = vtanh.pop %v21
  %v54 = vtanh.pop %v22
  %v55 = vtanh.pop %v23
  %v56 = vtanh.pop %v24
  %v57 = vtanh.pop %v25
  %v58 = vtanh.pop %v26
  %v59 = vtanh.pop %v27
  %v60 = vtanh.pop %v28
  %v61 = vtanh.pop %v29
  %v62 = vtanh.pop %v30
  %v63 = vtanh.pop %v31
  %v64 = vtanh.pop %v32
  %v65 = vtanh.pop %v33
  %v66 = vtanh.pop %v34
  %v67 = vtanh.pop %v35
  %v68 = vtanh.pop %v36
  %v69 = vtanh.pop %v37
  %v70 = vtanh.pop %v38
  %v71 = vtanh.pop %v39
  %72 = vst [vmem:[%s1] sm:$0xff] %v40
  %73 = vst [vmem:[%s1 + $0x8] sm:$0xff] %v41
  %74 = vst [vmem:[%s1 + $0x10] sm:$0xff] %v42
  %75 = vst [vmem:[%s1 + $0x18] sm:$0xff] %v43
  %76 = vst [vmem:[%s1 + $0x20] sm:$0xff] %v44
  %77 = vst [vmem:[%s1 + $0x28] sm:$0xff] %v45
  %78 = vst [vmem:[%s1 + $0x30] sm:$0xff] %v46
  %79 = vst [vmem:[%s1 + $0x38] sm:$0xff] %v47
  %80 = vst [vmem:[%s1 + $0x40] sm:$0xff] %v48
  %81 = vst [vmem:[%s1 + $0x48] sm:$0xff] %v49
  %82 = vst [vmem:[%s1 + $0x50] sm:$0xff] %v50
  %83 = vst [vmem:[%s1 + $0x58] sm:$0xff] %v51
  %84 = vst [vmem:[%s1 + $0x60] sm:$0xff] %v52
  %85 = vst [vmem:[%s1 + $0x68] sm:$0xff] %v53
  %86 = vst [vmem:[%s1 + $0x70] sm:$0xff] %v54
  %87 = vst [vmem:[%s1 + $0x78] sm:$0xff] %v55
  %88 = vst [vmem:[%s1 + $0x80] sm:$0xff] %v56
  %89 = vst [vmem:[%s1 + $0x88] sm:$0xff] %v57
  %90 = vst [vmem:[%s1 + $0x90] sm:$0xff] %v58
  %91 = vst [vmem:[%s1 + $0x98] sm:$0xff] %v59
  %92 = vst [vmem:[%s1 + $0xa0] sm:$0xff] %v60
  %93 = vst [vmem:[%s1 + $0xa8] sm:$0xff] %v61
  %94 = vst [vmem:[%s1 + $0xb0] sm:$0xff] %v62
  %95 = vst [vmem:[%s1 + $0xb8] sm:$0xff] %v63
  %96 = vst [vmem:[%s1 + $0xc0] sm:$0xff] %v64
  %97 = vst [vmem:[%s1 + $0xc8] sm:$0xff] %v65
  %98 = vst [vmem:[%s1 + $0xd0] sm:$0xff] %v66
  %99 = vst [vmem:[%s1 + $0xd8] sm:$0xff] %v67
  %100 = vst [vmem:[%s1 + $0xe0] sm:$0xff] %v68
  %101 = vst [vmem:[%s1 + $0xe8] sm:$0xff] %v69
  %102 = vst [vmem:[%s1 + $0xf0] sm:$0xff] %v70
  %103 = vst [vmem:[%s1 + $0xf8] sm:$0xff] %v71
  // Predicated region
  $region6: #{generator_forward.19} parent=0 // pred_check
    _
  $region7: #{generator_forward.19} parent=0 // pred_check_branch
    %105 = sbr.rel (0) target = $region9
  $region8: #{generator_forward.19} parent=0 // pred_region
    _
  $region9: #{generator_forward.19} parent=0 // pred_fallthru
    _
  // Predicated region
  $region10: #{generator_forward.19} parent=0 // pred_check
    _
  $region11: #{generator_forward.19} parent=0 // pred_check_branch
    %107 = sbr.rel (0) target = $region13
  $region12: #{generator_forward.19} parent=0 // pred_region
    _
  $region13: #{generator_forward.19} parent=0 // pred_fallthru
    _

</llo_original>
